<compile_context>
chip_gen: v7x
topology: tpu7x:2x2x1
jax: 0.10.0
libtpu: 0.0.40
codegen_flags: <defaults>
</compile_context>

<pallas_src>
import numpy as np
import jax
import jax.numpy as jnp
from jax import lax
from jax.experimental import pallas as pl
from jax.experimental.pallas import tpu as pltpu

EPS = 1e-15
LOSS_LANES = 128  # lane-dense packed losses: lane 0 = mincut, lane 1 = ortho


def _net_kernel(x_ref, adj_ref, wrel_ref, brel_ref, wroot_ref, wpool_ref, bpool_ref,
                xout_ref, adjout_ref, loss_ref, slog_ref):
    wrel = wrel_ref[...]    # (C, H)
    brel = brel_ref[...]    # (1, H)
    wroot = wroot_ref[...]  # (C, H)
    wpool = wpool_ref[...]  # (H, K)
    bpool = bpool_ref[...]  # (1, K)

    k = wpool.shape[1]
    n = x_ref.shape[1]

    # Constants hoisted out of the (unrolled) batch loop.
    rows = lax.broadcasted_iota(jnp.int32, (k, k), 0)
    cols = lax.broadcasted_iota(jnp.int32, (k, k), 1)
    eye = (rows == cols).astype(jnp.float32)
    inv_sqrt_k = 1.0 / (float(k) ** 0.5)
    lane_idx = lax.broadcasted_iota(jnp.int32, (1, LOSS_LANES), 1)
    ones_n = jnp.ones((n, 1), jnp.float32)
    ones_k_row = jnp.ones((1, k), jnp.float32)
    contract0 = (((0,), (0,)), ((), ()))   # contract leading dims  ==  lhs^T @ rhs
    contract1 = (((1,), (1,)), ((), ()))   # contract trailing dims ==  lhs @ rhs^T

    for b in range(x_ref.shape[0]):        # static unroll over the batch chunk
        x = x_ref[b]        # (N, C)
        adj = adj_ref[b]    # (N, N)

        # --- DenseGraphConv (aggr='add') + ReLU ---
        ax = jnp.dot(adj, x, preferred_element_type=jnp.float32)                   # (N, C)
        h = (jnp.dot(ax, wrel, preferred_element_type=jnp.float32) + brel
             + jnp.dot(x, wroot, preferred_element_type=jnp.float32))              # (N, H)
        h = jnp.maximum(h, 0.0)

        # --- pool1: Linear(H, K) -> cluster assignment logits ---
        s_logits = jnp.dot(h, wpool, preferred_element_type=jnp.float32) + bpool   # (N, K)
        slog_ref[b] = s_logits

        # --- softmax over clusters (lane axis); EUP reciprocal for the denom ---
        s_max = jnp.max(s_logits, axis=-1, keepdims=True)
        s_exp = jnp.exp(s_logits - s_max)
        s = s_exp * pl.reciprocal(jnp.sum(s_exp, axis=-1, keepdims=True), approx=True)

        # --- dense_mincut_pool ---
        out = lax.dot_general(s, h, contract0, preferred_element_type=jnp.float32)    # S^T H  (K, H)
        sta = lax.dot_general(s, adj, contract0, preferred_element_type=jnp.float32)  # S^T A  (K, N)
        out_adj = jnp.dot(sta, s, preferred_element_type=jnp.float32)                 # S^T A S (K, K)

        # MinCut loss: -trace(S^T A S) / trace(S^T D S); degrees via MXU (A @ 1).
        d_flat = jnp.dot(adj, ones_n, preferred_element_type=jnp.float32)             # (N, 1)
        mincut_num = jnp.sum(out_adj * eye, keepdims=True)                            # (1, 1)
        mincut_den = jnp.sum(d_flat * (s * s), keepdims=True)                         # (1, 1)
        mc_val = -(mincut_num * pl.reciprocal(mincut_den, approx=True))

        # Orthogonality loss: || S^T S / ||S^T S||_F - I/sqrt(K) ||_F
        ss = lax.dot_general(s, s, contract0, preferred_element_type=jnp.float32)     # (K, K)
        ss_norm = jnp.sqrt(jnp.sum(ss * ss, keepdims=True))
        diff = ss * pl.reciprocal(ss_norm, approx=True) - eye * inv_sqrt_k
        ortho_val = jnp.sqrt(jnp.sum(diff * diff, keepdims=True))

        # Pack both scalar losses into one lane-dense row: lane 0 = mincut, lane 1 = ortho.
        loss_ref[b] = jnp.where(lane_idx == 0, mc_val,
                                jnp.where(lane_idx == 1, ortho_val, 0.0))

        # Zero diagonal and degree-normalize the coarsened adjacency.
        out_adj = out_adj * (1.0 - eye)
        rs_col = jnp.sum(out_adj, axis=-1, keepdims=True)                             # (K, 1)
        rs_row = lax.dot_general(ones_k_row, out_adj, contract1,
                                 preferred_element_type=jnp.float32)                  # (1, K)
        inv_d_col = pl.reciprocal(jnp.sqrt(rs_col) + EPS, approx=True)
        inv_d_row = pl.reciprocal(jnp.sqrt(rs_row) + EPS, approx=True)
        adjout_ref[b] = out_adj * inv_d_row * inv_d_col

        # log_softmax over last dim of pooled features.
        m = jnp.max(out, axis=-1, keepdims=True)
        z = out - m
        lse = jnp.log(jnp.sum(jnp.exp(z), axis=-1, keepdims=True))
        xout_ref[b] = z - lse


def net_forward(x, adj, params, *, batch_block=None):
    wrel, brel, wroot, wpool, bpool = params
    B, N, C = x.shape
    H = wrel.shape[1]
    K = wpool.shape[1]

    if batch_block is None:
        # Default policy: keep (up to) 2 parallel grid steps so v7x can shard the
        # grid across both TensorCores, and process the rest of the batch inside
        # each step to amortize per-step overhead.  Neutral on v5e/v6e (1 TC).
        batch_block = B // 2 if (B >= 2 and B % 2 == 0) else 1
    if B % batch_block != 0:
        batch_block = 1
    Bb = batch_block

    brel2 = brel.reshape(1, H)
    bpool2 = bpool.reshape(1, K)

    out_shapes = (
        jax.ShapeDtypeStruct((B, K, H), jnp.float32),           # log_softmax(pooled x)
        jax.ShapeDtypeStruct((B, K, K), jnp.float32),           # pooled, normalized adj
        jax.ShapeDtypeStruct((B, 1, LOSS_LANES), jnp.float32),  # packed [mincut, ortho, ...]
        jax.ShapeDtypeStruct((B, N, K), jnp.float32),           # cluster-assignment logits
    )
    grid_spec = pltpu.PrefetchScalarGridSpec(
        num_scalar_prefetch=0,
        grid=(B // Bb,),
        in_specs=[
            pl.BlockSpec((Bb, N, C), lambda b: (b, 0, 0)),
            pl.BlockSpec((Bb, N, N), lambda b: (b, 0, 0)),
            pl.BlockSpec((C, H), lambda b: (0, 0)),
            pl.BlockSpec((1, H), lambda b: (0, 0)),
            pl.BlockSpec((C, H), lambda b: (0, 0)),
            pl.BlockSpec((H, K), lambda b: (0, 0)),
            pl.BlockSpec((1, K), lambda b: (0, 0)),
        ],
        out_specs=[
            pl.BlockSpec((Bb, K, H), lambda b: (b, 0, 0)),
            pl.BlockSpec((Bb, K, K), lambda b: (b, 0, 0)),
            pl.BlockSpec((Bb, 1, LOSS_LANES), lambda b: (b, 0, 0)),
            pl.BlockSpec((Bb, N, K), lambda b: (b, 0, 0)),
        ],
    )
    xp, adjp, losses, s_logits = pl.pallas_call(
        _net_kernel,
        out_shape=out_shapes,
        grid_spec=grid_spec,
        compiler_params=pltpu.CompilerParams(
            dimension_semantics=("parallel",)),
    )(x, adj, wrel, brel2, wroot, wpool, bpool2)

    mc_loss = jnp.mean(losses[:, 0, 0])
    ortho_loss = jnp.mean(losses[:, 0, 1])
    # Matches: (F.log_softmax(x, -1), mc1, o1, ClusterAssignTensor_1, ClusterAdjTensor_1)
    return xp, mc_loss, ortho_loss, s_logits, adjp


def net_reference(x, adj, params):
    """Pure-JAX reference replicating PyG DenseGraphConv + dense_mincut_pool."""
    wrel, brel, wroot, wpool, bpool = params
    h = jnp.einsum('bij,bjc->bic', adj, x) @ wrel + brel + x @ wroot
    h = jax.nn.relu(h)
    s_logits = h @ wpool + bpool
    s = jax.nn.softmax(s_logits, axis=-1)
    st = jnp.swapaxes(s, 1, 2)
    out = st @ h
    out_adj = st @ adj @ s
    K = s.shape[-1]
    mincut_num = jnp.trace(out_adj, axis1=-2, axis2=-1)
    d_flat = adj.sum(-1)
    mincut_den = jnp.sum(d_flat[..., None] * s * s, axis=(1, 2))
    mc = jnp.mean(-(mincut_num / mincut_den))
    ss = st @ s
    ss_norm = jnp.sqrt(jnp.sum(ss * ss, axis=(-2, -1), keepdims=True))
    i_s = jnp.eye(K, dtype=jnp.float32)
    ortho = jnp.sqrt(jnp.sum((ss / ss_norm - i_s / jnp.sqrt(float(K))) ** 2, axis=(-2, -1)))
    ortho = jnp.mean(ortho)
    out_adj = out_adj * (1.0 - i_s[None])
    d = jnp.sqrt(out_adj.sum(-1))[:, None, :] + EPS
    out_adj = out_adj / d / jnp.swapaxes(d, 1, 2)
    logx = jax.nn.log_softmax(out, axis=-1)
    return logx, mc, ortho, s_logits, out_adj


if __name__ == "__main__":
    # B=4 exercises both levers: 2 graphs per grid step, 2 parallel grid steps.
    B, N, C, H, K = 4, 128, 16, 32, 8   # H = Embedding_Dimension, K = Num_TCN
    key = jax.random.PRNGKey(0)
    kx, ka, k1, k2, k3, k4, k5 = jax.random.split(key, 7)

    x = jax.random.normal(kx, (B, N, C), jnp.float32)
    a = (jax.random.uniform(ka, (B, N, N)) < 0.15).astype(jnp.float32)
    adj = jnp.maximum(a, jnp.swapaxes(a, 1, 2))   # symmetric 0/1 graph

    wrel = 0.1 * jax.random.normal(k1, (C, H), jnp.float32)
    brel = 0.05 * jax.random.normal(k2, (H,), jnp.float32)
    wroot = 0.1 * jax.random.normal(k3, (C, H), jnp.float32)
    wpool = 0.1 * jax.random.normal(k4, (H, K), jnp.float32)
    bpool = 0.05 * jax.random.normal(k5, (K,), jnp.float32)
    params = (wrel, brel, wroot, wpool, bpool)

    outs = jax.block_until_ready(net_forward(x, adj, params))
    refs = net_reference(x, adj, params)
    for o, r in zip(outs, refs):
        np.testing.assert_allclose(np.asarray(o), np.asarray(r), rtol=1e-2, atol=1e-2)

    print("KERNEL_OK")
</pallas_src>

<mosaic_0001>
module attributes {stable_mosaic.version = 11 : i64} {
  func.func @_net_kernel(%arg0: i32, %arg1: memref<2x128x16xf32, #tpu.memory_space<vmem>>, %arg2: memref<2x128x128xf32, #tpu.memory_space<vmem>>, %arg3: memref<16x32xf32, #tpu.memory_space<vmem>>, %arg4: memref<1x32xf32, #tpu.memory_space<vmem>>, %arg5: memref<16x32xf32, #tpu.memory_space<vmem>>, %arg6: memref<32x8xf32, #tpu.memory_space<vmem>>, %arg7: memref<1x8xf32, #tpu.memory_space<vmem>>, %arg8: memref<2x8x32xf32, #tpu.memory_space<vmem>>, %arg9: memref<2x8x8xf32, #tpu.memory_space<vmem>>, %arg10: memref<2x1x128xf32, #tpu.memory_space<vmem>>, %arg11: memref<2x128x8xf32, #tpu.memory_space<vmem>>) attributes {dimension_semantics = [#tpu.dimension_semantics<parallel>], iteration_bounds = array<i64: 2>, scalar_prefetch = 0 : i64, scratch_operands = 0 : i64, tpu.core_type = #tpu.core_type<tc>, window_params = [{transform_indices = @transform_0, window_bounds = array<i64: 2, 128, 16>}, {transform_indices = @transform_1, window_bounds = array<i64: 2, 128, 128>}, {pipeline_mode = #tpu.pipeline_mode<synchronous>, transform_indices = @transform_2, window_bounds = array<i64: 16, 32>}, {pipeline_mode = #tpu.pipeline_mode<synchronous>, transform_indices = @transform_3, window_bounds = array<i64: 1, 32>}, {pipeline_mode = #tpu.pipeline_mode<synchronous>, transform_indices = @transform_4, window_bounds = array<i64: 16, 32>}, {pipeline_mode = #tpu.pipeline_mode<synchronous>, transform_indices = @transform_5, window_bounds = array<i64: 32, 8>}, {pipeline_mode = #tpu.pipeline_mode<synchronous>, transform_indices = @transform_6, window_bounds = array<i64: 1, 8>}, {transform_indices = @transform_7, window_bounds = array<i64: 2, 8, 32>}, {transform_indices = @transform_8, window_bounds = array<i64: 2, 8, 8>}, {transform_indices = @transform_9, window_bounds = array<i64: 2, 1, 128>}, {transform_indices = @transform_10, window_bounds = array<i64: 2, 128, 8>}]} {
    %c0 = arith.constant 0 : index
    %c0_0 = arith.constant 0 : index
    %0 = vector.load %arg3[%c0, %c0_0] : memref<16x32xf32, #tpu.memory_space<vmem>>, vector<16x32xf32>
    %c0_1 = arith.constant 0 : index
    %c0_2 = arith.constant 0 : index
    %1 = vector.load %arg4[%c0_1, %c0_2] : memref<1x32xf32, #tpu.memory_space<vmem>>, vector<1x32xf32>
    %c0_3 = arith.constant 0 : index
    %c0_4 = arith.constant 0 : index
    %2 = vector.load %arg5[%c0_3, %c0_4] : memref<16x32xf32, #tpu.memory_space<vmem>>, vector<16x32xf32>
    %c0_5 = arith.constant 0 : index
    %c0_6 = arith.constant 0 : index
    %3 = vector.load %arg6[%c0_5, %c0_6] : memref<32x8xf32, #tpu.memory_space<vmem>>, vector<32x8xf32>
    %c0_7 = arith.constant 0 : index
    %c0_8 = arith.constant 0 : index
    %4 = vector.load %arg7[%c0_7, %c0_8] : memref<1x8xf32, #tpu.memory_space<vmem>>, vector<1x8xf32>
    %5 = tpu.iota {dimensions = array<i32: 0>} : vector<8x8xi32>
    %6 = tpu.iota {dimensions = array<i32: 1>} : vector<8x8xi32>
    %7 = arith.cmpi eq, %5, %6 : vector<8x8xi32>
    %8 = arith.extui %7 : vector<8x8xi1> to vector<8x8xi32>
    %9 = arith.sitofp %8 : vector<8x8xi32> to vector<8x8xf32>
    %10 = tpu.iota {dimensions = array<i32: 1>} : vector<1x128xi32>
    %cst = arith.constant 1.000000e+00 : f32
    %11 = vector.broadcast %cst : f32 to vector<128x1xf32>
    %cst_9 = arith.constant 1.000000e+00 : f32
    %12 = vector.broadcast %cst_9 : f32 to vector<1x8xf32>
    %c0_10 = arith.constant 0 : index
    %c0_11 = arith.constant 0 : index
    %c0_12 = arith.constant 0 : index
    %13 = vector.load %arg1[%c0_10, %c0_11, %c0_12] : memref<2x128x16xf32, #tpu.memory_space<vmem>>, vector<1x128x16xf32>
    %14 = vector.shape_cast %13 : vector<1x128x16xf32> to vector<128x16xf32>
    %c0_13 = arith.constant 0 : index
    %c0_14 = arith.constant 0 : index
    %c0_15 = arith.constant 0 : index
    %15 = vector.load %arg2[%c0_13, %c0_14, %c0_15] : memref<2x128x128xf32, #tpu.memory_space<vmem>>, vector<1x128x128xf32>
    %16 = vector.shape_cast %15 : vector<1x128x128xf32> to vector<128x128xf32>
    %cst_16 = arith.constant dense<0.000000e+00> : vector<128x16xf32>
    %17 = tpu.matmul %16, %14, %cst_16 {dimension_numbers = #tpu.dot_dimension_numbers<[1], [0], [0], [1], [0, 0, 1, 1], [], []>} : vector<128x128xf32>, vector<128x16xf32>, vector<128x16xf32> -> vector<128x16xf32>
    %cst_17 = arith.constant dense<0.000000e+00> : vector<128x32xf32>
    %18 = tpu.matmul %17, %0, %cst_17 {dimension_numbers = #tpu.dot_dimension_numbers<[1], [0], [0], [1], [0, 0, 1, 1], [], []>} : vector<128x16xf32>, vector<16x32xf32>, vector<128x32xf32> -> vector<128x32xf32>
    %19 = vector.broadcast %1 : vector<1x32xf32> to vector<128x32xf32>
    %20 = arith.addf %18, %19 : vector<128x32xf32>
    %cst_18 = arith.constant dense<0.000000e+00> : vector<128x32xf32>
    %21 = tpu.matmul %14, %2, %cst_18 {dimension_numbers = #tpu.dot_dimension_numbers<[1], [0], [0], [1], [0, 0, 1, 1], [], []>} : vector<128x16xf32>, vector<16x32xf32>, vector<128x32xf32> -> vector<128x32xf32>
    %22 = arith.addf %20, %21 : vector<128x32xf32>
    %cst_19 = arith.constant 0.000000e+00 : f32
    %23 = vector.broadcast %cst_19 : f32 to vector<128x32xf32>
    %24 = arith.maximumf %22, %23 : vector<128x32xf32>
    %cst_20 = arith.constant dense<0.000000e+00> : vector<128x8xf32>
    %25 = tpu.matmul %24, %3, %cst_20 {dimension_numbers = #tpu.dot_dimension_numbers<[1], [0], [0], [1], [0, 0, 1, 1], [], []>} : vector<128x32xf32>, vector<32x8xf32>, vector<128x8xf32> -> vector<128x8xf32>
    %26 = vector.broadcast %4 : vector<1x8xf32> to vector<128x8xf32>
    %27 = arith.addf %25, %26 : vector<128x8xf32>
    %c0_21 = arith.constant 0 : index
    %c0_22 = arith.constant 0 : index
    %c0_23 = arith.constant 0 : index
    %28 = vector.load %arg11[%c0_21, %c0_22, %c0_23] : memref<2x128x8xf32, #tpu.memory_space<vmem>>, vector<1x128x8xf32>
    %29 = vector.shape_cast %28 : vector<1x128x8xf32> to vector<128x8xf32>
    %30 = vector.shape_cast %27 : vector<128x8xf32> to vector<1x128x8xf32>
    tpu.vector_store %arg11[%c0_21, %c0_22, %c0_23], %30 {strides = array<i32>} : memref<2x128x8xf32, #tpu.memory_space<vmem>>, vector<1x128x8xf32>,
    %cst_24 = arith.constant dense<0xFF800000> : vector<128xf32>
    %31 = vector.multi_reduction <maximumf>, %27, %cst_24 [1] : vector<128x8xf32> to vector<128xf32>
    %32 = vector.shape_cast %31 : vector<128xf32> to vector<128x1xf32>
    %33 = vector.broadcast %32 : vector<128x1xf32> to vector<128x8xf32>
    %34 = arith.subf %27, %33 : vector<128x8xf32>
    %35 = math.exp %34 : vector<128x8xf32>
    %cst_25 = arith.constant dense<0.000000e+00> : vector<128xf32>
    %36 = vector.multi_reduction <add>, %35, %cst_25 [1] : vector<128x8xf32> to vector<128xf32>
    %37 = vector.shape_cast %36 : vector<128xf32> to vector<128x1xf32>
    %38 = tpu.reciprocal %37 {approx = true} : vector<128x1xf32> -> vector<128x1xf32>
    %39 = vector.broadcast %38 : vector<128x1xf32> to vector<128x8xf32>
    %40 = arith.mulf %35, %39 : vector<128x8xf32>
    %cst_26 = arith.constant dense<0.000000e+00> : vector<8x32xf32>
    %41 = tpu.matmul %40, %24, %cst_26 {dimension_numbers = #tpu.dot_dimension_numbers<[0], [0], [1], [1], [0, 1, 1, 1], [], []>} : vector<128x8xf32>, vector<128x32xf32>, vector<8x32xf32> -> vector<8x32xf32>
    %cst_27 = arith.constant dense<0.000000e+00> : vector<8x128xf32>
    %42 = tpu.matmul %40, %16, %cst_27 {dimension_numbers = #tpu.dot_dimension_numbers<[0], [0], [1], [1], [0, 1, 1, 1], [], []>} : vector<128x8xf32>, vector<128x128xf32>, vector<8x128xf32> -> vector<8x128xf32>
    %cst_28 = arith.constant dense<0.000000e+00> : vector<8x8xf32>
    %43 = tpu.matmul %42, %40, %cst_28 {dimension_numbers = #tpu.dot_dimension_numbers<[1], [0], [0], [1], [0, 0, 1, 1], [], []>} : vector<8x128xf32>, vector<128x8xf32>, vector<8x8xf32> -> vector<8x8xf32>
    %cst_29 = arith.constant dense<0.000000e+00> : vector<128x1xf32>
    %44 = tpu.matmul %16, %11, %cst_29 {dimension_numbers = #tpu.dot_dimension_numbers<[1], [0], [0], [1], [0, 0, 1, 1], [], []>} : vector<128x128xf32>, vector<128x1xf32>, vector<128x1xf32> -> vector<128x1xf32>
    %45 = arith.mulf %43, %9 : vector<8x8xf32>
    %46 = vector.shape_cast %45 : vector<8x8xf32> to vector<1x8x8xf32>
    %cst_30 = arith.constant dense<0.000000e+00> : vector<1xf32>
    %47 = vector.multi_reduction <add>, %46, %cst_30 [1, 2] : vector<1x8x8xf32> to vector<1xf32>
    %48 = vector.shape_cast %47 : vector<1xf32> to vector<1x1x1xf32>
    %49 = vector.extract %48[0, 0, 0] : f32 from vector<1x1x1xf32>
    %50 = vector.broadcast %49 : f32 to vector<1x1xf32>
    %51 = arith.mulf %40, %40 : vector<128x8xf32>
    %52 = vector.broadcast %44 : vector<128x1xf32> to vector<128x8xf32>
    %53 = arith.mulf %52, %51 : vector<128x8xf32>
    %54 = vector.shape_cast %53 : vector<128x8xf32> to vector<1x128x8xf32>
    %cst_31 = arith.constant dense<0.000000e+00> : vector<1xf32>
    %55 = vector.multi_reduction <add>, %54, %cst_31 [1, 2] : vector<1x128x8xf32> to vector<1xf32>
    %56 = vector.shape_cast %55 : vector<1xf32> to vector<1x1x1xf32>
    %57 = vector.extract %56[0, 0, 0] : f32 from vector<1x1x1xf32>
    %58 = vector.broadcast %57 : f32 to vector<1x1xf32>
    %59 = tpu.reciprocal %58 {approx = true} : vector<1x1xf32> -> vector<1x1xf32>
    %60 = arith.mulf %50, %59 : vector<1x1xf32>
    %cst_32 = arith.constant 0.000000e+00 : f32
    %61 = vector.broadcast %cst_32 : f32 to vector<1x1xf32>
    %62 = arith.subf %61, %60 : vector<1x1xf32>
    %cst_33 = arith.constant dense<0.000000e+00> : vector<8x8xf32>
    %63 = tpu.matmul %40, %40, %cst_33 {dimension_numbers = #tpu.dot_dimension_numbers<[0], [0], [1], [1], [0, 1, 1, 1], [], []>} : vector<128x8xf32>, vector<128x8xf32>, vector<8x8xf32> -> vector<8x8xf32>
    %64 = arith.mulf %63, %63 : vector<8x8xf32>
    %65 = vector.shape_cast %64 : vector<8x8xf32> to vector<1x8x8xf32>
    %cst_34 = arith.constant dense<0.000000e+00> : vector<1xf32>
    %66 = vector.multi_reduction <add>, %65, %cst_34 [1, 2] : vector<1x8x8xf32> to vector<1xf32>
    %67 = vector.shape_cast %66 : vector<1xf32> to vector<1x1x1xf32>
    %68 = vector.extract %67[0, 0, 0] : f32 from vector<1x1x1xf32>
    %69 = vector.broadcast %68 : f32 to vector<1x1xf32>
    %70 = math.sqrt %69 : vector<1x1xf32>
    %71 = tpu.reciprocal %70 {approx = true} : vector<1x1xf32> -> vector<1x1xf32>
    %72 = vector.broadcast %71 : vector<1x1xf32> to vector<8x8xf32>
    %73 = arith.mulf %63, %72 : vector<8x8xf32>
    %cst_35 = arith.constant 0.353553385 : f32
    %74 = vector.broadcast %cst_35 : f32 to vector<8x8xf32>
    %75 = arith.mulf %9, %74 : vector<8x8xf32>
    %76 = arith.subf %73, %75 : vector<8x8xf32>
    %77 = arith.mulf %76, %76 : vector<8x8xf32>
    %78 = vector.shape_cast %77 : vector<8x8xf32> to vector<1x8x8xf32>
    %cst_36 = arith.constant dense<0.000000e+00> : vector<1xf32>
    %79 = vector.multi_reduction <add>, %78, %cst_36 [1, 2] : vector<1x8x8xf32> to vector<1xf32>
    %80 = vector.shape_cast %79 : vector<1xf32> to vector<1x1x1xf32>
    %81 = vector.extract %80[0, 0, 0] : f32 from vector<1x1x1xf32>
    %82 = vector.broadcast %81 : f32 to vector<1x1xf32>
    %83 = math.sqrt %82 : vector<1x1xf32>
    %c0_i32 = arith.constant 0 : i32
    %84 = vector.broadcast %c0_i32 : i32 to vector<1x128xi32>
    %85 = arith.cmpi eq, %10, %84 : vector<1x128xi32>
    %c1_i32 = arith.constant 1 : i32
    %86 = vector.broadcast %c1_i32 : i32 to vector<1x128xi32>
    %87 = arith.cmpi eq, %10, %86 : vector<1x128xi32>
    %cst_37 = arith.constant 0.000000e+00 : f32
    %88 = vector.shape_cast %83 : vector<1x1xf32> to vector<1x1xf32>
    %89 = vector.broadcast %88 : vector<1x1xf32> to vector<1x128xf32>
    %90 = vector.broadcast %cst_37 : f32 to vector<1x128xf32>
    %91 = arith.select %87, %89, %90 : vector<1x128xi1>, vector<1x128xf32>
    %92 = vector.shape_cast %62 : vector<1x1xf32> to vector<1x1xf32>
    %93 = vector.broadcast %92 : vector<1x1xf32> to vector<1x128xf32>
    %94 = arith.select %85, %93, %91 : vector<1x128xi1>, vector<1x128xf32>
    %c0_38 = arith.constant 0 : index
    %c0_39 = arith.constant 0 : index
    %c0_40 = arith.constant 0 : index
    %95 = vector.load %arg10[%c0_38, %c0_39, %c0_40] : memref<2x1x128xf32, #tpu.memory_space<vmem>>, vector<1x1x128xf32>
    %96 = vector.shape_cast %95 : vector<1x1x128xf32> to vector<1x128xf32>
    %97 = vector.shape_cast %94 : vector<1x128xf32> to vector<1x1x128xf32>
    tpu.vector_store %arg10[%c0_38, %c0_39, %c0_40], %97 {strides = array<i32>} : memref<2x1x128xf32, #tpu.memory_space<vmem>>, vector<1x1x128xf32>,
    %cst_41 = arith.constant 1.000000e+00 : f32
    %98 = vector.broadcast %cst_41 : f32 to vector<8x8xf32>
    %99 = arith.subf %98, %9 : vector<8x8xf32>
    %100 = arith.mulf %43, %99 : vector<8x8xf32>
    %cst_42 = arith.constant dense<0.000000e+00> : vector<8xf32>
    %101 = vector.multi_reduction <add>, %100, %cst_42 [1] : vector<8x8xf32> to vector<8xf32>
    %102 = vector.shape_cast %101 : vector<8xf32> to vector<8x1xf32>
    %cst_43 = arith.constant dense<0.000000e+00> : vector<1x8xf32>
    %103 = tpu.matmul %12, %100, %cst_43 {dimension_numbers = #tpu.dot_dimension_numbers<[1], [1], [0], [0], [0, 0, 1, 0], [], []>} : vector<1x8xf32>, vector<8x8xf32>, vector<1x8xf32> -> vector<1x8xf32>
    %104 = math.sqrt %102 : vector<8x1xf32>
    %cst_44 = arith.constant 1.000000e-15 : f32
    %105 = vector.broadcast %cst_44 : f32 to vector<8x1xf32>
    %106 = arith.addf %104, %105 : vector<8x1xf32>
    %107 = tpu.reciprocal %106 {approx = true} : vector<8x1xf32> -> vector<8x1xf32>
    %108 = math.sqrt %103 : vector<1x8xf32>
    %cst_45 = arith.constant 1.000000e-15 : f32
    %109 = vector.broadcast %cst_45 : f32 to vector<1x8xf32>
    %110 = arith.addf %108, %109 : vector<1x8xf32>
    %111 = tpu.reciprocal %110 {approx = true} : vector<1x8xf32> -> vector<1x8xf32>
    %112 = vector.broadcast %111 : vector<1x8xf32> to vector<8x8xf32>
    %113 = arith.mulf %100, %112 : vector<8x8xf32>
    %114 = vector.broadcast %107 : vector<8x1xf32> to vector<8x8xf32>
    %115 = arith.mulf %113, %114 : vector<8x8xf32>
    %c0_46 = arith.constant 0 : index
    %c0_47 = arith.constant 0 : index
    %c0_48 = arith.constant 0 : index
    %116 = vector.load %arg9[%c0_46, %c0_47, %c0_48] : memref<2x8x8xf32, #tpu.memory_space<vmem>>, vector<1x8x8xf32>
    %117 = vector.shape_cast %116 : vector<1x8x8xf32> to vector<8x8xf32>
    %118 = vector.shape_cast %115 : vector<8x8xf32> to vector<1x8x8xf32>
    tpu.vector_store %arg9[%c0_46, %c0_47, %c0_48], %118 {strides = array<i32>} : memref<2x8x8xf32, #tpu.memory_space<vmem>>, vector<1x8x8xf32>,
    %cst_49 = arith.constant dense<0xFF800000> : vector<8xf32>
    %119 = vector.multi_reduction <maximumf>, %41, %cst_49 [1] : vector<8x32xf32> to vector<8xf32>
    %120 = vector.shape_cast %119 : vector<8xf32> to vector<8x1xf32>
    %121 = vector.broadcast %120 : vector<8x1xf32> to vector<8x32xf32>
    %122 = arith.subf %41, %121 : vector<8x32xf32>
    %123 = math.exp %122 : vector<8x32xf32>
    %cst_50 = arith.constant dense<0.000000e+00> : vector<8xf32>
    %124 = vector.multi_reduction <add>, %123, %cst_50 [1] : vector<8x32xf32> to vector<8xf32>
    %125 = vector.shape_cast %124 : vector<8xf32> to vector<8x1xf32>
    %126 = math.log %125 : vector<8x1xf32>
    %127 = vector.broadcast %126 : vector<8x1xf32> to vector<8x32xf32>
    %128 = arith.subf %122, %127 : vector<8x32xf32>
    %c0_51 = arith.constant 0 : index
    %c0_52 = arith.constant 0 : index
    %c0_53 = arith.constant 0 : index
    %129 = vector.load %arg8[%c0_51, %c0_52, %c0_53] : memref<2x8x32xf32, #tpu.memory_space<vmem>>, vector<1x8x32xf32>
    %130 = vector.shape_cast %129 : vector<1x8x32xf32> to vector<8x32xf32>
    %131 = vector.shape_cast %128 : vector<8x32xf32> to vector<1x8x32xf32>
    tpu.vector_store %arg8[%c0_51, %c0_52, %c0_53], %131 {strides = array<i32>} : memref<2x8x32xf32, #tpu.memory_space<vmem>>, vector<1x8x32xf32>,
    %c1 = arith.constant 1 : index
    %c0_54 = arith.constant 0 : index
    %c0_55 = arith.constant 0 : index
    %132 = vector.load %arg1[%c1, %c0_54, %c0_55] : memref<2x128x16xf32, #tpu.memory_space<vmem>>, vector<1x128x16xf32>
    %133 = vector.shape_cast %132 : vector<1x128x16xf32> to vector<128x16xf32>
    %c1_56 = arith.constant 1 : index
    %c0_57 = arith.constant 0 : index
    %c0_58 = arith.constant 0 : index
    %134 = vector.load %arg2[%c1_56, %c0_57, %c0_58] : memref<2x128x128xf32, #tpu.memory_space<vmem>>, vector<1x128x128xf32>
    %135 = vector.shape_cast %134 : vector<1x128x128xf32> to vector<128x128xf32>
    %cst_59 = arith.constant dense<0.000000e+00> : vector<128x16xf32>
    %136 = tpu.matmul %135, %133, %cst_59 {dimension_numbers = #tpu.dot_dimension_numbers<[1], [0], [0], [1], [0, 0, 1, 1], [], []>} : vector<128x128xf32>, vector<128x16xf32>, vector<128x16xf32> -> vector<128x16xf32>
    %cst_60 = arith.constant dense<0.000000e+00> : vector<128x32xf32>
    %137 = tpu.matmul %136, %0, %cst_60 {dimension_numbers = #tpu.dot_dimension_numbers<[1], [0], [0], [1], [0, 0, 1, 1], [], []>} : vector<128x16xf32>, vector<16x32xf32>, vector<128x32xf32> -> vector<128x32xf32>
    %138 = vector.broadcast %1 : vector<1x32xf32> to vector<128x32xf32>
    %139 = arith.addf %137, %138 : vector<128x32xf32>
    %cst_61 = arith.constant dense<0.000000e+00> : vector<128x32xf32>
    %140 = tpu.matmul %133, %2, %cst_61 {dimension_numbers = #tpu.dot_dimension_numbers<[1], [0], [0], [1], [0, 0, 1, 1], [], []>} : vector<128x16xf32>, vector<16x32xf32>, vector<128x32xf32> -> vector<128x32xf32>
    %141 = arith.addf %139, %140 : vector<128x32xf32>
    %cst_62 = arith.constant 0.000000e+00 : f32
    %142 = vector.broadcast %cst_62 : f32 to vector<128x32xf32>
    %143 = arith.maximumf %141, %142 : vector<128x32xf32>
    %cst_63 = arith.constant dense<0.000000e+00> : vector<128x8xf32>
    %144 = tpu.matmul %143, %3, %cst_63 {dimension_numbers = #tpu.dot_dimension_numbers<[1], [0], [0], [1], [0, 0, 1, 1], [], []>} : vector<128x32xf32>, vector<32x8xf32>, vector<128x8xf32> -> vector<128x8xf32>
    %145 = vector.broadcast %4 : vector<1x8xf32> to vector<128x8xf32>
    %146 = arith.addf %144, %145 : vector<128x8xf32>
    %c1_64 = arith.constant 1 : index
    %c0_65 = arith.constant 0 : index
    %c0_66 = arith.constant 0 : index
    %147 = vector.load %arg11[%c1_64, %c0_65, %c0_66] : memref<2x128x8xf32, #tpu.memory_space<vmem>>, vector<1x128x8xf32>
    %148 = vector.shape_cast %147 : vector<1x128x8xf32> to vector<128x8xf32>
    %149 = vector.shape_cast %146 : vector<128x8xf32> to vector<1x128x8xf32>
    tpu.vector_store %arg11[%c1_64, %c0_65, %c0_66], %149 {strides = array<i32>} : memref<2x128x8xf32, #tpu.memory_space<vmem>>, vector<1x128x8xf32>,
    %cst_67 = arith.constant dense<0xFF800000> : vector<128xf32>
    %150 = vector.multi_reduction <maximumf>, %146, %cst_67 [1] : vector<128x8xf32> to vector<128xf32>
    %151 = vector.shape_cast %150 : vector<128xf32> to vector<128x1xf32>
    %152 = vector.broadcast %151 : vector<128x1xf32> to vector<128x8xf32>
    %153 = arith.subf %146, %152 : vector<128x8xf32>
    %154 = math.exp %153 : vector<128x8xf32>
    %cst_68 = arith.constant dense<0.000000e+00> : vector<128xf32>
    %155 = vector.multi_reduction <add>, %154, %cst_68 [1] : vector<128x8xf32> to vector<128xf32>
    %156 = vector.shape_cast %155 : vector<128xf32> to vector<128x1xf32>
    %157 = tpu.reciprocal %156 {approx = true} : vector<128x1xf32> -> vector<128x1xf32>
    %158 = vector.broadcast %157 : vector<128x1xf32> to vector<128x8xf32>
    %159 = arith.mulf %154, %158 : vector<128x8xf32>
    %cst_69 = arith.constant dense<0.000000e+00> : vector<8x32xf32>
    %160 = tpu.matmul %159, %143, %cst_69 {dimension_numbers = #tpu.dot_dimension_numbers<[0], [0], [1], [1], [0, 1, 1, 1], [], []>} : vector<128x8xf32>, vector<128x32xf32>, vector<8x32xf32> -> vector<8x32xf32>
    %cst_70 = arith.constant dense<0.000000e+00> : vector<8x128xf32>
    %161 = tpu.matmul %159, %135, %cst_70 {dimension_numbers = #tpu.dot_dimension_numbers<[0], [0], [1], [1], [0, 1, 1, 1], [], []>} : vector<128x8xf32>, vector<128x128xf32>, vector<8x128xf32> -> vector<8x128xf32>
    %cst_71 = arith.constant dense<0.000000e+00> : vector<8x8xf32>
    %162 = tpu.matmul %161, %159, %cst_71 {dimension_numbers = #tpu.dot_dimension_numbers<[1], [0], [0], [1], [0, 0, 1, 1], [], []>} : vector<8x128xf32>, vector<128x8xf32>, vector<8x8xf32> -> vector<8x8xf32>
    %cst_72 = arith.constant dense<0.000000e+00> : vector<128x1xf32>
    %163 = tpu.matmul %135, %11, %cst_72 {dimension_numbers = #tpu.dot_dimension_numbers<[1], [0], [0], [1], [0, 0, 1, 1], [], []>} : vector<128x128xf32>, vector<128x1xf32>, vector<128x1xf32> -> vector<128x1xf32>
    %164 = arith.mulf %162, %9 : vector<8x8xf32>
    %165 = vector.shape_cast %164 : vector<8x8xf32> to vector<1x8x8xf32>
    %cst_73 = arith.constant dense<0.000000e+00> : vector<1xf32>
    %166 = vector.multi_reduction <add>, %165, %cst_73 [1, 2] : vector<1x8x8xf32> to vector<1xf32>
    %167 = vector.shape_cast %166 : vector<1xf32> to vector<1x1x1xf32>
    %168 = vector.extract %167[0, 0, 0] : f32 from vector<1x1x1xf32>
    %169 = vector.broadcast %168 : f32 to vector<1x1xf32>
    %170 = arith.mulf %159, %159 : vector<128x8xf32>
    %171 = vector.broadcast %163 : vector<128x1xf32> to vector<128x8xf32>
    %172 = arith.mulf %171, %170 : vector<128x8xf32>
    %173 = vector.shape_cast %172 : vector<128x8xf32> to vector<1x128x8xf32>
    %cst_74 = arith.constant dense<0.000000e+00> : vector<1xf32>
    %174 = vector.multi_reduction <add>, %173, %cst_74 [1, 2] : vector<1x128x8xf32> to vector<1xf32>
    %175 = vector.shape_cast %174 : vector<1xf32> to vector<1x1x1xf32>
    %176 = vector.extract %175[0, 0, 0] : f32 from vector<1x1x1xf32>
    %177 = vector.broadcast %176 : f32 to vector<1x1xf32>
    %178 = tpu.reciprocal %177 {approx = true} : vector<1x1xf32> -> vector<1x1xf32>
    %179 = arith.mulf %169, %178 : vector<1x1xf32>
    %cst_75 = arith.constant 0.000000e+00 : f32
    %180 = vector.broadcast %cst_75 : f32 to vector<1x1xf32>
    %181 = arith.subf %180, %179 : vector<1x1xf32>
    %cst_76 = arith.constant dense<0.000000e+00> : vector<8x8xf32>
    %182 = tpu.matmul %159, %159, %cst_76 {dimension_numbers = #tpu.dot_dimension_numbers<[0], [0], [1], [1], [0, 1, 1, 1], [], []>} : vector<128x8xf32>, vector<128x8xf32>, vector<8x8xf32> -> vector<8x8xf32>
    %183 = arith.mulf %182, %182 : vector<8x8xf32>
    %184 = vector.shape_cast %183 : vector<8x8xf32> to vector<1x8x8xf32>
    %cst_77 = arith.constant dense<0.000000e+00> : vector<1xf32>
    %185 = vector.multi_reduction <add>, %184, %cst_77 [1, 2] : vector<1x8x8xf32> to vector<1xf32>
    %186 = vector.shape_cast %185 : vector<1xf32> to vector<1x1x1xf32>
    %187 = vector.extract %186[0, 0, 0] : f32 from vector<1x1x1xf32>
    %188 = vector.broadcast %187 : f32 to vector<1x1xf32>
    %189 = math.sqrt %188 : vector<1x1xf32>
    %190 = tpu.reciprocal %189 {approx = true} : vector<1x1xf32> -> vector<1x1xf32>
    %191 = vector.broadcast %190 : vector<1x1xf32> to vector<8x8xf32>
    %192 = arith.mulf %182, %191 : vector<8x8xf32>
    %cst_78 = arith.constant 0.353553385 : f32
    %193 = vector.broadcast %cst_78 : f32 to vector<8x8xf32>
    %194 = arith.mulf %9, %193 : vector<8x8xf32>
    %195 = arith.subf %192, %194 : vector<8x8xf32>
    %196 = arith.mulf %195, %195 : vector<8x8xf32>
    %197 = vector.shape_cast %196 : vector<8x8xf32> to vector<1x8x8xf32>
    %cst_79 = arith.constant dense<0.000000e+00> : vector<1xf32>
    %198 = vector.multi_reduction <add>, %197, %cst_79 [1, 2] : vector<1x8x8xf32> to vector<1xf32>
    %199 = vector.shape_cast %198 : vector<1xf32> to vector<1x1x1xf32>
    %200 = vector.extract %199[0, 0, 0] : f32 from vector<1x1x1xf32>
    %201 = vector.broadcast %200 : f32 to vector<1x1xf32>
    %202 = math.sqrt %201 : vector<1x1xf32>
    %c0_i32_80 = arith.constant 0 : i32
    %203 = vector.broadcast %c0_i32_80 : i32 to vector<1x128xi32>
    %204 = arith.cmpi eq, %10, %203 : vector<1x128xi32>
    %c1_i32_81 = arith.constant 1 : i32
    %205 = vector.broadcast %c1_i32_81 : i32 to vector<1x128xi32>
    %206 = arith.cmpi eq, %10, %205 : vector<1x128xi32>
    %cst_82 = arith.constant 0.000000e+00 : f32
    %207 = vector.shape_cast %202 : vector<1x1xf32> to vector<1x1xf32>
    %208 = vector.broadcast %207 : vector<1x1xf32> to vector<1x128xf32>
    %209 = vector.broadcast %cst_82 : f32 to vector<1x128xf32>
    %210 = arith.select %206, %208, %209 : vector<1x128xi1>, vector<1x128xf32>
    %211 = vector.shape_cast %181 : vector<1x1xf32> to vector<1x1xf32>
    %212 = vector.broadcast %211 : vector<1x1xf32> to vector<1x128xf32>
    %213 = arith.select %204, %212, %210 : vector<1x128xi1>, vector<1x128xf32>
    %c1_83 = arith.constant 1 : index
    %c0_84 = arith.constant 0 : index
    %c0_85 = arith.constant 0 : index
    %214 = vector.load %arg10[%c1_83, %c0_84, %c0_85] : memref<2x1x128xf32, #tpu.memory_space<vmem>>, vector<1x1x128xf32>
    %215 = vector.shape_cast %214 : vector<1x1x128xf32> to vector<1x128xf32>
    %216 = vector.shape_cast %213 : vector<1x128xf32> to vector<1x1x128xf32>
    tpu.vector_store %arg10[%c1_83, %c0_84, %c0_85], %216 {strides = array<i32>} : memref<2x1x128xf32, #tpu.memory_space<vmem>>, vector<1x1x128xf32>,
    %cst_86 = arith.constant 1.000000e+00 : f32
    %217 = vector.broadcast %cst_86 : f32 to vector<8x8xf32>
    %218 = arith.subf %217, %9 : vector<8x8xf32>
    %219 = arith.mulf %162, %218 : vector<8x8xf32>
    %cst_87 = arith.constant dense<0.000000e+00> : vector<8xf32>
    %220 = vector.multi_reduction <add>, %219, %cst_87 [1] : vector<8x8xf32> to vector<8xf32>
    %221 = vector.shape_cast %220 : vector<8xf32> to vector<8x1xf32>
    %cst_88 = arith.constant dense<0.000000e+00> : vector<1x8xf32>
    %222 = tpu.matmul %12, %219, %cst_88 {dimension_numbers = #tpu.dot_dimension_numbers<[1], [1], [0], [0], [0, 0, 1, 0], [], []>} : vector<1x8xf32>, vector<8x8xf32>, vector<1x8xf32> -> vector<1x8xf32>
    %223 = math.sqrt %221 : vector<8x1xf32>
    %cst_89 = arith.constant 1.000000e-15 : f32
    %224 = vector.broadcast %cst_89 : f32 to vector<8x1xf32>
    %225 = arith.addf %223, %224 : vector<8x1xf32>
    %226 = tpu.reciprocal %225 {approx = true} : vector<8x1xf32> -> vector<8x1xf32>
    %227 = math.sqrt %222 : vector<1x8xf32>
    %cst_90 = arith.constant 1.000000e-15 : f32
    %228 = vector.broadcast %cst_90 : f32 to vector<1x8xf32>
    %229 = arith.addf %227, %228 : vector<1x8xf32>
    %230 = tpu.reciprocal %229 {approx = true} : vector<1x8xf32> -> vector<1x8xf32>
    %231 = vector.broadcast %230 : vector<1x8xf32> to vector<8x8xf32>
    %232 = arith.mulf %219, %231 : vector<8x8xf32>
    %233 = vector.broadcast %226 : vector<8x1xf32> to vector<8x8xf32>
    %234 = arith.mulf %232, %233 : vector<8x8xf32>
    %c1_91 = arith.constant 1 : index
    %c0_92 = arith.constant 0 : index
    %c0_93 = arith.constant 0 : index
    %235 = vector.load %arg9[%c1_91, %c0_92, %c0_93] : memref<2x8x8xf32, #tpu.memory_space<vmem>>, vector<1x8x8xf32>
    %236 = vector.shape_cast %235 : vector<1x8x8xf32> to vector<8x8xf32>
    %237 = vector.shape_cast %234 : vector<8x8xf32> to vector<1x8x8xf32>
    tpu.vector_store %arg9[%c1_91, %c0_92, %c0_93], %237 {strides = array<i32>} : memref<2x8x8xf32, #tpu.memory_space<vmem>>, vector<1x8x8xf32>,
    %cst_94 = arith.constant dense<0xFF800000> : vector<8xf32>
    %238 = vector.multi_reduction <maximumf>, %160, %cst_94 [1] : vector<8x32xf32> to vector<8xf32>
    %239 = vector.shape_cast %238 : vector<8xf32> to vector<8x1xf32>
    %240 = vector.broadcast %239 : vector<8x1xf32> to vector<8x32xf32>
    %241 = arith.subf %160, %240 : vector<8x32xf32>
    %242 = math.exp %241 : vector<8x32xf32>
    %cst_95 = arith.constant dense<0.000000e+00> : vector<8xf32>
    %243 = vector.multi_reduction <add>, %242, %cst_95 [1] : vector<8x32xf32> to vector<8xf32>
    %244 = vector.shape_cast %243 : vector<8xf32> to vector<8x1xf32>
    %245 = math.log %244 : vector<8x1xf32>
    %246 = vector.broadcast %245 : vector<8x1xf32> to vector<8x32xf32>
    %247 = arith.subf %241, %246 : vector<8x32xf32>
    %c1_96 = arith.constant 1 : index
    %c0_97 = arith.constant 0 : index
    %c0_98 = arith.constant 0 : index
    %248 = vector.load %arg8[%c1_96, %c0_97, %c0_98] : memref<2x8x32xf32, #tpu.memory_space<vmem>>, vector<1x8x32xf32>
    %249 = vector.shape_cast %248 : vector<1x8x32xf32> to vector<8x32xf32>
    %250 = vector.shape_cast %247 : vector<8x32xf32> to vector<1x8x32xf32>
    tpu.vector_store %arg8[%c1_96, %c0_97, %c0_98], %250 {strides = array<i32>} : memref<2x8x32xf32, #tpu.memory_space<vmem>>, vector<1x8x32xf32>,
    return
  }
  func.func @transform_0(%arg0: i32) -> (i32, i32, i32) {
    %c0_i32 = arith.constant 0 : i32
    %c0_i32_0 = arith.constant 0 : i32
    %c0_i32_1 = arith.constant 0 : i32
    return %arg0, %c0_i32, %c0_i32_0 : i32, i32, i32
  }
  func.func @transform_1(%arg0: i32) -> (i32, i32, i32) {
    %c0_i32 = arith.constant 0 : i32
    %c0_i32_0 = arith.constant 0 : i32
    %c0_i32_1 = arith.constant 0 : i32
    return %arg0, %c0_i32, %c0_i32_0 : i32, i32, i32
  }
  func.func @transform_2(%arg0: i32) -> (i32, i32) {
    %c0_i32 = arith.constant 0 : i32
    %c0_i32_0 = arith.constant 0 : i32
    %c0_i32_1 = arith.constant 0 : i32
    return %c0_i32, %c0_i32_0 : i32, i32
  }
  func.func @transform_3(%arg0: i32) -> (i32, i32) {
    %c0_i32 = arith.constant 0 : i32
    %c0_i32_0 = arith.constant 0 : i32
    %c0_i32_1 = arith.constant 0 : i32
    return %c0_i32, %c0_i32_0 : i32, i32
  }
  func.func @transform_4(%arg0: i32) -> (i32, i32) {
    %c0_i32 = arith.constant 0 : i32
    %c0_i32_0 = arith.constant 0 : i32
    %c0_i32_1 = arith.constant 0 : i32
    return %c0_i32, %c0_i32_0 : i32, i32
  }
  func.func @transform_5(%arg0: i32) -> (i32, i32) {
    %c0_i32 = arith.constant 0 : i32
    %c0_i32_0 = arith.constant 0 : i32
    %c0_i32_1 = arith.constant 0 : i32
    return %c0_i32, %c0_i32_0 : i32, i32
  }
  func.func @transform_6(%arg0: i32) -> (i32, i32) {
    %c0_i32 = arith.constant 0 : i32
    %c0_i32_0 = arith.constant 0 : i32
    %c0_i32_1 = arith.constant 0 : i32
    return %c0_i32, %c0_i32_0 : i32, i32
  }
  func.func @transform_7(%arg0: i32) -> (i32, i32, i32) {
    %c0_i32 = arith.constant 0 : i32
    %c0_i32_0 = arith.constant 0 : i32
    %c0_i32_1 = arith.constant 0 : i32
    return %arg0, %c0_i32, %c0_i32_0 : i32, i32, i32
  }
  func.func @transform_8(%arg0: i32) -> (i32, i32, i32) {
    %c0_i32 = arith.constant 0 : i32
    %c0_i32_0 = arith.constant 0 : i32
    %c0_i32_1 = arith.constant 0 : i32
    return %arg0, %c0_i32, %c0_i32_0 : i32, i32, i32
  }
  func.func @transform_9(%arg0: i32) -> (i32, i32, i32) {
    %c0_i32 = arith.constant 0 : i32
    %c0_i32_0 = arith.constant 0 : i32
    %c0_i32_1 = arith.constant 0 : i32
    return %arg0, %c0_i32, %c0_i32_0 : i32, i32, i32
  }
  func.func @transform_10(%arg0: i32) -> (i32, i32, i32) {
    %c0_i32 = arith.constant 0 : i32
    %c0_i32_0 = arith.constant 0 : i32
    %c0_i32_1 = arith.constant 0 : i32
    return %arg0, %c0_i32, %c0_i32_0 : i32, i32, i32
  }
}

</mosaic_0001>

<llo_original>
// kernel: tpu_custom_call.1
$region0: #{tpu_custom_call.1}
  #allocation0 [shape = 'u32[]', space=smem, size = 0x4, offset = 0x4, fixed_abs, tag = 'smem constant byte address 0x4 - core index']
  #allocation1 [shape = 'u32[144,128]{1,0:T(1,128)}', space=vmem, size = 0x12000, scoped, tag = 'internal scratch']
  %s0 = inlined_call_operand.vmem [shape: f32[4,128,16], index: 0, kind: input, shape index: {}]
  %s1 = inlined_call_operand.vmem [shape: f32[4,128,128], index: 1, kind: input, shape index: {}]
  %s2 = inlined_call_operand.vmem [shape: f32[16,32], index: 2, kind: input, shape index: {}]
  %s3 = inlined_call_operand.vmem [shape: f32[1,32], index: 3, kind: input, shape index: {}]
  %s4 = inlined_call_operand.vmem [shape: f32[16,32], index: 4, kind: input, shape index: {}]
  %s5 = inlined_call_operand.vmem [shape: f32[32,8], index: 5, kind: input, shape index: {}]
  %s6 = inlined_call_operand.vmem [shape: f32[1,8], index: 6, kind: input, shape index: {}]
  %s7 = inlined_call_operand.hbm [shape: f32[4,8,32], index: 7, kind: output, shape index: {0}]
  %s8 = inlined_call_operand.hbm [shape: f32[4,8,8], index: 8, kind: output, shape index: {1}]
  %s9 = inlined_call_operand.hbm [shape: f32[4,1,128], index: 9, kind: output, shape index: {2}]
  %s10 = inlined_call_operand.vmem [shape: f32[4,128,8], index: 10, kind: output, shape index: {3}]
  %11 = xla_tuple %s7, %s8, %s9, %s10
  %s12 = sld [smem:[#allocation0]]
  $region85: #{tpu_custom_call.1} parent=0
    _
  %s14 = ssub.s32 1, %s12
  %s15 = scalar_select 0, %s14, %s12
  $region1: #{tpu_custom_call.1} parent=0
    #allocation2 [shape = 'u8[16384]{0}', space=vmem, size = 0x4000, scoped, tag = 'output window, operand 0']
    #allocation3 [shape = 's32[2]{0}', space=sflag, size = 0x8, scoped, tag = 'scoped memory for tpu_custom_call.1']
    #allocation4 [shape = 'u8[16384]{0}', space=vmem, size = 0x4000, scoped, tag = 'output window, operand 1']
    #allocation5 [shape = 's32[2]{0}', space=sflag, size = 0x8, scoped, tag = 'scoped memory for tpu_custom_call.1']
    #allocation6 [shape = 'u8[2048]{0}', space=vmem, size = 0x800, scoped, tag = 'output window, operand 2']
    %16 = vsyncpa [#allocation3], 0
    %s17 = scalar_lea.sflag [#allocation3], 1
    %18 = vsyncpa %s17, 0
    %19 = vsyncpa [#allocation5], 0
    %s20 = scalar_lea.sflag [#allocation5], 1
    %21 = vsyncpa %s20, 0
    loop: start=0, step=1, limit=4
    $region2: #{tpu_custom_call.1} parent=1 // loop_pre_header
      _
    $region3: #{tpu_custom_call.1} parent=1 // loop_header
      %s23 = sphi 0, %s27
      %p24 = scmp.ge.s32.totalorder %s23, 4
      %s33 = sphi 0, %s35
      %s36 = sphi 0, %s33
      %s37 = sphi 0, %s36
      %s53 = sphi 0, %s37
      %s59 = sphi 0, %s61
      %s62 = sphi 0, %s59
      %s63 = sphi 0, %s62
      %s79 = sphi 0, %s63
      %s83 = sphi 0, %s83
      %s85 = sphi 0, %s83
      %s86 = sphi 0, %s85
      %s100 = sphi 0, %s86
      %s104 = sphi 0, %s104
      %s106 = sphi 0, %s104
      %s107 = sphi 0, %s106
      %s121 = sphi 0, %s107
      %s125 = sphi 0, %s125
      %s127 = sphi 0, %s125
      %s128 = sphi 0, %s127
      %s142 = sphi 0, %s128
      %s146 = sphi 0, %s146
      %s148 = sphi 0, %s146
      %s149 = sphi 0, %s148
      %s163 = sphi 0, %s149
      %s167 = sphi 0, %s167
      %s169 = sphi 0, %s167
      %s170 = sphi 0, %s169
      %s184 = sphi 0, %s170
      %s190 = sphi 0, %s192
      %s193 = sphi 0, %s190
      %s194 = sphi 0, %s193
      %s210 = sphi 0, %s194
      %s216 = sphi 0, %s218
      %s219 = sphi 0, %s216
      %s220 = sphi 0, %s219
      %s236 = sphi 0, %s220
      %s242 = sphi 0, %s244
      %s245 = sphi 0, %s242
      %s246 = sphi 0, %s245
      %s262 = sphi 0, %s246
      %s268 = sphi 0, %s270
      %s271 = sphi 0, %s268
      %s272 = sphi 0, %s271
      %s288 = sphi 0, %s272
    $region4: #{tpu_custom_call.1} parent=1 // loop_header_branch
      %26 = sbr.rel (%p24) target = $region8
    $region5: #{tpu_custom_call.1} parent=1 // loop_body
      %s28 = ssub.s32 %s23, 1
      %s29 = ssub.s32 %s23, 2
      %s30 = sadd.s32 %s23, 1
      %s31 = ssub.s32 %s23, %s30
      %p32 = scmp.eq.s32.totalorder %s31, 0
      %s34 = sadd.s32 %s33, 1
      %s35 = scalar_select %p32, %s33, %s34
      %p38 = pneg %p32
      %p39 = scmp.eq.s32.totalorder %s23, 1
      %p40 = por %p38, %p39
      %p41 = scmp.ne.s32.totalorder %s33, %s36
      %p42 = scmp.eq.s32.totalorder %s23, 0
      %p43 = por %p41, %p42
      %p44 = scmp.ne.s32.totalorder %s33, %s36
      %p45 = scmp.eq.s32.totalorder %s28, 1
      %p46 = por %p44, %p45
      %p47 = scmp.ne.s32.totalorder %s36, %s37
      %p48 = scmp.eq.s32.totalorder %s28, 0
      %p49 = por %p47, %p48
      %p50 = scmp.ne.s32.totalorder %s36, %s37
      %p51 = scmp.eq.s32.totalorder %s29, 1
      %p52 = por %p50, %p51
      %p54 = scmp.ne.s32.totalorder %s37, %s53
      %p55 = scmp.eq.s32.totalorder %s29, 0
      %p56 = por %p54, %p55
      %s57 = ssub.s32 %s23, %s30
      %p58 = scmp.eq.s32.totalorder %s57, 0
      %s60 = sadd.s32 %s59, 1
      %s61 = scalar_select %p58, %s59, %s60
      %p64 = pneg %p58
      %p65 = scmp.eq.s32.totalorder %s23, 1
      %p66 = por %p64, %p65
      %p67 = scmp.ne.s32.totalorder %s59, %s62
      %p68 = scmp.eq.s32.totalorder %s23, 0
      %p69 = por %p67, %p68
      %p70 = scmp.ne.s32.totalorder %s59, %s62
      %p71 = scmp.eq.s32.totalorder %s28, 1
      %p72 = por %p70, %p71
      %p73 = scmp.ne.s32.totalorder %s62, %s63
      %p74 = scmp.eq.s32.totalorder %s28, 0
      %p75 = por %p73, %p74
      %p76 = scmp.ne.s32.totalorder %s62, %s63
      %p77 = scmp.eq.s32.totalorder %s29, 1
      %p78 = por %p76, %p77
      %p80 = scmp.ne.s32.totalorder %s63, %s79
      %p81 = scmp.eq.s32.totalorder %s29, 0
      %p82 = por %p80, %p81
      %s84 = sadd.s32 %s83, 1
      %p87 = scmp.eq.s32.totalorder %s23, 1
      %p88 = scmp.ne.s32.totalorder %s83, %s85
      %p89 = scmp.eq.s32.totalorder %s23, 0
      %p90 = por %p88, %p89
      %p91 = scmp.ne.s32.totalorder %s83, %s85
      %p92 = scmp.eq.s32.totalorder %s28, 1
      %p93 = por %p91, %p92
      %p94 = scmp.ne.s32.totalorder %s85, %s86
      %p95 = scmp.eq.s32.totalorder %s28, 0
      %p96 = por %p94, %p95
      %p97 = scmp.ne.s32.totalorder %s85, %s86
      %p98 = scmp.eq.s32.totalorder %s29, 1
      %p99 = por %p97, %p98
      %p101 = scmp.ne.s32.totalorder %s86, %s100
      %p102 = scmp.eq.s32.totalorder %s29, 0
      %p103 = por %p101, %p102
      %s105 = sadd.s32 %s104, 1
      %p108 = scmp.eq.s32.totalorder %s23, 1
      %p109 = scmp.ne.s32.totalorder %s104, %s106
      %p110 = scmp.eq.s32.totalorder %s23, 0
      %p111 = por %p109, %p110
      %p112 = scmp.ne.s32.totalorder %s104, %s106
      %p113 = scmp.eq.s32.totalorder %s28, 1
      %p114 = por %p112, %p113
      %p115 = scmp.ne.s32.totalorder %s106, %s107
      %p116 = scmp.eq.s32.totalorder %s28, 0
      %p117 = por %p115, %p116
      %p118 = scmp.ne.s32.totalorder %s106, %s107
      %p119 = scmp.eq.s32.totalorder %s29, 1
      %p120 = por %p118, %p119
      %p122 = scmp.ne.s32.totalorder %s107, %s121
      %p123 = scmp.eq.s32.totalorder %s29, 0
      %p124 = por %p122, %p123
      %s126 = sadd.s32 %s125, 1
      %p129 = scmp.eq.s32.totalorder %s23, 1
      %p130 = scmp.ne.s32.totalorder %s125, %s127
      %p131 = scmp.eq.s32.totalorder %s23, 0
      %p132 = por %p130, %p131
      %p133 = scmp.ne.s32.totalorder %s125, %s127
      %p134 = scmp.eq.s32.totalorder %s28, 1
      %p135 = por %p133, %p134
      %p136 = scmp.ne.s32.totalorder %s127, %s128
      %p137 = scmp.eq.s32.totalorder %s28, 0
      %p138 = por %p136, %p137
      %p139 = scmp.ne.s32.totalorder %s127, %s128
      %p140 = scmp.eq.s32.totalorder %s29, 1
      %p141 = por %p139, %p140
      %p143 = scmp.ne.s32.totalorder %s128, %s142
      %p144 = scmp.eq.s32.totalorder %s29, 0
      %p145 = por %p143, %p144
      %s147 = sadd.s32 %s146, 1
      %p150 = scmp.eq.s32.totalorder %s23, 1
      %p151 = scmp.ne.s32.totalorder %s146, %s148
      %p152 = scmp.eq.s32.totalorder %s23, 0
      %p153 = por %p151, %p152
      %p154 = scmp.ne.s32.totalorder %s146, %s148
      %p155 = scmp.eq.s32.totalorder %s28, 1
      %p156 = por %p154, %p155
      %p157 = scmp.ne.s32.totalorder %s148, %s149
      %p158 = scmp.eq.s32.totalorder %s28, 0
      %p159 = por %p157, %p158
      %p160 = scmp.ne.s32.totalorder %s148, %s149
      %p161 = scmp.eq.s32.totalorder %s29, 1
      %p162 = por %p160, %p161
      %p164 = scmp.ne.s32.totalorder %s149, %s163
      %p165 = scmp.eq.s32.totalorder %s29, 0
      %p166 = por %p164, %p165
      %s168 = sadd.s32 %s167, 1
      %p171 = scmp.eq.s32.totalorder %s23, 1
      %p172 = scmp.ne.s32.totalorder %s167, %s169
      %p173 = scmp.eq.s32.totalorder %s23, 0
      %p174 = por %p172, %p173
      %p175 = scmp.ne.s32.totalorder %s167, %s169
      %p176 = scmp.eq.s32.totalorder %s28, 1
      %p177 = por %p175, %p176
      %p178 = scmp.ne.s32.totalorder %s169, %s170
      %p179 = scmp.eq.s32.totalorder %s28, 0
      %p180 = por %p178, %p179
      %p181 = scmp.ne.s32.totalorder %s169, %s170
      %p182 = scmp.eq.s32.totalorder %s29, 1
      %p183 = por %p181, %p182
      %p185 = scmp.ne.s32.totalorder %s170, %s184
      %p186 = scmp.eq.s32.totalorder %s29, 0
      %p187 = por %p185, %p186
      %s188 = ssub.s32 %s23, %s30
      %p189 = scmp.eq.s32.totalorder %s188, 0
      %s191 = sadd.s32 %s190, 1
      %s192 = scalar_select %p189, %s190, %s191
      %p195 = pneg %p189
      %p196 = scmp.eq.s32.totalorder %s23, 1
      %p197 = por %p195, %p196
      %p198 = scmp.ne.s32.totalorder %s190, %s193
      %p199 = scmp.eq.s32.totalorder %s23, 0
      %p200 = por %p198, %p199
      %p201 = scmp.ne.s32.totalorder %s190, %s193
      %p202 = scmp.eq.s32.totalorder %s28, 1
      %p203 = por %p201, %p202
      %p204 = scmp.ne.s32.totalorder %s193, %s194
      %p205 = scmp.eq.s32.totalorder %s28, 0
      %p206 = por %p204, %p205
      %p207 = scmp.ne.s32.totalorder %s193, %s194
      %p208 = scmp.eq.s32.totalorder %s29, 1
      %p209 = por %p207, %p208
      %p211 = scmp.ne.s32.totalorder %s194, %s210
      %p212 = scmp.eq.s32.totalorder %s29, 0
      %p213 = por %p211, %p212
      %s214 = ssub.s32 %s23, %s30
      %p215 = scmp.eq.s32.totalorder %s214, 0
      %s217 = sadd.s32 %s216, 1
      %s218 = scalar_select %p215, %s216, %s217
      %p221 = pneg %p215
      %p222 = scmp.eq.s32.totalorder %s23, 1
      %p223 = por %p221, %p222
      %p224 = scmp.ne.s32.totalorder %s216, %s219
      %p225 = scmp.eq.s32.totalorder %s23, 0
      %p226 = por %p224, %p225
      %p227 = scmp.ne.s32.totalorder %s216, %s219
      %p228 = scmp.eq.s32.totalorder %s28, 1
      %p229 = por %p227, %p228
      %p230 = scmp.ne.s32.totalorder %s219, %s220
      %p231 = scmp.eq.s32.totalorder %s28, 0
      %p232 = por %p230, %p231
      %p233 = scmp.ne.s32.totalorder %s219, %s220
      %p234 = scmp.eq.s32.totalorder %s29, 1
      %p235 = por %p233, %p234
      %p237 = scmp.ne.s32.totalorder %s220, %s236
      %p238 = scmp.eq.s32.totalorder %s29, 0
      %p239 = por %p237, %p238
      %s240 = ssub.s32 %s23, %s30
      %p241 = scmp.eq.s32.totalorder %s240, 0
      %s243 = sadd.s32 %s242, 1
      %s244 = scalar_select %p241, %s242, %s243
      %p247 = pneg %p241
      %p248 = scmp.eq.s32.totalorder %s23, 1
      %p249 = por %p247, %p248
      %p250 = scmp.ne.s32.totalorder %s242, %s245
      %p251 = scmp.eq.s32.totalorder %s23, 0
      %p252 = por %p250, %p251
      %p253 = scmp.ne.s32.totalorder %s242, %s245
      %p254 = scmp.eq.s32.totalorder %s28, 1
      %p255 = por %p253, %p254
      %p256 = scmp.ne.s32.totalorder %s245, %s246
      %p257 = scmp.eq.s32.totalorder %s28, 0
      %p258 = por %p256, %p257
      %p259 = scmp.ne.s32.totalorder %s245, %s246
      %p260 = scmp.eq.s32.totalorder %s29, 1
      %p261 = por %p259, %p260
      %p263 = scmp.ne.s32.totalorder %s246, %s262
      %p264 = scmp.eq.s32.totalorder %s29, 0
      %p265 = por %p263, %p264
      %s266 = ssub.s32 %s23, %s30
      %p267 = scmp.eq.s32.totalorder %s266, 0
      %s269 = sadd.s32 %s268, 1
      %s270 = scalar_select %p267, %s268, %s269
      %p273 = pneg %p267
      %p274 = scmp.eq.s32.totalorder %s23, 1
      %p275 = por %p273, %p274
      %p276 = scmp.ne.s32.totalorder %s268, %s271
      %p277 = scmp.eq.s32.totalorder %s23, 0
      %p278 = por %p276, %p277
      %p279 = scmp.ne.s32.totalorder %s268, %s271
      %p280 = scmp.eq.s32.totalorder %s28, 1
      %p281 = por %p279, %p280
      %p282 = scmp.ne.s32.totalorder %s271, %s272
      %p283 = scmp.eq.s32.totalorder %s28, 0
      %p284 = por %p282, %p283
      %p285 = scmp.ne.s32.totalorder %s271, %s272
      %p286 = scmp.eq.s32.totalorder %s29, 1
      %p287 = por %p285, %p286
      %p289 = scmp.ne.s32.totalorder %s272, %s288
      %p290 = scmp.eq.s32.totalorder %s29, 0
      %p291 = por %p289, %p290
      %p292 = scmp.le.s32.totalorder 1, %s23
      %p293 = scmp.lt.s32.totalorder %s23, 3
      %p294 = pnand %p292, %p293
      %p295 = pneg %p294
      // Predicated region
      $region9: #{tpu_custom_call.1} parent=5 // pred_check
        _
      $region10: #{tpu_custom_call.1} parent=5 // pred_check_branch
        %297 = sbr.rel (%p294) target = $region12
      $region11: #{tpu_custom_call.1} parent=5 // pred_region
        %s298 = ssub.s32 %s23, 1
        // Predicated region
        $region13: #{tpu_custom_call.1} parent=11 // pred_check
          %p299 = pneg %p96
        $region14: #{tpu_custom_call.1} parent=11 // pred_check_branch
          %301 = sbr.rel (%p299) target = $region16
        $region15: #{tpu_custom_call.1} parent=11 // pred_region
          _
        $region16: #{tpu_custom_call.1} parent=11 // pred_fallthru
          _
        // Predicated region
        $region17: #{tpu_custom_call.1} parent=11 // pred_check
          %p302 = pneg %p117
        $region18: #{tpu_custom_call.1} parent=11 // pred_check_branch
          %304 = sbr.rel (%p302) target = $region20
        $region19: #{tpu_custom_call.1} parent=11 // pred_region
          _
        $region20: #{tpu_custom_call.1} parent=11 // pred_fallthru
          _
        // Predicated region
        $region21: #{tpu_custom_call.1} parent=11 // pred_check
          %p305 = pneg %p138
        $region22: #{tpu_custom_call.1} parent=11 // pred_check_branch
          %307 = sbr.rel (%p305) target = $region24
        $region23: #{tpu_custom_call.1} parent=11 // pred_region
          _
        $region24: #{tpu_custom_call.1} parent=11 // pred_fallthru
          _
        // Predicated region
        $region25: #{tpu_custom_call.1} parent=11 // pred_check
          %p308 = pneg %p159
        $region26: #{tpu_custom_call.1} parent=11 // pred_check_branch
          %310 = sbr.rel (%p308) target = $region28
        $region27: #{tpu_custom_call.1} parent=11 // pred_region
          _
        $region28: #{tpu_custom_call.1} parent=11 // pred_fallthru
          _
        // Predicated region
        $region29: #{tpu_custom_call.1} parent=11 // pred_check
          %p311 = pneg %p180
        $region30: #{tpu_custom_call.1} parent=11 // pred_check_branch
          %313 = sbr.rel (%p311) target = $region32
        $region31: #{tpu_custom_call.1} parent=11 // pred_region
          _
        $region32: #{tpu_custom_call.1} parent=11 // pred_fallthru
          _
      $region12: #{tpu_custom_call.1} parent=5 // pred_fallthru
        _
      %p314 = scmp.lt.s32.totalorder %s23, 2
      // Predicated region
      $region33: #{tpu_custom_call.1} parent=5 // pred_check
        %p315 = pneg %p314
      $region34: #{tpu_custom_call.1} parent=5 // pred_check_branch
        %317 = sbr.rel (%p315) target = $region36
      $region35: #{tpu_custom_call.1} parent=5 // pred_region
        // Predicated region
        $region37: #{tpu_custom_call.1} parent=35 // pred_check
          %p318 = pneg %p43
        $region38: #{tpu_custom_call.1} parent=35 // pred_check_branch
          %320 = sbr.rel (%p318) target = $region40
        $region39: #{tpu_custom_call.1} parent=35 // pred_region
          %s321 = smul.u32 2, %s23
          %p322 = scmp.lt.s32.totalorder %s321, 3
          %s323 = scalar_select %p322, %s321, 3
          %s324 = smul.addr %s323, 16
          %s325 = smul.addr %s324, 8
          %s326 = scalar_lea.vmem %s0, %s325
          %s327 = smul.u32 2, %s23
        $region40: #{tpu_custom_call.1} parent=35 // pred_fallthru
          _
        // Predicated region
        $region41: #{tpu_custom_call.1} parent=35 // pred_check
          %p328 = pneg %p69
        $region42: #{tpu_custom_call.1} parent=35 // pred_check_branch
          %330 = sbr.rel (%p328) target = $region44
        $region43: #{tpu_custom_call.1} parent=35 // pred_region
          %s331 = smul.u32 2, %s23
          %p332 = scmp.lt.s32.totalorder %s331, 3
          %s333 = scalar_select %p332, %s331, 3
          %s334 = smul.addr %s333, 16
          %s335 = smul.addr %s334, 8
          %s336 = scalar_lea.vmem %s1, %s335
          %s337 = smul.u32 2, %s23
        $region44: #{tpu_custom_call.1} parent=35 // pred_fallthru
          _
      $region36: #{tpu_custom_call.1} parent=5 // pred_fallthru
        _
      %p338 = scmp.le.s32.totalorder 1, %s23
      %p339 = scmp.lt.s32.totalorder %s23, 3
      %p340 = pnand %p338, %p339
      %p341 = pneg %p340
      // Predicated region
      $region45: #{tpu_custom_call.1} parent=5 // pred_check
        _
      $region46: #{tpu_custom_call.1} parent=5 // pred_check_branch
        %343 = sbr.rel (%p340) target = $region48
      $region47: #{tpu_custom_call.1} parent=5 // pred_region
        %s344 = ssub.s32 %s23, 1
        %s345 = smul.u32 2, %s28
        %p346 = scmp.lt.s32.totalorder %s345, 3
        %s347 = scalar_select %p346, %s345, 3
        %s348 = smul.addr %s347, 16
        %s349 = smul.addr %s348, 8
        %s350 = scalar_lea.vmem %s0, %s349
        %p351 = pneg %p49
        %p352 = pneg %p46
        %s353 = smul.u32 2, %s28
        %p354 = scmp.lt.s32.totalorder %s353, 3
        %s355 = scalar_select %p354, %s353, 3
        %s356 = smul.addr %s355, 16
        %s357 = smul.addr %s356, 8
        %s358 = scalar_lea.vmem %s1, %s357
        %p359 = pneg %p75
        %p360 = pneg %p72
        %p361 = pneg %p96
        %p362 = pneg %p93
        %p363 = pneg %p117
        %p364 = pneg %p114
        %p365 = pneg %p138
        %p366 = pneg %p135
        %p367 = pneg %p159
        %p368 = pneg %p156
        %p369 = pneg %p180
        %p370 = pneg %p177
        %p371 = pneg %p206
        %p372 = pneg %p203
        %s373 = sand.u32 %s193, 1
        %s374 = scalar_lea.sflag [#allocation3], %s373
        %s375 = sand.u32 %s193, 1
        %s376 = smul.addr %s375, 16
        %s377 = scalar_lea.vmem [#allocation2], %s376
        %p378 = pneg %p232
        %p379 = pneg %p229
        %s380 = sand.u32 %s28, 1
        %s381 = scalar_lea.sflag [#allocation5], %s380
        %s382 = sand.u32 %s219, 1
        %s383 = smul.addr %s382, 16
        %s384 = scalar_lea.vmem [#allocation4], %s383
        %p385 = pneg %p258
        %p386 = pneg %p255
        %s387 = sand.u32 %s28, 1
        %s388 = scalar_lea.sflag [#allocation5], %s387
        %s389 = sand.u32 %s245, 1
        %s390 = smul.addr %s389, 2
        %s391 = scalar_lea.vmem [#allocation6], %s390
        %p392 = pneg %p284
        %p393 = pneg %p281
        %s394 = smul.u32 2, %s28
        %p395 = scmp.lt.s32.totalorder %s394, 3
        %s396 = scalar_select %p395, %s394, 3
        %s397 = smul.addr %s396, 16
        %s398 = smul.addr %s397, 8
        %s399 = scalar_lea.vmem %s10, %s398
        %s400 = smul.u32 2, %s28
        %p401 = scmp.lt.s32.totalorder %s400, 3
        %s402 = scalar_select %p401, %s400, 3
        %s403 = smul.addr %s402, 16
        %s404 = smul.addr %s403, 8
        %s405 = scalar_lea.vmem %s0, %s404
        %s406 = smul.u32 2, %s28
        %s407 = smul.u32 2, %s28
        %p408 = scmp.lt.s32.totalorder %s407, 3
        %s409 = scalar_select %p408, %s407, 3
        %s410 = smul.addr %s409, 16
        %s411 = smul.addr %s410, 8
        %s412 = scalar_lea.vmem %s1, %s411
        %s413 = smul.u32 2, %s28
        %s414 = smul.u32 2, %s28
        %s415 = smul.u32 2, %s28
        %s416 = smul.u32 2, %s28
        %s417 = smul.u32 2, %s28
        %p418 = scmp.lt.s32.totalorder %s417, 3
        %s419 = scalar_select %p418, %s417, 3
        %s420 = smul.addr %s419, 16
        %s421 = smul.addr %s420, 8
        %s422 = scalar_lea.vmem %s10, %s421
        %s423 = smul.u32 2, %s28
        %v424 = vld [vmem:[%s2] sm:$0xff]
        %v425 = vld [vmem:[%s2 + $0x8] sm:$0xff]
        %v426 = vld [vmem:[%s3] sm:$0x1]
        %v427 = vld [vmem:[%s4] sm:$0xff]
        %v428 = vld [vmem:[%s4 + $0x8] sm:$0xff]
        %v429 = vld [vmem:[%s5] sm:$0xff]
        %v430 = vld [vmem:[%s5 + $0x8] sm:$0xff]
        %v431 = vld [vmem:[%s5 + $0x10] sm:$0xff]
        %v432 = vld [vmem:[%s5 + $0x18] sm:$0xff]
        %v433 = vld [vmem:[%s6] sm:$0x1]
        %v434 = vlaneseq
        %v435 = vshrl.u32 %v434, 7
        %v436 = vlaneseq
        %v437 = vand.u32 %v436, 127
        %vm438 = vcmp.eq.s32.totalorder %v435, %v437
        %v439 = vsel %vm438, 1, 0
        %v440 = vcvt.s32.f32 %v439
        %v441 = vld [vmem:[%s405] sm:$0xff]
        %v442 = vld [vmem:[%s405 + $0x8] sm:$0xff]
        %v443 = vld [vmem:[%s405 + $0x10] sm:$0xff]
        %v444 = vld [vmem:[%s405 + $0x18] sm:$0xff]
        %v445 = vld [vmem:[%s405 + $0x20] sm:$0xff]
        %v446 = vld [vmem:[%s405 + $0x28] sm:$0xff]
        %v447 = vld [vmem:[%s405 + $0x30] sm:$0xff]
        %v448 = vld [vmem:[%s405 + $0x38] sm:$0xff]
        %v449 = vld [vmem:[%s405 + $0x40] sm:$0xff]
        %v450 = vld [vmem:[%s405 + $0x48] sm:$0xff]
        %v451 = vld [vmem:[%s405 + $0x50] sm:$0xff]
        %v452 = vld [vmem:[%s405 + $0x58] sm:$0xff]
        %v453 = vld [vmem:[%s405 + $0x60] sm:$0xff]
        %v454 = vld [vmem:[%s405 + $0x68] sm:$0xff]
        %v455 = vld [vmem:[%s405 + $0x70] sm:$0xff]
        %v456 = vld [vmem:[%s405 + $0x78] sm:$0xff]
        %v457 = vld [vmem:[%s412] sm:$0xff]
        %v458 = vld [vmem:[%s412 + $0x8] sm:$0xff]
        %v459 = vld [vmem:[%s412 + $0x10] sm:$0xff]
        %v460 = vld [vmem:[%s412 + $0x18] sm:$0xff]
        %v461 = vld [vmem:[%s412 + $0x20] sm:$0xff]
        %v462 = vld [vmem:[%s412 + $0x28] sm:$0xff]
        %v463 = vld [vmem:[%s412 + $0x30] sm:$0xff]
        %v464 = vld [vmem:[%s412 + $0x38] sm:$0xff]
        %v465 = vld [vmem:[%s412 + $0x40] sm:$0xff]
        %v466 = vld [vmem:[%s412 + $0x48] sm:$0xff]
        %v467 = vld [vmem:[%s412 + $0x50] sm:$0xff]
        %v468 = vld [vmem:[%s412 + $0x58] sm:$0xff]
        %v469 = vld [vmem:[%s412 + $0x60] sm:$0xff]
        %v470 = vld [vmem:[%s412 + $0x68] sm:$0xff]
        %v471 = vld [vmem:[%s412 + $0x70] sm:$0xff]
        %v472 = vld [vmem:[%s412 + $0x78] sm:$0xff]
        %473 = vmatprep.subr.mxu0 0.0
        %474 = vmatpush1.msra.mxu0 %v441
        %475 = vmatprep.subr.mxu0 0.0
        %476 = vmatpush1.msra.mxu0 %v442
        %477 = vmatprep.subr.mxu0 0.0
        %478 = vmatpush1.msra.mxu0 %v443
        %479 = vmatprep.subr.mxu0 0.0
        %480 = vmatpush1.msra.mxu0 %v444
        %481 = vmatprep.subr.mxu0 0.0
        %482 = vmatpush1.msra.mxu0 %v445
        %483 = vmatprep.subr.mxu0 0.0
        %484 = vmatpush1.msra.mxu0 %v446
        %485 = vmatprep.subr.mxu0 0.0
        %486 = vmatpush1.msra.mxu0 %v447
        %487 = vmatprep.subr.mxu0 0.0
        %488 = vmatpush1.msra.mxu0 %v448
        %489 = vmatprep.subr.mxu0 0.0
        %490 = vmatpush1.msra.mxu0 %v449
        %491 = vmatprep.subr.mxu0 0.0
        %492 = vmatpush1.msra.mxu0 %v450
        %493 = vmatprep.subr.mxu0 0.0
        %494 = vmatpush1.msra.mxu0 %v451
        %495 = vmatprep.subr.mxu0 0.0
        %496 = vmatpush1.msra.mxu0 %v452
        %497 = vmatprep.subr.mxu0 0.0
        %498 = vmatpush1.msra.mxu0 %v453
        %499 = vmatprep.subr.mxu0 0.0
        %500 = vmatpush1.msra.mxu0 %v454
        %501 = vmatprep.subr.mxu0 0.0
        %502 = vmatpush1.msra.mxu0 %v455
        %503 = vmatprep.subr.mxu0 0.0
        %504 = vmatpush1.msra.mxu0 %v456
        %505 = vmatprep.subr.mxu0 0.0
        %506 = vmatpush1.msra.mxu0 0.0
        %507 = vmatprep.subr.mxu0 0.0
        %508 = vmatpush1.msra.mxu0 0.0
        %509 = vmatprep.subr.mxu0 0.0
        %510 = vmatpush1.msra.mxu0 0.0
        %511 = vmatprep.subr.mxu0 0.0
        %512 = vmatpush1.msra.mxu0 0.0
        %513 = vmatprep.subr.mxu0 0.0
        %514 = vmatpush1.msra.mxu0 0.0
        %515 = vmatprep.subr.mxu0 0.0
        %516 = vmatpush1.msra.mxu0 0.0
        %517 = vmatprep.subr.mxu0 0.0
        %518 = vmatpush1.msra.mxu0 0.0
        %519 = vmatprep.subr.mxu0 0.0
        %520 = vmatpush1.msra.mxu0 0.0
        %521 = vmatprep.subr.mxu0 0.0
        %522 = vmatpush1.msra.mxu0 0.0
        %523 = vmatprep.subr.mxu0 0.0
        %524 = vmatpush1.msra.mxu0 0.0
        %525 = vmatprep.subr.mxu0 0.0
        %526 = vmatpush1.msra.mxu0 0.0
        %527 = vmatprep.subr.mxu0 0.0
        %528 = vmatpush1.msra.mxu0 0.0
        %529 = vmatprep.subr.mxu0 0.0
        %530 = vmatpush1.msra.mxu0 0.0
        %531 = vmatprep.subr.mxu0 0.0
        %532 = vmatpush1.msra.mxu0 0.0
        %533 = vmatprep.subr.mxu0 0.0
        %534 = vmatpush1.msra.mxu0 0.0
        %535 = vmatprep.subr.mxu0 0.0
        %536 = vmatpush1.msra.mxu0 0.0
        %537 = vmatprep.mubr.f32.mxu0 0.0
        %538 = vmatmul.mubr.f32.gmra.mrb[0].mxu0 %v457
        %v539 = vpop.f32.mrb[0].mxu0
        %v540 = vadd.f32 0.0, %v539
        %v541 = vpop.f32.mrb[0].mxu0
        %542 = vmatprep.mubr.f32.mxu0 0.0
        %543 = vmatmul.mubr.f32.gmra.mrb[0].mxu0 %v458
        %v544 = vpop.f32.mrb[0].mxu0
        %v545 = vadd.f32 0.0, %v544
        %v546 = vpop.f32.mrb[0].mxu0
        %547 = vmatprep.mubr.f32.mxu0 0.0
        %548 = vmatmul.mubr.f32.gmra.mrb[0].mxu0 %v459
        %v549 = vpop.f32.mrb[0].mxu0
        %v550 = vadd.f32 0.0, %v549
        %v551 = vpop.f32.mrb[0].mxu0
        %552 = vmatprep.mubr.f32.mxu0 0.0
        %553 = vmatmul.mubr.f32.gmra.mrb[0].mxu0 %v460
        %v554 = vpop.f32.mrb[0].mxu0
        %v555 = vadd.f32 0.0, %v554
        %v556 = vpop.f32.mrb[0].mxu0
        %557 = vmatprep.mubr.f32.mxu0 0.0
        %558 = vmatmul.mubr.f32.gmra.mrb[0].mxu0 %v461
        %v559 = vpop.f32.mrb[0].mxu0
        %v560 = vadd.f32 0.0, %v559
        %v561 = vpop.f32.mrb[0].mxu0
        %562 = vmatprep.mubr.f32.mxu0 0.0
        %563 = vmatmul.mubr.f32.gmra.mrb[0].mxu0 %v462
        %v564 = vpop.f32.mrb[0].mxu0
        %v565 = vadd.f32 0.0, %v564
        %v566 = vpop.f32.mrb[0].mxu0
        %567 = vmatprep.mubr.f32.mxu0 0.0
        %568 = vmatmul.mubr.f32.gmra.mrb[0].mxu0 %v463
        %v569 = vpop.f32.mrb[0].mxu0
        %v570 = vadd.f32 0.0, %v569
        %v571 = vpop.f32.mrb[0].mxu0
        %572 = vmatprep.mubr.f32.mxu0 0.0
        %573 = vmatmul.mubr.f32.gmra.mrb[0].mxu0 %v464
        %v574 = vpop.f32.mrb[0].mxu0
        %v575 = vadd.f32 0.0, %v574
        %v576 = vpop.f32.mrb[0].mxu0
        %577 = vmatprep.mubr.f32.mxu0 0.0
        %578 = vmatmul.mubr.f32.gmra.mrb[0].mxu0 %v465
        %v579 = vpop.f32.mrb[0].mxu0
        %v580 = vadd.f32 0.0, %v579
        %v581 = vpop.f32.mrb[0].mxu0
        %582 = vmatprep.mubr.f32.mxu0 0.0
        %583 = vmatmul.mubr.f32.gmra.mrb[0].mxu0 %v466
        %v584 = vpop.f32.mrb[0].mxu0
        %v585 = vadd.f32 0.0, %v584
        %v586 = vpop.f32.mrb[0].mxu0
        %587 = vmatprep.mubr.f32.mxu0 0.0
        %588 = vmatmul.mubr.f32.gmra.mrb[0].mxu0 %v467
        %v589 = vpop.f32.mrb[0].mxu0
        %v590 = vadd.f32 0.0, %v589
        %v591 = vpop.f32.mrb[0].mxu0
        %592 = vmatprep.mubr.f32.mxu0 0.0
        %593 = vmatmul.mubr.f32.gmra.mrb[0].mxu0 %v468
        %v594 = vpop.f32.mrb[0].mxu0
        %v595 = vadd.f32 0.0, %v594
        %v596 = vpop.f32.mrb[0].mxu0
        %597 = vmatprep.mubr.f32.mxu0 0.0
        %598 = vmatmul.mubr.f32.gmra.mrb[0].mxu0 %v469
        %v599 = vpop.f32.mrb[0].mxu0
        %v600 = vadd.f32 0.0, %v599
        %v601 = vpop.f32.mrb[0].mxu0
        %602 = vmatprep.mubr.f32.mxu0 0.0
        %603 = vmatmul.mubr.f32.gmra.mrb[0].mxu0 %v470
        %v604 = vpop.f32.mrb[0].mxu0
        %v605 = vadd.f32 0.0, %v604
        %v606 = vpop.f32.mrb[0].mxu0
        %607 = vmatprep.mubr.f32.mxu0 0.0
        %608 = vmatmul.mubr.f32.gmra.mrb[0].mxu0 %v471
        %v609 = vpop.f32.mrb[0].mxu0
        %v610 = vadd.f32 0.0, %v609
        %v611 = vpop.f32.mrb[0].mxu0
        %612 = vmatprep.mubr.f32.mxu0 0.0
        %613 = vmatmul.mubr.f32.gmra.mrb[0].mxu0 %v472
        %v614 = vpop.f32.mrb[0].mxu0
        %v615 = vadd.f32 0.0, %v614
        %v616 = vpop.f32.mrb[0].mxu0
        %617 = vdwg.mxu0
        %v619 = vlaneseq
        %v620 = vshrl.u32 %v619, 7
        %v621 = vsub.s32 0, %v620
        %v622 = vrot.slane %v426, %v621
        %vm624 = vcmask 130048
        %v626 = vsel %vm624, %v540, 0
        %v629 = vsel %vm624, %v545, 0
        %v632 = vsel %vm624, %v550, 0
        %v635 = vsel %vm624, %v555, 0
        %v638 = vsel %vm624, %v560, 0
        %v641 = vsel %vm624, %v565, 0
        %v644 = vsel %vm624, %v570, 0
        %v647 = vsel %vm624, %v575, 0
        %v650 = vsel %vm624, %v580, 0
        %v653 = vsel %vm624, %v585, 0
        %v656 = vsel %vm624, %v590, 0
        %v659 = vsel %vm624, %v595, 0
        %v662 = vsel %vm624, %v600, 0
        %v665 = vsel %vm624, %v605, 0
        %v668 = vsel %vm624, %v610, 0
        %v671 = vsel %vm624, %v615, 0
        %673 = vmatprep.subr.mxu0 0.0
        %674 = vmatpush1.msra.mxu0 %v424
        %675 = vmatprep.subr.mxu0 0.0
        %676 = vmatpush1.msra.mxu0 %v425
        %677 = vmatprep.subr.mxu0 0.0
        %678 = vmatpush1.msra.mxu0 0.0
        %679 = vmatprep.subr.mxu0 0.0
        %680 = vmatpush1.msra.mxu0 0.0
        %681 = vmatprep.subr.mxu0 0.0
        %682 = vmatpush1.msra.mxu0 0.0
        %683 = vmatprep.subr.mxu0 0.0
        %684 = vmatpush1.msra.mxu0 0.0
        %685 = vmatprep.subr.mxu0 0.0
        %686 = vmatpush1.msra.mxu0 0.0
        %687 = vmatprep.subr.mxu0 0.0
        %688 = vmatpush1.msra.mxu0 0.0
        %689 = vmatprep.subr.mxu0 0.0
        %690 = vmatpush1.msra.mxu0 0.0
        %691 = vmatprep.subr.mxu0 0.0
        %692 = vmatpush1.msra.mxu0 0.0
        %693 = vmatprep.subr.mxu0 0.0
        %694 = vmatpush1.msra.mxu0 0.0
        %695 = vmatprep.subr.mxu0 0.0
        %696 = vmatpush1.msra.mxu0 0.0
        %697 = vmatprep.subr.mxu0 0.0
        %698 = vmatpush1.msra.mxu0 0.0
        %699 = vmatprep.subr.mxu0 0.0
        %700 = vmatpush1.msra.mxu0 0.0
        %701 = vmatprep.subr.mxu0 0.0
        %702 = vmatpush1.msra.mxu0 0.0
        %703 = vmatprep.subr.mxu0 0.0
        %704 = vmatpush1.msra.mxu0 0.0
        %705 = vmatprep.subr.mxu0 0.0
        %706 = vmatpush1.msra.mxu0 0.0
        %707 = vmatprep.subr.mxu0 0.0
        %708 = vmatpush1.msra.mxu0 0.0
        %709 = vmatprep.subr.mxu0 0.0
        %710 = vmatpush1.msra.mxu0 0.0
        %711 = vmatprep.subr.mxu0 0.0
        %712 = vmatpush1.msra.mxu0 0.0
        %713 = vmatprep.subr.mxu0 0.0
        %714 = vmatpush1.msra.mxu0 0.0
        %715 = vmatprep.subr.mxu0 0.0
        %716 = vmatpush1.msra.mxu0 0.0
        %717 = vmatprep.subr.mxu0 0.0
        %718 = vmatpush1.msra.mxu0 0.0
        %719 = vmatprep.subr.mxu0 0.0
        %720 = vmatpush1.msra.mxu0 0.0
        %721 = vmatprep.subr.mxu0 0.0
        %722 = vmatpush1.msra.mxu0 0.0
        %723 = vmatprep.subr.mxu0 0.0
        %724 = vmatpush1.msra.mxu0 0.0
        %725 = vmatprep.subr.mxu0 0.0
        %726 = vmatpush1.msra.mxu0 0.0
        %727 = vmatprep.subr.mxu0 0.0
        %728 = vmatpush1.msra.mxu0 0.0
        %729 = vmatprep.subr.mxu0 0.0
        %730 = vmatpush1.msra.mxu0 0.0
        %731 = vmatprep.subr.mxu0 0.0
        %732 = vmatpush1.msra.mxu0 0.0
        %733 = vmatprep.subr.mxu0 0.0
        %734 = vmatpush1.msra.mxu0 0.0
        %735 = vmatprep.subr.mxu0 0.0
        %736 = vmatpush1.msra.mxu0 0.0
        %737 = vmatprep.mubr.f32.mxu0 0.0
        %738 = vmatmul.mubr.f32.gmra.mrb[0].mxu0 %v626
        %v739 = vpop.f32.mrb[0].mxu0
        %v740 = vadd.f32 %v622, %v739
        %v741 = vpop.f32.mrb[0].mxu0
        %742 = vmatprep.mubr.f32.mxu0 0.0
        %743 = vmatmul.mubr.f32.gmra.mrb[0].mxu0 %v629
        %v744 = vpop.f32.mrb[0].mxu0
        %v745 = vadd.f32 %v622, %v744
        %v746 = vpop.f32.mrb[0].mxu0
        %747 = vmatprep.mubr.f32.mxu0 0.0
        %748 = vmatmul.mubr.f32.gmra.mrb[0].mxu0 %v632
        %v749 = vpop.f32.mrb[0].mxu0
        %v750 = vadd.f32 %v622, %v749
        %v751 = vpop.f32.mrb[0].mxu0
        %752 = vmatprep.mubr.f32.mxu0 0.0
        %753 = vmatmul.mubr.f32.gmra.mrb[0].mxu0 %v635
        %v754 = vpop.f32.mrb[0].mxu0
        %v755 = vadd.f32 %v622, %v754
        %v756 = vpop.f32.mrb[0].mxu0
        %757 = vmatprep.mubr.f32.mxu0 0.0
        %758 = vmatmul.mubr.f32.gmra.mrb[0].mxu0 %v638
        %v759 = vpop.f32.mrb[0].mxu0
        %v760 = vadd.f32 %v622, %v759
        %v761 = vpop.f32.mrb[0].mxu0
        %762 = vmatprep.mubr.f32.mxu0 0.0
        %763 = vmatmul.mubr.f32.gmra.mrb[0].mxu0 %v641
        %v764 = vpop.f32.mrb[0].mxu0
        %v765 = vadd.f32 %v622, %v764
        %v766 = vpop.f32.mrb[0].mxu0
        %767 = vmatprep.mubr.f32.mxu0 0.0
        %768 = vmatmul.mubr.f32.gmra.mrb[0].mxu0 %v644
        %v769 = vpop.f32.mrb[0].mxu0
        %v770 = vadd.f32 %v622, %v769
        %v771 = vpop.f32.mrb[0].mxu0
        %772 = vmatprep.mubr.f32.mxu0 0.0
        %773 = vmatmul.mubr.f32.gmra.mrb[0].mxu0 %v647
        %v774 = vpop.f32.mrb[0].mxu0
        %v775 = vadd.f32 %v622, %v774
        %v776 = vpop.f32.mrb[0].mxu0
        %777 = vmatprep.mubr.f32.mxu0 0.0
        %778 = vmatmul.mubr.f32.gmra.mrb[0].mxu0 %v650
        %v779 = vpop.f32.mrb[0].mxu0
        %v780 = vadd.f32 %v622, %v779
        %v781 = vpop.f32.mrb[0].mxu0
        %782 = vmatprep.mubr.f32.mxu0 0.0
        %783 = vmatmul.mubr.f32.gmra.mrb[0].mxu0 %v653
        %v784 = vpop.f32.mrb[0].mxu0
        %v785 = vadd.f32 %v622, %v784
        %v786 = vpop.f32.mrb[0].mxu0
        %787 = vmatprep.mubr.f32.mxu0 0.0
        %788 = vmatmul.mubr.f32.gmra.mrb[0].mxu0 %v656
        %v789 = vpop.f32.mrb[0].mxu0
        %v790 = vadd.f32 %v622, %v789
        %v791 = vpop.f32.mrb[0].mxu0
        %792 = vmatprep.mubr.f32.mxu0 0.0
        %793 = vmatmul.mubr.f32.gmra.mrb[0].mxu0 %v659
        %v794 = vpop.f32.mrb[0].mxu0
        %v795 = vadd.f32 %v622, %v794
        %v796 = vpop.f32.mrb[0].mxu0
        %797 = vmatprep.mubr.f32.mxu0 0.0
        %798 = vmatmul.mubr.f32.gmra.mrb[0].mxu0 %v662
        %v799 = vpop.f32.mrb[0].mxu0
        %v800 = vadd.f32 %v622, %v799
        %v801 = vpop.f32.mrb[0].mxu0
        %802 = vmatprep.mubr.f32.mxu0 0.0
        %803 = vmatmul.mubr.f32.gmra.mrb[0].mxu0 %v665
        %v804 = vpop.f32.mrb[0].mxu0
        %v805 = vadd.f32 %v622, %v804
        %v806 = vpop.f32.mrb[0].mxu0
        %807 = vmatprep.mubr.f32.mxu0 0.0
        %808 = vmatmul.mubr.f32.gmra.mrb[0].mxu0 %v668
        %v809 = vpop.f32.mrb[0].mxu0
        %v810 = vadd.f32 %v622, %v809
        %v811 = vpop.f32.mrb[0].mxu0
        %812 = vmatprep.mubr.f32.mxu0 0.0
        %813 = vmatmul.mubr.f32.gmra.mrb[0].mxu0 %v671
        %v814 = vpop.f32.mrb[0].mxu0
        %v815 = vadd.f32 %v622, %v814
        %v816 = vpop.f32.mrb[0].mxu0
        %817 = vdwg.mxu0
        %v819 = vsel %vm624, %v441, 0
        %v822 = vsel %vm624, %v442, 0
        %v825 = vsel %vm624, %v443, 0
        %v828 = vsel %vm624, %v444, 0
        %v831 = vsel %vm624, %v445, 0
        %v834 = vsel %vm624, %v446, 0
        %v837 = vsel %vm624, %v447, 0
        %v840 = vsel %vm624, %v448, 0
        %v843 = vsel %vm624, %v449, 0
        %v846 = vsel %vm624, %v450, 0
        %v849 = vsel %vm624, %v451, 0
        %v852 = vsel %vm624, %v452, 0
        %v855 = vsel %vm624, %v453, 0
        %v858 = vsel %vm624, %v454, 0
        %v861 = vsel %vm624, %v455, 0
        %v864 = vsel %vm624, %v456, 0
        %866 = vmatprep.subr.mxu0 0.0
        %867 = vmatpush1.msra.mxu0 %v427
        %868 = vmatprep.subr.mxu0 0.0
        %869 = vmatpush1.msra.mxu0 %v428
        %870 = vmatprep.subr.mxu0 0.0
        %871 = vmatpush1.msra.mxu0 0.0
        %872 = vmatprep.subr.mxu0 0.0
        %873 = vmatpush1.msra.mxu0 0.0
        %874 = vmatprep.subr.mxu0 0.0
        %875 = vmatpush1.msra.mxu0 0.0
        %876 = vmatprep.subr.mxu0 0.0
        %877 = vmatpush1.msra.mxu0 0.0
        %878 = vmatprep.subr.mxu0 0.0
        %879 = vmatpush1.msra.mxu0 0.0
        %880 = vmatprep.subr.mxu0 0.0
        %881 = vmatpush1.msra.mxu0 0.0
        %882 = vmatprep.subr.mxu0 0.0
        %883 = vmatpush1.msra.mxu0 0.0
        %884 = vmatprep.subr.mxu0 0.0
        %885 = vmatpush1.msra.mxu0 0.0
        %886 = vmatprep.subr.mxu0 0.0
        %887 = vmatpush1.msra.mxu0 0.0
        %888 = vmatprep.subr.mxu0 0.0
        %889 = vmatpush1.msra.mxu0 0.0
        %890 = vmatprep.subr.mxu0 0.0
        %891 = vmatpush1.msra.mxu0 0.0
        %892 = vmatprep.subr.mxu0 0.0
        %893 = vmatpush1.msra.mxu0 0.0
        %894 = vmatprep.subr.mxu0 0.0
        %895 = vmatpush1.msra.mxu0 0.0
        %896 = vmatprep.subr.mxu0 0.0
        %897 = vmatpush1.msra.mxu0 0.0
        %898 = vmatprep.subr.mxu0 0.0
        %899 = vmatpush1.msra.mxu0 0.0
        %900 = vmatprep.subr.mxu0 0.0
        %901 = vmatpush1.msra.mxu0 0.0
        %902 = vmatprep.subr.mxu0 0.0
        %903 = vmatpush1.msra.mxu0 0.0
        %904 = vmatprep.subr.mxu0 0.0
        %905 = vmatpush1.msra.mxu0 0.0
        %906 = vmatprep.subr.mxu0 0.0
        %907 = vmatpush1.msra.mxu0 0.0
        %908 = vmatprep.subr.mxu0 0.0
        %909 = vmatpush1.msra.mxu0 0.0
        %910 = vmatprep.subr.mxu0 0.0
        %911 = vmatpush1.msra.mxu0 0.0
        %912 = vmatprep.subr.mxu0 0.0
        %913 = vmatpush1.msra.mxu0 0.0
        %914 = vmatprep.subr.mxu0 0.0
        %915 = vmatpush1.msra.mxu0 0.0
        %916 = vmatprep.subr.mxu0 0.0
        %917 = vmatpush1.msra.mxu0 0.0
        %918 = vmatprep.subr.mxu0 0.0
        %919 = vmatpush1.msra.mxu0 0.0
        %920 = vmatprep.subr.mxu0 0.0
        %921 = vmatpush1.msra.mxu0 0.0
        %922 = vmatprep.subr.mxu0 0.0
        %923 = vmatpush1.msra.mxu0 0.0
        %924 = vmatprep.subr.mxu0 0.0
        %925 = vmatpush1.msra.mxu0 0.0
        %926 = vmatprep.subr.mxu0 0.0
        %927 = vmatpush1.msra.mxu0 0.0
        %928 = vmatprep.subr.mxu0 0.0
        %929 = vmatpush1.msra.mxu0 0.0
        %930 = vmatprep.mubr.f32.mxu0 0.0
        %931 = vmatmul.mubr.f32.gmra.mrb[0].mxu0 %v819
        %v932 = vpop.f32.mrb[0].mxu0
        %v933 = vadd.f32 0.0, %v932
        %v934 = vpop.f32.mrb[0].mxu0
        %935 = vmatprep.mubr.f32.mxu0 0.0
        %936 = vmatmul.mubr.f32.gmra.mrb[0].mxu0 %v822
        %v937 = vpop.f32.mrb[0].mxu0
        %v938 = vadd.f32 0.0, %v937
        %v939 = vpop.f32.mrb[0].mxu0
        %940 = vmatprep.mubr.f32.mxu0 0.0
        %941 = vmatmul.mubr.f32.gmra.mrb[0].mxu0 %v825
        %v942 = vpop.f32.mrb[0].mxu0
        %v943 = vadd.f32 0.0, %v942
        %v944 = vpop.f32.mrb[0].mxu0
        %945 = vmatprep.mubr.f32.mxu0 0.0
        %946 = vmatmul.mubr.f32.gmra.mrb[0].mxu0 %v828
        %v947 = vpop.f32.mrb[0].mxu0
        %v948 = vadd.f32 0.0, %v947
        %v949 = vpop.f32.mrb[0].mxu0
        %950 = vmatprep.mubr.f32.mxu0 0.0
        %951 = vmatmul.mubr.f32.gmra.mrb[0].mxu0 %v831
        %v952 = vpop.f32.mrb[0].mxu0
        %v953 = vadd.f32 0.0, %v952
        %v954 = vpop.f32.mrb[0].mxu0
        %955 = vmatprep.mubr.f32.mxu0 0.0
        %956 = vmatmul.mubr.f32.gmra.mrb[0].mxu0 %v834
        %v957 = vpop.f32.mrb[0].mxu0
        %v958 = vadd.f32 0.0, %v957
        %v959 = vpop.f32.mrb[0].mxu0
        %960 = vmatprep.mubr.f32.mxu0 0.0
        %961 = vmatmul.mubr.f32.gmra.mrb[0].mxu0 %v837
        %v962 = vpop.f32.mrb[0].mxu0
        %v963 = vadd.f32 0.0, %v962
        %v964 = vpop.f32.mrb[0].mxu0
        %965 = vmatprep.mubr.f32.mxu0 0.0
        %966 = vmatmul.mubr.f32.gmra.mrb[0].mxu0 %v840
        %v967 = vpop.f32.mrb[0].mxu0
        %v968 = vadd.f32 0.0, %v967
        %v969 = vpop.f32.mrb[0].mxu0
        %970 = vmatprep.mubr.f32.mxu0 0.0
        %971 = vmatmul.mubr.f32.gmra.mrb[0].mxu0 %v843
        %v972 = vpop.f32.mrb[0].mxu0
        %v973 = vadd.f32 0.0, %v972
        %v974 = vpop.f32.mrb[0].mxu0
        %975 = vmatprep.mubr.f32.mxu0 0.0
        %976 = vmatmul.mubr.f32.gmra.mrb[0].mxu0 %v846
        %v977 = vpop.f32.mrb[0].mxu0
        %v978 = vadd.f32 0.0, %v977
        %v979 = vpop.f32.mrb[0].mxu0
        %980 = vmatprep.mubr.f32.mxu0 0.0
        %981 = vmatmul.mubr.f32.gmra.mrb[0].mxu0 %v849
        %v982 = vpop.f32.mrb[0].mxu0
        %v983 = vadd.f32 0.0, %v982
        %v984 = vpop.f32.mrb[0].mxu0
        %985 = vmatprep.mubr.f32.mxu0 0.0
        %986 = vmatmul.mubr.f32.gmra.mrb[0].mxu0 %v852
        %v987 = vpop.f32.mrb[0].mxu0
        %v988 = vadd.f32 0.0, %v987
        %v989 = vpop.f32.mrb[0].mxu0
        %990 = vmatprep.mubr.f32.mxu0 0.0
        %991 = vmatmul.mubr.f32.gmra.mrb[0].mxu0 %v855
        %v992 = vpop.f32.mrb[0].mxu0
        %v993 = vadd.f32 0.0, %v992
        %v994 = vpop.f32.mrb[0].mxu0
        %995 = vmatprep.mubr.f32.mxu0 0.0
        %996 = vmatmul.mubr.f32.gmra.mrb[0].mxu0 %v858
        %v997 = vpop.f32.mrb[0].mxu0
        %v998 = vadd.f32 0.0, %v997
        %v999 = vpop.f32.mrb[0].mxu0
        %1000 = vmatprep.mubr.f32.mxu0 0.0
        %1001 = vmatmul.mubr.f32.gmra.mrb[0].mxu0 %v861
        %v1002 = vpop.f32.mrb[0].mxu0
        %v1003 = vadd.f32 0.0, %v1002
        %v1004 = vpop.f32.mrb[0].mxu0
        %1005 = vmatprep.mubr.f32.mxu0 0.0
        %1006 = vmatmul.mubr.f32.gmra.mrb[0].mxu0 %v864
        %v1007 = vpop.f32.mrb[0].mxu0
        %v1008 = vadd.f32 0.0, %v1007
        %v1009 = vpop.f32.mrb[0].mxu0
        %1010 = vdwg.mxu0
        %v1011 = vadd.f32 %v740, %v933
        %v1012 = vadd.f32 %v745, %v938
        %v1013 = vadd.f32 %v750, %v943
        %v1014 = vadd.f32 %v755, %v948
        %v1015 = vadd.f32 %v760, %v953
        %v1016 = vadd.f32 %v765, %v958
        %v1017 = vadd.f32 %v770, %v963
        %v1018 = vadd.f32 %v775, %v968
        %v1019 = vadd.f32 %v780, %v973
        %v1020 = vadd.f32 %v785, %v978
        %v1021 = vadd.f32 %v790, %v983
        %v1022 = vadd.f32 %v795, %v988
        %v1023 = vadd.f32 %v800, %v993
        %v1024 = vadd.f32 %v805, %v998
        %v1025 = vadd.f32 %v810, %v1003
        %v1026 = vadd.f32 %v815, %v1008
        %v1027 = vmax.f32 %v1011, 0.0
        %v1028 = vmax.f32 %v1012, 0.0
        %v1029 = vmax.f32 %v1013, 0.0
        %v1030 = vmax.f32 %v1014, 0.0
        %v1031 = vmax.f32 %v1015, 0.0
        %v1032 = vmax.f32 %v1016, 0.0
        %v1033 = vmax.f32 %v1017, 0.0
        %v1034 = vmax.f32 %v1018, 0.0
        %v1035 = vmax.f32 %v1019, 0.0
        %v1036 = vmax.f32 %v1020, 0.0
        %v1037 = vmax.f32 %v1021, 0.0
        %v1038 = vmax.f32 %v1022, 0.0
        %v1039 = vmax.f32 %v1023, 0.0
        %v1040 = vmax.f32 %v1024, 0.0
        %v1041 = vmax.f32 %v1025, 0.0
        %v1042 = vmax.f32 %v1026, 0.0
        %v1044 = vlaneseq
        %v1045 = vshrl.u32 %v1044, 7
        %v1046 = vsub.s32 0, %v1045
        %v1047 = vrot.slane %v433, %v1046
        %vm1049 = vcmask 261120
        %v1051 = vsel %vm1049, %v1027, 0
        %v1054 = vsel %vm1049, %v1028, 0
        %v1057 = vsel %vm1049, %v1029, 0
        %v1060 = vsel %vm1049, %v1030, 0
        %v1063 = vsel %vm1049, %v1031, 0
        %v1066 = vsel %vm1049, %v1032, 0
        %v1069 = vsel %vm1049, %v1033, 0
        %v1072 = vsel %vm1049, %v1034, 0
        %v1075 = vsel %vm1049, %v1035, 0
        %v1078 = vsel %vm1049, %v1036, 0
        %v1081 = vsel %vm1049, %v1037, 0
        %v1084 = vsel %vm1049, %v1038, 0
        %v1087 = vsel %vm1049, %v1039, 0
        %v1090 = vsel %vm1049, %v1040, 0
        %v1093 = vsel %vm1049, %v1041, 0
        %v1096 = vsel %vm1049, %v1042, 0
        %1098 = vmatprep.subr.mxu0 0.0
        %1099 = vmatpush1.msra.mxu0 %v429
        %1100 = vmatprep.subr.mxu0 0.0
        %1101 = vmatpush1.msra.mxu0 %v430
        %1102 = vmatprep.subr.mxu0 0.0
        %1103 = vmatpush1.msra.mxu0 %v431
        %1104 = vmatprep.subr.mxu0 0.0
        %1105 = vmatpush1.msra.mxu0 %v432
        %1106 = vmatprep.subr.mxu0 0.0
        %1107 = vmatpush1.msra.mxu0 0.0
        %1108 = vmatprep.subr.mxu0 0.0
        %1109 = vmatpush1.msra.mxu0 0.0
        %1110 = vmatprep.subr.mxu0 0.0
        %1111 = vmatpush1.msra.mxu0 0.0
        %1112 = vmatprep.subr.mxu0 0.0
        %1113 = vmatpush1.msra.mxu0 0.0
        %1114 = vmatprep.subr.mxu0 0.0
        %1115 = vmatpush1.msra.mxu0 0.0
        %1116 = vmatprep.subr.mxu0 0.0
        %1117 = vmatpush1.msra.mxu0 0.0
        %1118 = vmatprep.subr.mxu0 0.0
        %1119 = vmatpush1.msra.mxu0 0.0
        %1120 = vmatprep.subr.mxu0 0.0
        %1121 = vmatpush1.msra.mxu0 0.0
        %1122 = vmatprep.subr.mxu0 0.0
        %1123 = vmatpush1.msra.mxu0 0.0
        %1124 = vmatprep.subr.mxu0 0.0
        %1125 = vmatpush1.msra.mxu0 0.0
        %1126 = vmatprep.subr.mxu0 0.0
        %1127 = vmatpush1.msra.mxu0 0.0
        %1128 = vmatprep.subr.mxu0 0.0
        %1129 = vmatpush1.msra.mxu0 0.0
        %1130 = vmatprep.subr.mxu0 0.0
        %1131 = vmatpush1.msra.mxu0 0.0
        %1132 = vmatprep.subr.mxu0 0.0
        %1133 = vmatpush1.msra.mxu0 0.0
        %1134 = vmatprep.subr.mxu0 0.0
        %1135 = vmatpush1.msra.mxu0 0.0
        %1136 = vmatprep.subr.mxu0 0.0
        %1137 = vmatpush1.msra.mxu0 0.0
        %1138 = vmatprep.subr.mxu0 0.0
        %1139 = vmatpush1.msra.mxu0 0.0
        %1140 = vmatprep.subr.mxu0 0.0
        %1141 = vmatpush1.msra.mxu0 0.0
        %1142 = vmatprep.subr.mxu0 0.0
        %1143 = vmatpush1.msra.mxu0 0.0
        %1144 = vmatprep.subr.mxu0 0.0
        %1145 = vmatpush1.msra.mxu0 0.0
        %1146 = vmatprep.subr.mxu0 0.0
        %1147 = vmatpush1.msra.mxu0 0.0
        %1148 = vmatprep.subr.mxu0 0.0
        %1149 = vmatpush1.msra.mxu0 0.0
        %1150 = vmatprep.subr.mxu0 0.0
        %1151 = vmatpush1.msra.mxu0 0.0
        %1152 = vmatprep.subr.mxu0 0.0
        %1153 = vmatpush1.msra.mxu0 0.0
        %1154 = vmatprep.subr.mxu0 0.0
        %1155 = vmatpush1.msra.mxu0 0.0
        %1156 = vmatprep.subr.mxu0 0.0
        %1157 = vmatpush1.msra.mxu0 0.0
        %1158 = vmatprep.subr.mxu0 0.0
        %1159 = vmatpush1.msra.mxu0 0.0
        %1160 = vmatprep.subr.mxu0 0.0
        %1161 = vmatpush1.msra.mxu0 0.0
        %1162 = vmatprep.mubr.f32.mxu0 0.0
        %1163 = vmatmul.mubr.f32.gmra.mrb[0].mxu0 %v1051
        %v1164 = vpop.f32.mrb[0].mxu0
        %v1165 = vadd.f32 %v1047, %v1164
        %v1166 = vpop.f32.mrb[0].mxu0
        %1167 = vmatprep.mubr.f32.mxu0 0.0
        %1168 = vmatmul.mubr.f32.gmra.mrb[0].mxu0 %v1054
        %v1169 = vpop.f32.mrb[0].mxu0
        %v1170 = vadd.f32 %v1047, %v1169
        %v1171 = vpop.f32.mrb[0].mxu0
        %1172 = vmatprep.mubr.f32.mxu0 0.0
        %1173 = vmatmul.mubr.f32.gmra.mrb[0].mxu0 %v1057
        %v1174 = vpop.f32.mrb[0].mxu0
        %v1175 = vadd.f32 %v1047, %v1174
        %v1176 = vpop.f32.mrb[0].mxu0
        %1177 = vmatprep.mubr.f32.mxu0 0.0
        %1178 = vmatmul.mubr.f32.gmra.mrb[0].mxu0 %v1060
        %v1179 = vpop.f32.mrb[0].mxu0
        %v1180 = vadd.f32 %v1047, %v1179
        %v1181 = vpop.f32.mrb[0].mxu0
        %1182 = vmatprep.mubr.f32.mxu0 0.0
        %1183 = vmatmul.mubr.f32.gmra.mrb[0].mxu0 %v1063
        %v1184 = vpop.f32.mrb[0].mxu0
        %v1185 = vadd.f32 %v1047, %v1184
        %v1186 = vpop.f32.mrb[0].mxu0
        %1187 = vmatprep.mubr.f32.mxu0 0.0
        %1188 = vmatmul.mubr.f32.gmra.mrb[0].mxu0 %v1066
        %v1189 = vpop.f32.mrb[0].mxu0
        %v1190 = vadd.f32 %v1047, %v1189
        %v1191 = vpop.f32.mrb[0].mxu0
        %1192 = vmatprep.mubr.f32.mxu0 0.0
        %1193 = vmatmul.mubr.f32.gmra.mrb[0].mxu0 %v1069
        %v1194 = vpop.f32.mrb[0].mxu0
        %v1195 = vadd.f32 %v1047, %v1194
        %v1196 = vpop.f32.mrb[0].mxu0
        %1197 = vmatprep.mubr.f32.mxu0 0.0
        %1198 = vmatmul.mubr.f32.gmra.mrb[0].mxu0 %v1072
        %v1199 = vpop.f32.mrb[0].mxu0
        %v1200 = vadd.f32 %v1047, %v1199
        %v1201 = vpop.f32.mrb[0].mxu0
        %1202 = vmatprep.mubr.f32.mxu0 0.0
        %1203 = vmatmul.mubr.f32.gmra.mrb[0].mxu0 %v1075
        %v1204 = vpop.f32.mrb[0].mxu0
        %v1205 = vadd.f32 %v1047, %v1204
        %v1206 = vpop.f32.mrb[0].mxu0
        %1207 = vmatprep.mubr.f32.mxu0 0.0
        %1208 = vmatmul.mubr.f32.gmra.mrb[0].mxu0 %v1078
        %v1209 = vpop.f32.mrb[0].mxu0
        %v1210 = vadd.f32 %v1047, %v1209
        %v1211 = vpop.f32.mrb[0].mxu0
        %1212 = vmatprep.mubr.f32.mxu0 0.0
        %1213 = vmatmul.mubr.f32.gmra.mrb[0].mxu0 %v1081
        %v1214 = vpop.f32.mrb[0].mxu0
        %v1215 = vadd.f32 %v1047, %v1214
        %v1216 = vpop.f32.mrb[0].mxu0
        %1217 = vmatprep.mubr.f32.mxu0 0.0
        %1218 = vmatmul.mubr.f32.gmra.mrb[0].mxu0 %v1084
        %v1219 = vpop.f32.mrb[0].mxu0
        %v1220 = vadd.f32 %v1047, %v1219
        %v1221 = vpop.f32.mrb[0].mxu0
        %1222 = vmatprep.mubr.f32.mxu0 0.0
        %1223 = vmatmul.mubr.f32.gmra.mrb[0].mxu0 %v1087
        %v1224 = vpop.f32.mrb[0].mxu0
        %v1225 = vadd.f32 %v1047, %v1224
        %v1226 = vpop.f32.mrb[0].mxu0
        %1227 = vmatprep.mubr.f32.mxu0 0.0
        %1228 = vmatmul.mubr.f32.gmra.mrb[0].mxu0 %v1090
        %v1229 = vpop.f32.mrb[0].mxu0
        %v1230 = vadd.f32 %v1047, %v1229
        %v1231 = vpop.f32.mrb[0].mxu0
        %1232 = vmatprep.mubr.f32.mxu0 0.0
        %1233 = vmatmul.mubr.f32.gmra.mrb[0].mxu0 %v1093
        %v1234 = vpop.f32.mrb[0].mxu0
        %v1235 = vadd.f32 %v1047, %v1234
        %v1236 = vpop.f32.mrb[0].mxu0
        %1237 = vmatprep.mubr.f32.mxu0 0.0
        %1238 = vmatmul.mubr.f32.gmra.mrb[0].mxu0 %v1096
        %v1239 = vpop.f32.mrb[0].mxu0
        %v1240 = vadd.f32 %v1047, %v1239
        %v1241 = vpop.f32.mrb[0].mxu0
        %1242 = vdwg.mxu0
        %vm1243 = vcmask 64512
        %1244 = vst.msk [vmem:[%s422] sm:$0xff] %vm1243, %v1165
        %1245 = vst.msk [vmem:[%s422 + $0x8] sm:$0xff] %vm1243, %v1170
        %1246 = vst.msk [vmem:[%s422 + $0x10] sm:$0xff] %vm1243, %v1175
        %1247 = vst.msk [vmem:[%s422 + $0x18] sm:$0xff] %vm1243, %v1180
        %1248 = vst.msk [vmem:[%s422 + $0x20] sm:$0xff] %vm1243, %v1185
        %1249 = vst.msk [vmem:[%s422 + $0x28] sm:$0xff] %vm1243, %v1190
        %1250 = vst.msk [vmem:[%s422 + $0x30] sm:$0xff] %vm1243, %v1195
        %1251 = vst.msk [vmem:[%s422 + $0x38] sm:$0xff] %vm1243, %v1200
        %1252 = vst.msk [vmem:[%s422 + $0x40] sm:$0xff] %vm1243, %v1205
        %1253 = vst.msk [vmem:[%s422 + $0x48] sm:$0xff] %vm1243, %v1210
        %1254 = vst.msk [vmem:[%s422 + $0x50] sm:$0xff] %vm1243, %v1215
        %1255 = vst.msk [vmem:[%s422 + $0x58] sm:$0xff] %vm1243, %v1220
        %1256 = vst.msk [vmem:[%s422 + $0x60] sm:$0xff] %vm1243, %v1225
        %1257 = vst.msk [vmem:[%s422 + $0x68] sm:$0xff] %vm1243, %v1230
        %1258 = vst.msk [vmem:[%s422 + $0x70] sm:$0xff] %vm1243, %v1235
        %1259 = vst.msk [vmem:[%s422 + $0x78] sm:$0xff] %vm1243, %v1240
        %v1260 = vsel %vm1243, %v1165, -inf
        %1261 = vmax.xlane.f32.xlu0 %v1260
        %v1262 = vpop.xlane.xlu0 %1261
        %v1263 = vsel %vm1243, %v1170, -inf
        %1264 = vmax.xlane.f32.xlu0 %v1263
        %v1265 = vpop.xlane.xlu0 %1264
        %v1266 = vsel %vm1243, %v1175, -inf
        %1267 = vmax.xlane.f32.xlu0 %v1266
        %v1268 = vpop.xlane.xlu0 %1267
        %v1269 = vsel %vm1243, %v1180, -inf
        %1270 = vmax.xlane.f32.xlu0 %v1269
        %v1271 = vpop.xlane.xlu0 %1270
        %v1272 = vsel %vm1243, %v1185, -inf
        %1273 = vmax.xlane.f32.xlu0 %v1272
        %v1274 = vpop.xlane.xlu0 %1273
        %v1275 = vsel %vm1243, %v1190, -inf
        %1276 = vmax.xlane.f32.xlu0 %v1275
        %v1277 = vpop.xlane.xlu0 %1276
        %v1278 = vsel %vm1243, %v1195, -inf
        %1279 = vmax.xlane.f32.xlu0 %v1278
        %v1280 = vpop.xlane.xlu0 %1279
        %v1281 = vsel %vm1243, %v1200, -inf
        %1282 = vmax.xlane.f32.xlu0 %v1281
        %v1283 = vpop.xlane.xlu0 %1282
        %v1284 = vsel %vm1243, %v1205, -inf
        %1285 = vmax.xlane.f32.xlu0 %v1284
        %v1286 = vpop.xlane.xlu0 %1285
        %v1287 = vsel %vm1243, %v1210, -inf
        %1288 = vmax.xlane.f32.xlu0 %v1287
        %v1289 = vpop.xlane.xlu0 %1288
        %v1290 = vsel %vm1243, %v1215, -inf
        %1291 = vmax.xlane.f32.xlu0 %v1290
        %v1292 = vpop.xlane.xlu0 %1291
        %v1293 = vsel %vm1243, %v1220, -inf
        %1294 = vmax.xlane.f32.xlu0 %v1293
        %v1295 = vpop.xlane.xlu0 %1294
        %v1296 = vsel %vm1243, %v1225, -inf
        %1297 = vmax.xlane.f32.xlu0 %v1296
        %v1298 = vpop.xlane.xlu0 %1297
        %v1299 = vsel %vm1243, %v1230, -inf
        %1300 = vmax.xlane.f32.xlu0 %v1299
        %v1301 = vpop.xlane.xlu0 %1300
        %v1302 = vsel %vm1243, %v1235, -inf
        %1303 = vmax.xlane.f32.xlu0 %v1302
        %v1304 = vpop.xlane.xlu0 %1303
        %v1305 = vsel %vm1243, %v1240, -inf
        %1306 = vmax.xlane.f32.xlu0 %v1305
        %v1307 = vpop.xlane.xlu0 %1306
        %v1308 = vsub.f32 %v1165, %v1262
        %v1309 = vsub.f32 %v1170, %v1265
        %v1310 = vsub.f32 %v1175, %v1268
        %v1311 = vsub.f32 %v1180, %v1271
        %v1312 = vsub.f32 %v1185, %v1274
        %v1313 = vsub.f32 %v1190, %v1277
        %v1314 = vsub.f32 %v1195, %v1280
        %v1315 = vsub.f32 %v1200, %v1283
        %v1316 = vsub.f32 %v1205, %v1286
        %v1317 = vsub.f32 %v1210, %v1289
        %v1318 = vsub.f32 %v1215, %v1292
        %v1319 = vsub.f32 %v1220, %v1295
        %v1320 = vsub.f32 %v1225, %v1298
        %v1321 = vsub.f32 %v1230, %v1301
        %v1322 = vsub.f32 %v1235, %v1304
        %v1323 = vsub.f32 %v1240, %v1307
        %v1324 = vmul.f32 %v1308, 1.442695
        %v1325 = vpow.pop %v1324
        %v1326 = vmul.f32 %v1309, 1.442695
        %v1327 = vpow.pop %v1326
        %v1328 = vmul.f32 %v1310, 1.442695
        %v1329 = vpow.pop %v1328
        %v1330 = vmul.f32 %v1311, 1.442695
        %v1331 = vpow.pop %v1330
        %v1332 = vmul.f32 %v1312, 1.442695
        %v1333 = vpow.pop %v1332
        %v1334 = vmul.f32 %v1313, 1.442695
        %v1335 = vpow.pop %v1334
        %v1336 = vmul.f32 %v1314, 1.442695
        %v1337 = vpow.pop %v1336
        %v1338 = vmul.f32 %v1315, 1.442695
        %v1339 = vpow.pop %v1338
        %v1340 = vmul.f32 %v1316, 1.442695
        %v1341 = vpow.pop %v1340
        %v1342 = vmul.f32 %v1317, 1.442695
        %v1343 = vpow.pop %v1342
        %v1344 = vmul.f32 %v1318, 1.442695
        %v1345 = vpow.pop %v1344
        %v1346 = vmul.f32 %v1319, 1.442695
        %v1347 = vpow.pop %v1346
        %v1348 = vmul.f32 %v1320, 1.442695
        %v1349 = vpow.pop %v1348
        %v1350 = vmul.f32 %v1321, 1.442695
        %v1351 = vpow.pop %v1350
        %v1352 = vmul.f32 %v1322, 1.442695
        %v1353 = vpow.pop %v1352
        %v1354 = vmul.f32 %v1323, 1.442695
        %v1355 = vpow.pop %v1354
        %v1356 = vsel %vm1243, %v1325, 0.0
        %1357 = vadd.xlane.f32.xlu0 %v1356
        %v1358 = vpop.xlane.xlu0 %1357
        %v1359 = vsel %vm1243, %v1327, 0.0
        %1360 = vadd.xlane.f32.xlu0 %v1359
        %v1361 = vpop.xlane.xlu0 %1360
        %v1362 = vsel %vm1243, %v1329, 0.0
        %1363 = vadd.xlane.f32.xlu0 %v1362
        %v1364 = vpop.xlane.xlu0 %1363
        %v1365 = vsel %vm1243, %v1331, 0.0
        %1366 = vadd.xlane.f32.xlu0 %v1365
        %v1367 = vpop.xlane.xlu0 %1366
        %v1368 = vsel %vm1243, %v1333, 0.0
        %1369 = vadd.xlane.f32.xlu0 %v1368
        %v1370 = vpop.xlane.xlu0 %1369
        %v1371 = vsel %vm1243, %v1335, 0.0
        %1372 = vadd.xlane.f32.xlu0 %v1371
        %v1373 = vpop.xlane.xlu0 %1372
        %v1374 = vsel %vm1243, %v1337, 0.0
        %1375 = vadd.xlane.f32.xlu0 %v1374
        %v1376 = vpop.xlane.xlu0 %1375
        %v1377 = vsel %vm1243, %v1339, 0.0
        %1378 = vadd.xlane.f32.xlu0 %v1377
        %v1379 = vpop.xlane.xlu0 %1378
        %v1380 = vsel %vm1243, %v1341, 0.0
        %1381 = vadd.xlane.f32.xlu0 %v1380
        %v1382 = vpop.xlane.xlu0 %1381
        %v1383 = vsel %vm1243, %v1343, 0.0
        %1384 = vadd.xlane.f32.xlu0 %v1383
        %v1385 = vpop.xlane.xlu0 %1384
        %v1386 = vsel %vm1243, %v1345, 0.0
        %1387 = vadd.xlane.f32.xlu0 %v1386
        %v1388 = vpop.xlane.xlu0 %1387
        %v1389 = vsel %vm1243, %v1347, 0.0
        %1390 = vadd.xlane.f32.xlu0 %v1389
        %v1391 = vpop.xlane.xlu0 %1390
        %v1392 = vsel %vm1243, %v1349, 0.0
        %1393 = vadd.xlane.f32.xlu0 %v1392
        %v1394 = vpop.xlane.xlu0 %1393
        %v1395 = vsel %vm1243, %v1351, 0.0
        %1396 = vadd.xlane.f32.xlu0 %v1395
        %v1397 = vpop.xlane.xlu0 %1396
        %v1398 = vsel %vm1243, %v1353, 0.0
        %1399 = vadd.xlane.f32.xlu0 %v1398
        %v1400 = vpop.xlane.xlu0 %1399
        %v1401 = vsel %vm1243, %v1355, 0.0
        %1402 = vadd.xlane.f32.xlu0 %v1401
        %v1403 = vpop.xlane.xlu0 %1402
        %v1404 = vrcp.pop %v1358
        %v1405 = vrcp.pop %v1361
        %v1406 = vrcp.pop %v1364
        %v1407 = vrcp.pop %v1367
        %v1408 = vrcp.pop %v1370
        %v1409 = vrcp.pop %v1373
        %v1410 = vrcp.pop %v1376
        %v1411 = vrcp.pop %v1379
        %v1412 = vrcp.pop %v1382
        %v1413 = vrcp.pop %v1385
        %v1414 = vrcp.pop %v1388
        %v1415 = vrcp.pop %v1391
        %v1416 = vrcp.pop %v1394
        %v1417 = vrcp.pop %v1397
        %v1418 = vrcp.pop %v1400
        %v1419 = vrcp.pop %v1403
        %v1420 = vmul.f32 %v1325, %v1404
        %v1421 = vmul.f32 %v1327, %v1405
        %v1422 = vmul.f32 %v1329, %v1406
        %v1423 = vmul.f32 %v1331, %v1407
        %v1424 = vmul.f32 %v1333, %v1408
        %v1425 = vmul.f32 %v1335, %v1409
        %v1426 = vmul.f32 %v1337, %v1410
        %v1427 = vmul.f32 %v1339, %v1411
        %v1428 = vmul.f32 %v1341, %v1412
        %v1429 = vmul.f32 %v1343, %v1413
        %v1430 = vmul.f32 %v1345, %v1414
        %v1431 = vmul.f32 %v1347, %v1415
        %v1432 = vmul.f32 %v1349, %v1416
        %v1433 = vmul.f32 %v1351, %v1417
        %v1434 = vmul.f32 %v1353, %v1418
        %v1435 = vmul.f32 %v1355, %v1419
        %1436 = vxpose.xlu0.b32.start [1/16] %v1420, 128
        %1437 = vxpose.xlu0.b32.cont [2/16] %v1421, 128
        %1438 = vxpose.xlu0.b32.cont [3/16] %v1422, 128
        %1439 = vxpose.xlu0.b32.cont [4/16] %v1423, 128
        %1440 = vxpose.xlu0.b32.cont [5/16] %v1424, 128
        %1441 = vxpose.xlu0.b32.cont [6/16] %v1425, 128
        %1442 = vxpose.xlu0.b32.cont [7/16] %v1426, 128
        %1443 = vxpose.xlu0.b32.cont [8/16] %v1427, 128
        %1444 = vxpose.xlu0.b32.cont [9/16] %v1428, 128
        %1445 = vxpose.xlu0.b32.cont [10/16] %v1429, 128
        %1446 = vxpose.xlu0.b32.cont [11/16] %v1430, 128
        %1447 = vxpose.xlu0.b32.cont [12/16] %v1431, 128
        %1448 = vxpose.xlu0.b32.cont [13/16] %v1432, 128
        %1449 = vxpose.xlu0.b32.cont [14/16] %v1433, 128
        %1450 = vxpose.xlu0.b32.cont [15/16] %v1434, 128
        %1451 = vxpose.xlu0.b32.end [16/16] %v1435, 128
        %v1452 = vpop.trf.xlu0
        %v1453 = vpop.trf.xlu0
        %v1454 = vpop.trf.xlu0
        %v1455 = vpop.trf.xlu0
        %v1456 = vpop.trf.xlu0
        %v1457 = vpop.trf.xlu0
        %v1458 = vpop.trf.xlu0
        %v1459 = vpop.trf.xlu0
        %v1460 = vpop.trf.xlu0
        %v1461 = vpop.trf.xlu0
        %v1462 = vpop.trf.xlu0
        %v1463 = vpop.trf.xlu0
        %v1464 = vpop.trf.xlu0
        %v1465 = vpop.trf.xlu0
        %v1466 = vpop.trf.xlu0
        %v1467 = vpop.trf.xlu0
        %1468 = vmatprep.subr.mxu0 0.0
        %1469 = vmatpush1.msra.mxu0 %v1027
        %1470 = vmatprep.subr.mxu0 0.0
        %1471 = vmatpush1.msra.mxu0 %v1028
        %1472 = vmatprep.subr.mxu0 0.0
        %1473 = vmatpush1.msra.mxu0 %v1029
        %1474 = vmatprep.subr.mxu0 0.0
        %1475 = vmatpush1.msra.mxu0 %v1030
        %1476 = vmatprep.subr.mxu0 0.0
        %1477 = vmatpush1.msra.mxu0 %v1031
        %1478 = vmatprep.subr.mxu0 0.0
        %1479 = vmatpush1.msra.mxu0 %v1032
        %1480 = vmatprep.subr.mxu0 0.0
        %1481 = vmatpush1.msra.mxu0 %v1033
        %1482 = vmatprep.subr.mxu0 0.0
        %1483 = vmatpush1.msra.mxu0 %v1034
        %1484 = vmatprep.subr.mxu0 0.0
        %1485 = vmatpush1.msra.mxu0 %v1035
        %1486 = vmatprep.subr.mxu0 0.0
        %1487 = vmatpush1.msra.mxu0 %v1036
        %1488 = vmatprep.subr.mxu0 0.0
        %1489 = vmatpush1.msra.mxu0 %v1037
        %1490 = vmatprep.subr.mxu0 0.0
        %1491 = vmatpush1.msra.mxu0 %v1038
        %1492 = vmatprep.subr.mxu0 0.0
        %1493 = vmatpush1.msra.mxu0 %v1039
        %1494 = vmatprep.subr.mxu0 0.0
        %1495 = vmatpush1.msra.mxu0 %v1040
        %1496 = vmatprep.subr.mxu0 0.0
        %1497 = vmatpush1.msra.mxu0 %v1041
        %1498 = vmatprep.subr.mxu0 0.0
        %1499 = vmatpush1.msra.mxu0 %v1042
        %1500 = vmatprep.subr.mxu0 0.0
        %1501 = vmatpush1.msra.mxu0 0.0
        %1502 = vmatprep.subr.mxu0 0.0
        %1503 = vmatpush1.msra.mxu0 0.0
        %1504 = vmatprep.subr.mxu0 0.0
        %1505 = vmatpush1.msra.mxu0 0.0
        %1506 = vmatprep.subr.mxu0 0.0
        %1507 = vmatpush1.msra.mxu0 0.0
        %1508 = vmatprep.subr.mxu0 0.0
        %1509 = vmatpush1.msra.mxu0 0.0
        %1510 = vmatprep.subr.mxu0 0.0
        %1511 = vmatpush1.msra.mxu0 0.0
        %1512 = vmatprep.subr.mxu0 0.0
        %1513 = vmatpush1.msra.mxu0 0.0
        %1514 = vmatprep.subr.mxu0 0.0
        %1515 = vmatpush1.msra.mxu0 0.0
        %1516 = vmatprep.subr.mxu0 0.0
        %1517 = vmatpush1.msra.mxu0 0.0
        %1518 = vmatprep.subr.mxu0 0.0
        %1519 = vmatpush1.msra.mxu0 0.0
        %1520 = vmatprep.subr.mxu0 0.0
        %1521 = vmatpush1.msra.mxu0 0.0
        %1522 = vmatprep.subr.mxu0 0.0
        %1523 = vmatpush1.msra.mxu0 0.0
        %1524 = vmatprep.subr.mxu0 0.0
        %1525 = vmatpush1.msra.mxu0 0.0
        %1526 = vmatprep.subr.mxu0 0.0
        %1527 = vmatpush1.msra.mxu0 0.0
        %1528 = vmatprep.subr.mxu0 0.0
        %1529 = vmatpush1.msra.mxu0 0.0
        %1530 = vmatprep.subr.mxu0 0.0
        %1531 = vmatpush1.msra.mxu0 0.0
        %1532 = vmatprep.mubr.f32.mxu0 0.0
        %1533 = vmatmul.mubr.f32.gmra.mrb[0].mxu0 %v1452
        %v1534 = vpop.f32.mrb[0].mxu0
        %v1535 = vadd.f32 0.0, %v1534
        %v1536 = vpop.f32.mrb[0].mxu0
        %1537 = vdwg.mxu0
        %1538 = vmatprep.subr.mxu0 0.0
        %1539 = vmatpush1.msra.mxu0 %v457
        %1540 = vmatprep.subr.mxu0 0.0
        %1541 = vmatpush1.msra.mxu0 %v458
        %1542 = vmatprep.subr.mxu0 0.0
        %1543 = vmatpush1.msra.mxu0 %v459
        %1544 = vmatprep.subr.mxu0 0.0
        %1545 = vmatpush1.msra.mxu0 %v460
        %1546 = vmatprep.subr.mxu0 0.0
        %1547 = vmatpush1.msra.mxu0 %v461
        %1548 = vmatprep.subr.mxu0 0.0
        %1549 = vmatpush1.msra.mxu0 %v462
        %1550 = vmatprep.subr.mxu0 0.0
        %1551 = vmatpush1.msra.mxu0 %v463
        %1552 = vmatprep.subr.mxu0 0.0
        %1553 = vmatpush1.msra.mxu0 %v464
        %1554 = vmatprep.subr.mxu0 0.0
        %1555 = vmatpush1.msra.mxu0 %v465
        %1556 = vmatprep.subr.mxu0 0.0
        %1557 = vmatpush1.msra.mxu0 %v466
        %1558 = vmatprep.subr.mxu0 0.0
        %1559 = vmatpush1.msra.mxu0 %v467
        %1560 = vmatprep.subr.mxu0 0.0
        %1561 = vmatpush1.msra.mxu0 %v468
        %1562 = vmatprep.subr.mxu0 0.0
        %1563 = vmatpush1.msra.mxu0 %v469
        %1564 = vmatprep.subr.mxu0 0.0
        %1565 = vmatpush1.msra.mxu0 %v470
        %1566 = vmatprep.subr.mxu0 0.0
        %1567 = vmatpush1.msra.mxu0 %v471
        %1568 = vmatprep.subr.mxu0 0.0
        %1569 = vmatpush1.msra.mxu0 %v472
        %1570 = vmatprep.subr.mxu0 0.0
        %1571 = vmatpush1.msra.mxu0 0.0
        %1572 = vmatprep.subr.mxu0 0.0
        %1573 = vmatpush1.msra.mxu0 0.0
        %1574 = vmatprep.subr.mxu0 0.0
        %1575 = vmatpush1.msra.mxu0 0.0
        %1576 = vmatprep.subr.mxu0 0.0
        %1577 = vmatpush1.msra.mxu0 0.0
        %1578 = vmatprep.subr.mxu0 0.0
        %1579 = vmatpush1.msra.mxu0 0.0
        %1580 = vmatprep.subr.mxu0 0.0
        %1581 = vmatpush1.msra.mxu0 0.0
        %1582 = vmatprep.subr.mxu0 0.0
        %1583 = vmatpush1.msra.mxu0 0.0
        %1584 = vmatprep.subr.mxu0 0.0
        %1585 = vmatpush1.msra.mxu0 0.0
        %1586 = vmatprep.subr.mxu0 0.0
        %1587 = vmatpush1.msra.mxu0 0.0
        %1588 = vmatprep.subr.mxu0 0.0
        %1589 = vmatpush1.msra.mxu0 0.0
        %1590 = vmatprep.subr.mxu0 0.0
        %1591 = vmatpush1.msra.mxu0 0.0
        %1592 = vmatprep.subr.mxu0 0.0
        %1593 = vmatpush1.msra.mxu0 0.0
        %1594 = vmatprep.subr.mxu0 0.0
        %1595 = vmatpush1.msra.mxu0 0.0
        %1596 = vmatprep.subr.mxu0 0.0
        %1597 = vmatpush1.msra.mxu0 0.0
        %1598 = vmatprep.subr.mxu0 0.0
        %1599 = vmatpush1.msra.mxu0 0.0
        %1600 = vmatprep.subr.mxu0 0.0
        %1601 = vmatpush1.msra.mxu0 0.0
        %1602 = vmatprep.mubr.f32.mxu0 0.0
        %1603 = vmatmul.mubr.f32.gmra.mrb[0].mxu0 %v1452
        %v1604 = vpop.f32.mrb[0].mxu0
        %v1605 = vadd.f32 0.0, %v1604
        %v1606 = vpop.f32.mrb[0].mxu0
        %1607 = vdwg.mxu0
        %1608 = vmatprep.subr.mxu0 0.0
        %1609 = vmatpush1.msra.mxu0 %v1420
        %1610 = vmatprep.subr.mxu0 0.0
        %1611 = vmatpush1.msra.mxu0 %v1421
        %1612 = vmatprep.subr.mxu0 0.0
        %1613 = vmatpush1.msra.mxu0 %v1422
        %1614 = vmatprep.subr.mxu0 0.0
        %1615 = vmatpush1.msra.mxu0 %v1423
        %1616 = vmatprep.subr.mxu0 0.0
        %1617 = vmatpush1.msra.mxu0 %v1424
        %1618 = vmatprep.subr.mxu0 0.0
        %1619 = vmatpush1.msra.mxu0 %v1425
        %1620 = vmatprep.subr.mxu0 0.0
        %1621 = vmatpush1.msra.mxu0 %v1426
        %1622 = vmatprep.subr.mxu0 0.0
        %1623 = vmatpush1.msra.mxu0 %v1427
        %1624 = vmatprep.subr.mxu0 0.0
        %1625 = vmatpush1.msra.mxu0 %v1428
        %1626 = vmatprep.subr.mxu0 0.0
        %1627 = vmatpush1.msra.mxu0 %v1429
        %1628 = vmatprep.subr.mxu0 0.0
        %1629 = vmatpush1.msra.mxu0 %v1430
        %1630 = vmatprep.subr.mxu0 0.0
        %1631 = vmatpush1.msra.mxu0 %v1431
        %1632 = vmatprep.subr.mxu0 0.0
        %1633 = vmatpush1.msra.mxu0 %v1432
        %1634 = vmatprep.subr.mxu0 0.0
        %1635 = vmatpush1.msra.mxu0 %v1433
        %1636 = vmatprep.subr.mxu0 0.0
        %1637 = vmatpush1.msra.mxu0 %v1434
        %1638 = vmatprep.subr.mxu0 0.0
        %1639 = vmatpush1.msra.mxu0 %v1435
        %1640 = vmatprep.subr.mxu0 0.0
        %1641 = vmatpush1.msra.mxu0 0.0
        %1642 = vmatprep.subr.mxu0 0.0
        %1643 = vmatpush1.msra.mxu0 0.0
        %1644 = vmatprep.subr.mxu0 0.0
        %1645 = vmatpush1.msra.mxu0 0.0
        %1646 = vmatprep.subr.mxu0 0.0
        %1647 = vmatpush1.msra.mxu0 0.0
        %1648 = vmatprep.subr.mxu0 0.0
        %1649 = vmatpush1.msra.mxu0 0.0
        %1650 = vmatprep.subr.mxu0 0.0
        %1651 = vmatpush1.msra.mxu0 0.0
        %1652 = vmatprep.subr.mxu0 0.0
        %1653 = vmatpush1.msra.mxu0 0.0
        %1654 = vmatprep.subr.mxu0 0.0
        %1655 = vmatpush1.msra.mxu0 0.0
        %1656 = vmatprep.subr.mxu0 0.0
        %1657 = vmatpush1.msra.mxu0 0.0
        %1658 = vmatprep.subr.mxu0 0.0
        %1659 = vmatpush1.msra.mxu0 0.0
        %1660 = vmatprep.subr.mxu0 0.0
        %1661 = vmatpush1.msra.mxu0 0.0
        %1662 = vmatprep.subr.mxu0 0.0
        %1663 = vmatpush1.msra.mxu0 0.0
        %1664 = vmatprep.subr.mxu0 0.0
        %1665 = vmatpush1.msra.mxu0 0.0
        %1666 = vmatprep.subr.mxu0 0.0
        %1667 = vmatpush1.msra.mxu0 0.0
        %1668 = vmatprep.subr.mxu0 0.0
        %1669 = vmatpush1.msra.mxu0 0.0
        %1670 = vmatprep.subr.mxu0 0.0
        %1671 = vmatpush1.msra.mxu0 0.0
        %1672 = vmatprep.mubr.f32.mxu0 0.0
        %1673 = vmatmul.mubr.f32.gmra.mrb[0].mxu0 %v1605
        %v1674 = vpop.f32.mrb[0].mxu0
        %v1675 = vadd.f32 0.0, %v1674
        %v1676 = vpop.f32.mrb[0].mxu0
        %1677 = vdwg.mxu0
        %1678 = vmatprep.subr.mxu0 0.0
        %1679 = vmatpush1.msra.mxu0 1.0
        %1680 = vmatprep.subr.mxu0 0.0
        %1681 = vmatpush1.msra.mxu0 1.0
        %1682 = vmatprep.subr.mxu0 0.0
        %1683 = vmatpush1.msra.mxu0 1.0
        %1684 = vmatprep.subr.mxu0 0.0
        %1685 = vmatpush1.msra.mxu0 1.0
        %1686 = vmatprep.subr.mxu0 0.0
        %1687 = vmatpush1.msra.mxu0 1.0
        %1688 = vmatprep.subr.mxu0 0.0
        %1689 = vmatpush1.msra.mxu0 1.0
        %1690 = vmatprep.subr.mxu0 0.0
        %1691 = vmatpush1.msra.mxu0 1.0
        %1692 = vmatprep.subr.mxu0 0.0
        %1693 = vmatpush1.msra.mxu0 1.0
        %1694 = vmatprep.subr.mxu0 0.0
        %1695 = vmatpush1.msra.mxu0 1.0
        %1696 = vmatprep.subr.mxu0 0.0
        %1697 = vmatpush1.msra.mxu0 1.0
        %1698 = vmatprep.subr.mxu0 0.0
        %1699 = vmatpush1.msra.mxu0 1.0
        %1700 = vmatprep.subr.mxu0 0.0
        %1701 = vmatpush1.msra.mxu0 1.0
        %1702 = vmatprep.subr.mxu0 0.0
        %1703 = vmatpush1.msra.mxu0 1.0
        %1704 = vmatprep.subr.mxu0 0.0
        %1705 = vmatpush1.msra.mxu0 1.0
        %1706 = vmatprep.subr.mxu0 0.0
        %1707 = vmatpush1.msra.mxu0 1.0
        %1708 = vmatprep.subr.mxu0 0.0
        %1709 = vmatpush1.msra.mxu0 1.0
        %1710 = vmatprep.subr.mxu0 0.0
        %1711 = vmatpush1.msra.mxu0 0.0
        %1712 = vmatprep.subr.mxu0 0.0
        %1713 = vmatpush1.msra.mxu0 0.0
        %1714 = vmatprep.subr.mxu0 0.0
        %1715 = vmatpush1.msra.mxu0 0.0
        %1716 = vmatprep.subr.mxu0 0.0
        %1717 = vmatpush1.msra.mxu0 0.0
        %1718 = vmatprep.subr.mxu0 0.0
        %1719 = vmatpush1.msra.mxu0 0.0
        %1720 = vmatprep.subr.mxu0 0.0
        %1721 = vmatpush1.msra.mxu0 0.0
        %1722 = vmatprep.subr.mxu0 0.0
        %1723 = vmatpush1.msra.mxu0 0.0
        %1724 = vmatprep.subr.mxu0 0.0
        %1725 = vmatpush1.msra.mxu0 0.0
        %1726 = vmatprep.subr.mxu0 0.0
        %1727 = vmatpush1.msra.mxu0 0.0
        %1728 = vmatprep.subr.mxu0 0.0
        %1729 = vmatpush1.msra.mxu0 0.0
        %1730 = vmatprep.subr.mxu0 0.0
        %1731 = vmatpush1.msra.mxu0 0.0
        %1732 = vmatprep.subr.mxu0 0.0
        %1733 = vmatpush1.msra.mxu0 0.0
        %1734 = vmatprep.subr.mxu0 0.0
        %1735 = vmatpush1.msra.mxu0 0.0
        %1736 = vmatprep.subr.mxu0 0.0
        %1737 = vmatpush1.msra.mxu0 0.0
        %1738 = vmatprep.subr.mxu0 0.0
        %1739 = vmatpush1.msra.mxu0 0.0
        %1740 = vmatprep.subr.mxu0 0.0
        %1741 = vmatpush1.msra.mxu0 0.0
        %1742 = vmatprep.mubr.f32.mxu0 0.0
        %1743 = vmatmul.mubr.f32.gmra.mrb[0].mxu0 %v457
        %v1744 = vpop.f32.mrb[0].mxu0
        %v1745 = vadd.f32 0.0, %v1744
        %v1746 = vpop.f32.mrb[0].mxu0
        %1747 = vmatprep.mubr.f32.mxu0 0.0
        %1748 = vmatmul.mubr.f32.gmra.mrb[0].mxu0 %v458
        %v1749 = vpop.f32.mrb[0].mxu0
        %v1750 = vadd.f32 0.0, %v1749
        %v1751 = vpop.f32.mrb[0].mxu0
        %1752 = vmatprep.mubr.f32.mxu0 0.0
        %1753 = vmatmul.mubr.f32.gmra.mrb[0].mxu0 %v459
        %v1754 = vpop.f32.mrb[0].mxu0
        %v1755 = vadd.f32 0.0, %v1754
        %v1756 = vpop.f32.mrb[0].mxu0
        %1757 = vmatprep.mubr.f32.mxu0 0.0
        %1758 = vmatmul.mubr.f32.gmra.mrb[0].mxu0 %v460
        %v1759 = vpop.f32.mrb[0].mxu0
        %v1760 = vadd.f32 0.0, %v1759
        %v1761 = vpop.f32.mrb[0].mxu0
        %1762 = vmatprep.mubr.f32.mxu0 0.0
        %1763 = vmatmul.mubr.f32.gmra.mrb[0].mxu0 %v461
        %v1764 = vpop.f32.mrb[0].mxu0
        %v1765 = vadd.f32 0.0, %v1764
        %v1766 = vpop.f32.mrb[0].mxu0
        %1767 = vmatprep.mubr.f32.mxu0 0.0
        %1768 = vmatmul.mubr.f32.gmra.mrb[0].mxu0 %v462
        %v1769 = vpop.f32.mrb[0].mxu0
        %v1770 = vadd.f32 0.0, %v1769
        %v1771 = vpop.f32.mrb[0].mxu0
        %1772 = vmatprep.mubr.f32.mxu0 0.0
        %1773 = vmatmul.mubr.f32.gmra.mrb[0].mxu0 %v463
        %v1774 = vpop.f32.mrb[0].mxu0
        %v1775 = vadd.f32 0.0, %v1774
        %v1776 = vpop.f32.mrb[0].mxu0
        %1777 = vmatprep.mubr.f32.mxu0 0.0
        %1778 = vmatmul.mubr.f32.gmra.mrb[0].mxu0 %v464
        %v1779 = vpop.f32.mrb[0].mxu0
        %v1780 = vadd.f32 0.0, %v1779
        %v1781 = vpop.f32.mrb[0].mxu0
        %1782 = vmatprep.mubr.f32.mxu0 0.0
        %1783 = vmatmul.mubr.f32.gmra.mrb[0].mxu0 %v465
        %v1784 = vpop.f32.mrb[0].mxu0
        %v1785 = vadd.f32 0.0, %v1784
        %v1786 = vpop.f32.mrb[0].mxu0
        %1787 = vmatprep.mubr.f32.mxu0 0.0
        %1788 = vmatmul.mubr.f32.gmra.mrb[0].mxu0 %v466
        %v1789 = vpop.f32.mrb[0].mxu0
        %v1790 = vadd.f32 0.0, %v1789
        %v1791 = vpop.f32.mrb[0].mxu0
        %1792 = vmatprep.mubr.f32.mxu0 0.0
        %1793 = vmatmul.mubr.f32.gmra.mrb[0].mxu0 %v467
        %v1794 = vpop.f32.mrb[0].mxu0
        %v1795 = vadd.f32 0.0, %v1794
        %v1796 = vpop.f32.mrb[0].mxu0
        %1797 = vmatprep.mubr.f32.mxu0 0.0
        %1798 = vmatmul.mubr.f32.gmra.mrb[0].mxu0 %v468
        %v1799 = vpop.f32.mrb[0].mxu0
        %v1800 = vadd.f32 0.0, %v1799
        %v1801 = vpop.f32.mrb[0].mxu0
        %1802 = vmatprep.mubr.f32.mxu0 0.0
        %1803 = vmatmul.mubr.f32.gmra.mrb[0].mxu0 %v469
        %v1804 = vpop.f32.mrb[0].mxu0
        %v1805 = vadd.f32 0.0, %v1804
        %v1806 = vpop.f32.mrb[0].mxu0
        %1807 = vmatprep.mubr.f32.mxu0 0.0
        %1808 = vmatmul.mubr.f32.gmra.mrb[0].mxu0 %v470
        %v1809 = vpop.f32.mrb[0].mxu0
        %v1810 = vadd.f32 0.0, %v1809
        %v1811 = vpop.f32.mrb[0].mxu0
        %1812 = vmatprep.mubr.f32.mxu0 0.0
        %1813 = vmatmul.mubr.f32.gmra.mrb[0].mxu0 %v471
        %v1814 = vpop.f32.mrb[0].mxu0
        %v1815 = vadd.f32 0.0, %v1814
        %v1816 = vpop.f32.mrb[0].mxu0
        %1817 = vmatprep.mubr.f32.mxu0 0.0
        %1818 = vmatmul.mubr.f32.gmra.mrb[0].mxu0 %v472
        %v1819 = vpop.f32.mrb[0].mxu0
        %v1820 = vadd.f32 0.0, %v1819
        %v1821 = vpop.f32.mrb[0].mxu0
        %1822 = vdwg.mxu0
        %v1823 = vmul.f32 %v1675, %v440
        %v1824 = vsel %vm1243, %v1823, 0.0
        %1825 = vadd.xlane.f32.xlu0 %v1824
        %v1826 = vpop.xlane.xlu0 %1825
        %v1827 = vrot.slane %v1826, 4
        %v1828 = vadd.f32 %v1826, %v1827
        %v1829 = vrot.slane %v1828, 2
        %v1830 = vadd.f32 %v1828, %v1829
        %v1831 = vrot.slane %v1830, 1
        %v1832 = vadd.f32 %v1830, %v1831
        %s1833 = vtos %v1832
        %v1834 = vstv %s1833
        %v1835 = vmul.f32 %v1420, %v1420
        %v1836 = vmul.f32 %v1421, %v1421
        %v1837 = vmul.f32 %v1422, %v1422
        %v1838 = vmul.f32 %v1423, %v1423
        %v1839 = vmul.f32 %v1424, %v1424
        %v1840 = vmul.f32 %v1425, %v1425
        %v1841 = vmul.f32 %v1426, %v1426
        %v1842 = vmul.f32 %v1427, %v1427
        %v1843 = vmul.f32 %v1428, %v1428
        %v1844 = vmul.f32 %v1429, %v1429
        %v1845 = vmul.f32 %v1430, %v1430
        %v1846 = vmul.f32 %v1431, %v1431
        %v1847 = vmul.f32 %v1432, %v1432
        %v1848 = vmul.f32 %v1433, %v1433
        %v1849 = vmul.f32 %v1434, %v1434
        %v1850 = vmul.f32 %v1435, %v1435
        %1852 = vset.pattern.permute.xlu0 0
        %1853 = vperm.xlu0 %1852, %v1745
        %v1854 = vpop.permute.xlu0 %1853
        %1857 = vset.pattern.permute.xlu0 0
        %1858 = vperm.xlu0 %1857, %v1750
        %v1859 = vpop.permute.xlu0 %1858
        %1862 = vset.pattern.permute.xlu0 0
        %1863 = vperm.xlu0 %1862, %v1755
        %v1864 = vpop.permute.xlu0 %1863
        %1867 = vset.pattern.permute.xlu0 0
        %1868 = vperm.xlu0 %1867, %v1760
        %v1869 = vpop.permute.xlu0 %1868
        %1872 = vset.pattern.permute.xlu0 0
        %1873 = vperm.xlu0 %1872, %v1765
        %v1874 = vpop.permute.xlu0 %1873
        %1877 = vset.pattern.permute.xlu0 0
        %1878 = vperm.xlu0 %1877, %v1770
        %v1879 = vpop.permute.xlu0 %1878
        %1882 = vset.pattern.permute.xlu0 0
        %1883 = vperm.xlu0 %1882, %v1775
        %v1884 = vpop.permute.xlu0 %1883
        %1887 = vset.pattern.permute.xlu0 0
        %1888 = vperm.xlu0 %1887, %v1780
        %v1889 = vpop.permute.xlu0 %1888
        %1892 = vset.pattern.permute.xlu0 0
        %1893 = vperm.xlu0 %1892, %v1785
        %v1894 = vpop.permute.xlu0 %1893
        %1897 = vset.pattern.permute.xlu0 0
        %1898 = vperm.xlu0 %1897, %v1790
        %v1899 = vpop.permute.xlu0 %1898
        %1902 = vset.pattern.permute.xlu0 0
        %1903 = vperm.xlu0 %1902, %v1795
        %v1904 = vpop.permute.xlu0 %1903
        %1907 = vset.pattern.permute.xlu0 0
        %1908 = vperm.xlu0 %1907, %v1800
        %v1909 = vpop.permute.xlu0 %1908
        %1912 = vset.pattern.permute.xlu0 0
        %1913 = vperm.xlu0 %1912, %v1805
        %v1914 = vpop.permute.xlu0 %1913
        %1917 = vset.pattern.permute.xlu0 0
        %1918 = vperm.xlu0 %1917, %v1810
        %v1919 = vpop.permute.xlu0 %1918
        %1922 = vset.pattern.permute.xlu0 0
        %1923 = vperm.xlu0 %1922, %v1815
        %v1924 = vpop.permute.xlu0 %1923
        %1927 = vset.pattern.permute.xlu0 0
        %1928 = vperm.xlu0 %1927, %v1820
        %v1929 = vpop.permute.xlu0 %1928
        %v1931 = vmul.f32 %v1854, %v1835
        %v1932 = vmul.f32 %v1859, %v1836
        %v1933 = vmul.f32 %v1864, %v1837
        %v1934 = vmul.f32 %v1869, %v1838
        %v1935 = vmul.f32 %v1874, %v1839
        %v1936 = vmul.f32 %v1879, %v1840
        %v1937 = vmul.f32 %v1884, %v1841
        %v1938 = vmul.f32 %v1889, %v1842
        %v1939 = vmul.f32 %v1894, %v1843
        %v1940 = vmul.f32 %v1899, %v1844
        %v1941 = vmul.f32 %v1904, %v1845
        %v1942 = vmul.f32 %v1909, %v1846
        %v1943 = vmul.f32 %v1914, %v1847
        %v1944 = vmul.f32 %v1919, %v1848
        %v1945 = vmul.f32 %v1924, %v1849
        %v1946 = vmul.f32 %v1929, %v1850
        %v1947 = vsel %vm1243, %v1931, 0.0
        %v1948 = vsel %vm1243, %v1932, 0.0
        %v1949 = vadd.f32 %v1947, %v1948
        %v1950 = vsel %vm1243, %v1933, 0.0
        %v1951 = vadd.f32 %v1949, %v1950
        %v1952 = vsel %vm1243, %v1934, 0.0
        %v1953 = vadd.f32 %v1951, %v1952
        %v1954 = vsel %vm1243, %v1935, 0.0
        %v1955 = vadd.f32 %v1953, %v1954
        %v1956 = vsel %vm1243, %v1936, 0.0
        %v1957 = vadd.f32 %v1955, %v1956
        %v1958 = vsel %vm1243, %v1937, 0.0
        %v1959 = vadd.f32 %v1957, %v1958
        %v1960 = vsel %vm1243, %v1938, 0.0
        %v1961 = vadd.f32 %v1959, %v1960
        %v1962 = vsel %vm1243, %v1939, 0.0
        %v1963 = vadd.f32 %v1961, %v1962
        %v1964 = vsel %vm1243, %v1940, 0.0
        %v1965 = vadd.f32 %v1963, %v1964
        %v1966 = vsel %vm1243, %v1941, 0.0
        %v1967 = vadd.f32 %v1965, %v1966
        %v1968 = vsel %vm1243, %v1942, 0.0
        %v1969 = vadd.f32 %v1967, %v1968
        %v1970 = vsel %vm1243, %v1943, 0.0
        %v1971 = vadd.f32 %v1969, %v1970
        %v1972 = vsel %vm1243, %v1944, 0.0
        %v1973 = vadd.f32 %v1971, %v1972
        %v1974 = vsel %vm1243, %v1945, 0.0
        %v1975 = vadd.f32 %v1973, %v1974
        %v1976 = vsel %vm1243, %v1946, 0.0
        %v1977 = vadd.f32 %v1975, %v1976
        %1978 = vadd.xlane.f32.xlu0 %v1977
        %v1979 = vpop.xlane.xlu0 %1978
        %v1980 = vrot.slane %v1979, 4
        %v1981 = vadd.f32 %v1979, %v1980
        %v1982 = vrot.slane %v1981, 2
        %v1983 = vadd.f32 %v1981, %v1982
        %v1984 = vrot.slane %v1983, 1
        %v1985 = vadd.f32 %v1983, %v1984
        %s1986 = vtos %v1985
        %v1987 = vstv %s1986
        %v1988 = vrcp.pop %v1987
        %v1989 = vmul.f32 %v1834, %v1988
        %v1990 = vsub.f32 0.0, %v1989
        %1991 = vmatprep.subr.mxu0 0.0
        %1992 = vmatpush1.msra.mxu0 %v1420
        %1993 = vmatprep.subr.mxu0 0.0
        %1994 = vmatpush1.msra.mxu0 %v1421
        %1995 = vmatprep.subr.mxu0 0.0
        %1996 = vmatpush1.msra.mxu0 %v1422
        %1997 = vmatprep.subr.mxu0 0.0
        %1998 = vmatpush1.msra.mxu0 %v1423
        %1999 = vmatprep.subr.mxu0 0.0
        %2000 = vmatpush1.msra.mxu0 %v1424
        %2001 = vmatprep.subr.mxu0 0.0
        %2002 = vmatpush1.msra.mxu0 %v1425
        %2003 = vmatprep.subr.mxu0 0.0
        %2004 = vmatpush1.msra.mxu0 %v1426
        %2005 = vmatprep.subr.mxu0 0.0
        %2006 = vmatpush1.msra.mxu0 %v1427
        %2007 = vmatprep.subr.mxu0 0.0
        %2008 = vmatpush1.msra.mxu0 %v1428
        %2009 = vmatprep.subr.mxu0 0.0
        %2010 = vmatpush1.msra.mxu0 %v1429
        %2011 = vmatprep.subr.mxu0 0.0
        %2012 = vmatpush1.msra.mxu0 %v1430
        %2013 = vmatprep.subr.mxu0 0.0
        %2014 = vmatpush1.msra.mxu0 %v1431
        %2015 = vmatprep.subr.mxu0 0.0
        %2016 = vmatpush1.msra.mxu0 %v1432
        %2017 = vmatprep.subr.mxu0 0.0
        %2018 = vmatpush1.msra.mxu0 %v1433
        %2019 = vmatprep.subr.mxu0 0.0
        %2020 = vmatpush1.msra.mxu0 %v1434
        %2021 = vmatprep.subr.mxu0 0.0
        %2022 = vmatpush1.msra.mxu0 %v1435
        %2023 = vmatprep.subr.mxu0 0.0
        %2024 = vmatpush1.msra.mxu0 0.0
        %2025 = vmatprep.subr.mxu0 0.0
        %2026 = vmatpush1.msra.mxu0 0.0
        %2027 = vmatprep.subr.mxu0 0.0
        %2028 = vmatpush1.msra.mxu0 0.0
        %2029 = vmatprep.subr.mxu0 0.0
        %2030 = vmatpush1.msra.mxu0 0.0
        %2031 = vmatprep.subr.mxu0 0.0
        %2032 = vmatpush1.msra.mxu0 0.0
        %2033 = vmatprep.subr.mxu0 0.0
        %2034 = vmatpush1.msra.mxu0 0.0
        %2035 = vmatprep.subr.mxu0 0.0
        %2036 = vmatpush1.msra.mxu0 0.0
        %2037 = vmatprep.subr.mxu0 0.0
        %2038 = vmatpush1.msra.mxu0 0.0
        %2039 = vmatprep.subr.mxu0 0.0
        %2040 = vmatpush1.msra.mxu0 0.0
        %2041 = vmatprep.subr.mxu0 0.0
        %2042 = vmatpush1.msra.mxu0 0.0
        %2043 = vmatprep.subr.mxu0 0.0
        %2044 = vmatpush1.msra.mxu0 0.0
        %2045 = vmatprep.subr.mxu0 0.0
        %2046 = vmatpush1.msra.mxu0 0.0
        %2047 = vmatprep.subr.mxu0 0.0
        %2048 = vmatpush1.msra.mxu0 0.0
        %2049 = vmatprep.subr.mxu0 0.0
        %2050 = vmatpush1.msra.mxu0 0.0
        %2051 = vmatprep.subr.mxu0 0.0
        %2052 = vmatpush1.msra.mxu0 0.0
        %2053 = vmatprep.subr.mxu0 0.0
        %2054 = vmatpush1.msra.mxu0 0.0
        %2055 = vmatprep.mubr.f32.mxu0 0.0
        %2056 = vmatmul.mubr.f32.gmra.mrb[0].mxu0 %v1452
        %v2057 = vpop.f32.mrb[0].mxu0
        %v2058 = vadd.f32 0.0, %v2057
        %v2059 = vpop.f32.mrb[0].mxu0
        %2060 = vdwg.mxu0
        %v2061 = vmul.f32 %v2058, %v2058
        %v2062 = vsel %vm1243, %v2061, 0.0
        %2063 = vadd.xlane.f32.xlu0 %v2062
        %v2064 = vpop.xlane.xlu0 %2063
        %v2065 = vrot.slane %v2064, 4
        %v2066 = vadd.f32 %v2064, %v2065
        %v2067 = vrot.slane %v2066, 2
        %v2068 = vadd.f32 %v2066, %v2067
        %v2069 = vrot.slane %v2068, 1
        %v2070 = vadd.f32 %v2068, %v2069
        %s2071 = vtos %v2070
        %v2072 = vstv %s2071
        %v2073 = vrsqrt.pop %v2072
        %v2074 = vmul.f32 %v2072, %v2073
        %vm2075 = vcmp.eq.f32.partialorder %v2072, inf
        %v2076 = vsel %vm2075, %v2072, %v2074
        %vm2077 = vcmp.eq.f32.partialorder %v2072, 0.0
        %v2078 = vand.u32 %v2072, 2147483648
        %v2079 = vsel %vm2077, %v2078, %v2076
        %v2080 = vrcp.pop %v2079
        %v2081 = vmul.f32 %v2058, %v2080
        %v2082 = vmul.f32 %v440, 0.35355338
        %v2083 = vsub.f32 %v2081, %v2082
        %v2084 = vmul.f32 %v2083, %v2083
        %v2085 = vsel %vm1243, %v2084, 0.0
        %2086 = vadd.xlane.f32.xlu0 %v2085
        %v2087 = vpop.xlane.xlu0 %2086
        %v2088 = vrot.slane %v2087, 4
        %v2089 = vadd.f32 %v2087, %v2088
        %v2090 = vrot.slane %v2089, 2
        %v2091 = vadd.f32 %v2089, %v2090
        %v2092 = vrot.slane %v2091, 1
        %v2093 = vadd.f32 %v2091, %v2092
        %s2094 = vtos %v2093
        %v2095 = vstv %s2094
        %v2096 = vrsqrt.pop %v2095
        %v2097 = vmul.f32 %v2095, %v2096
        %vm2098 = vcmp.eq.f32.partialorder %v2095, inf
        %v2099 = vsel %vm2098, %v2095, %v2097
        %vm2100 = vcmp.eq.f32.partialorder %v2095, 0.0
        %v2101 = vand.u32 %v2095, 2147483648
        %v2102 = vsel %vm2100, %v2101, %v2099
        %vm2103 = vcmp.eq.s32.totalorder %v437, 0
        %vm2104 = vcmp.eq.s32.totalorder %v437, 1
        %v2105 = vsel %vm2104, %v2102, 0.0
        %v2106 = vsel %vm2103, %v1990, %v2105
        %2107 = vst [vmem:[%s391] sm:$0x1] %v2106
        %v2108 = vsub.f32 1.0, %v440
        %v2109 = vmul.f32 %v1675, %v2108
        %v2110 = vsel %vm1243, %v2109, 0.0
        %2111 = vadd.xlane.f32.xlu0 %v2110
        %v2112 = vpop.xlane.xlu0 %2111
        %v2114 = vsel %vm1243, 1.0, 0
        %v2117 = vsel %vm1243, %v2109, 0
        %2119 = vmatprep.subr.mxu0 0.0
        %2120 = vmatpush1.xpose.msra.mxu0 %v2117
        %2121 = vmatprep.subr.mxu0 0.0
        %2122 = vmatpush1.xpose.msra.mxu0 0.0
        %2123 = vmatprep.subr.mxu0 0.0
        %2124 = vmatpush1.xpose.msra.mxu0 0.0
        %2125 = vmatprep.subr.mxu0 0.0
        %2126 = vmatpush1.xpose.msra.mxu0 0.0
        %2127 = vmatprep.subr.mxu0 0.0
        %2128 = vmatpush1.xpose.msra.mxu0 0.0
        %2129 = vmatprep.subr.mxu0 0.0
        %2130 = vmatpush1.xpose.msra.mxu0 0.0
        %2131 = vmatprep.subr.mxu0 0.0
        %2132 = vmatpush1.xpose.msra.mxu0 0.0
        %2133 = vmatprep.subr.mxu0 0.0
        %2134 = vmatpush1.xpose.msra.mxu0 0.0
        %2135 = vmatprep.subr.mxu0 0.0
        %2136 = vmatpush1.xpose.msra.mxu0 0.0
        %2137 = vmatprep.subr.mxu0 0.0
        %2138 = vmatpush1.xpose.msra.mxu0 0.0
        %2139 = vmatprep.subr.mxu0 0.0
        %2140 = vmatpush1.xpose.msra.mxu0 0.0
        %2141 = vmatprep.subr.mxu0 0.0
        %2142 = vmatpush1.xpose.msra.mxu0 0.0
        %2143 = vmatprep.subr.mxu0 0.0
        %2144 = vmatpush1.xpose.msra.mxu0 0.0
        %2145 = vmatprep.subr.mxu0 0.0
        %2146 = vmatpush1.xpose.msra.mxu0 0.0
        %2147 = vmatprep.subr.mxu0 0.0
        %2148 = vmatpush1.xpose.msra.mxu0 0.0
        %2149 = vmatprep.subr.mxu0 0.0
        %2150 = vmatpush1.xpose.msra.mxu0 0.0
        %2151 = vmatprep.subr.mxu0 0.0
        %2152 = vmatpush1.xpose.msra.mxu0 0.0
        %2153 = vmatprep.subr.mxu0 0.0
        %2154 = vmatpush1.xpose.msra.mxu0 0.0
        %2155 = vmatprep.subr.mxu0 0.0
        %2156 = vmatpush1.xpose.msra.mxu0 0.0
        %2157 = vmatprep.subr.mxu0 0.0
        %2158 = vmatpush1.xpose.msra.mxu0 0.0
        %2159 = vmatprep.subr.mxu0 0.0
        %2160 = vmatpush1.xpose.msra.mxu0 0.0
        %2161 = vmatprep.subr.mxu0 0.0
        %2162 = vmatpush1.xpose.msra.mxu0 0.0
        %2163 = vmatprep.subr.mxu0 0.0
        %2164 = vmatpush1.xpose.msra.mxu0 0.0
        %2165 = vmatprep.subr.mxu0 0.0
        %2166 = vmatpush1.xpose.msra.mxu0 0.0
        %2167 = vmatprep.subr.mxu0 0.0
        %2168 = vmatpush1.xpose.msra.mxu0 0.0
        %2169 = vmatprep.subr.mxu0 0.0
        %2170 = vmatpush1.xpose.msra.mxu0 0.0
        %2171 = vmatprep.subr.mxu0 0.0
        %2172 = vmatpush1.xpose.msra.mxu0 0.0
        %2173 = vmatprep.subr.mxu0 0.0
        %2174 = vmatpush1.xpose.msra.mxu0 0.0
        %2175 = vmatprep.subr.mxu0 0.0
        %2176 = vmatpush1.xpose.msra.mxu0 0.0
        %2177 = vmatprep.subr.mxu0 0.0
        %2178 = vmatpush1.xpose.msra.mxu0 0.0
        %2179 = vmatprep.subr.mxu0 0.0
        %2180 = vmatpush1.xpose.msra.mxu0 0.0
        %2181 = vmatprep.subr.mxu0 0.0
        %2182 = vmatpush1.xpose.msra.mxu0 0.0
        %2183 = vmatprep.mubr.f32.mxu0 0.0
        %2184 = vmatmul.mubr.f32.gmra.mrb[0].mxu0 %v2114
        %v2185 = vpop.f32.mrb[0].mxu0
        %v2186 = vadd.f32 0.0, %v2185
        %v2187 = vpop.f32.mrb[0].mxu0
        %2188 = vdwg.mxu0
        %v2189 = vrsqrt.pop %v2112
        %v2190 = vmul.f32 %v2112, %v2189
        %vm2191 = vcmp.eq.f32.partialorder %v2112, inf
        %v2192 = vsel %vm2191, %v2112, %v2190
        %vm2193 = vcmp.eq.f32.partialorder %v2112, 0.0
        %v2194 = vand.u32 %v2112, 2147483648
        %v2195 = vsel %vm2193, %v2194, %v2192
        %v2196 = vadd.f32 %v2195, 1e-15
        %v2197 = vrcp.pop %v2196
        %v2198 = vrsqrt.pop %v2186
        %v2199 = vmul.f32 %v2186, %v2198
        %vm2200 = vcmp.eq.f32.partialorder %v2186, inf
        %v2201 = vsel %vm2200, %v2186, %v2199
        %vm2202 = vcmp.eq.f32.partialorder %v2186, 0.0
        %v2203 = vand.u32 %v2186, 2147483648
        %v2204 = vsel %vm2202, %v2203, %v2201
        %v2205 = vadd.f32 %v2204, 1e-15
        %v2206 = vrcp.pop %v2205
        %v2207 = vlaneseq
        %v2208 = vshrl.u32 %v2207, 7
        %v2209 = vsub.s32 0, %v2208
        %v2210 = vrot.slane %v2206, %v2209
        %v2211 = vmul.f32 %v2109, %v2210
        %v2212 = vmul.f32 %v2211, %v2197
        %2213 = vst.msk [vmem:[%s384] sm:$0xff] %vm1243, %v2212
        %v2214 = vsel %vm1049, %v1535, -inf
        %2215 = vmax.xlane.f32.xlu0 %v2214
        %v2216 = vpop.xlane.xlu0 %2215
        %v2217 = vsub.f32 %v1535, %v2216
        %v2218 = vmul.f32 %v2217, 1.442695
        %v2219 = vpow.pop %v2218
        %v2220 = vsel %vm1049, %v2219, 0.0
        %2221 = vadd.xlane.f32.xlu0 %v2220
        %v2222 = vpop.xlane.xlu0 %2221
        %v2223 = vlog2.pop %v2222
        %v2224 = vmul.f32 %v2223, 0.6931472
        %v2225 = vsub.f32 %v2217, %v2224
        %2226 = vst.msk [vmem:[%s377] sm:$0xff] %vm1049, %v2225
        %s2227 = scalar_lea.vmem %s405, 128
        %v2228 = vld [vmem:[%s2227] sm:$0xff]
        %v2229 = vld [vmem:[%s2227 + $0x8] sm:$0xff]
        %v2230 = vld [vmem:[%s2227 + $0x10] sm:$0xff]
        %v2231 = vld [vmem:[%s2227 + $0x18] sm:$0xff]
        %v2232 = vld [vmem:[%s2227 + $0x20] sm:$0xff]
        %v2233 = vld [vmem:[%s2227 + $0x28] sm:$0xff]
        %v2234 = vld [vmem:[%s2227 + $0x30] sm:$0xff]
        %v2235 = vld [vmem:[%s2227 + $0x38] sm:$0xff]
        %v2236 = vld [vmem:[%s2227 + $0x40] sm:$0xff]
        %v2237 = vld [vmem:[%s2227 + $0x48] sm:$0xff]
        %v2238 = vld [vmem:[%s2227 + $0x50] sm:$0xff]
        %v2239 = vld [vmem:[%s2227 + $0x58] sm:$0xff]
        %v2240 = vld [vmem:[%s2227 + $0x60] sm:$0xff]
        %v2241 = vld [vmem:[%s2227 + $0x68] sm:$0xff]
        %v2242 = vld [vmem:[%s2227 + $0x70] sm:$0xff]
        %v2243 = vld [vmem:[%s2227 + $0x78] sm:$0xff]
        %s2244 = scalar_lea.vmem %s412, 128
        %v2245 = vld [vmem:[%s2244] sm:$0xff]
        %v2246 = vld [vmem:[%s2244 + $0x8] sm:$0xff]
        %v2247 = vld [vmem:[%s2244 + $0x10] sm:$0xff]
        %v2248 = vld [vmem:[%s2244 + $0x18] sm:$0xff]
        %v2249 = vld [vmem:[%s2244 + $0x20] sm:$0xff]
        %v2250 = vld [vmem:[%s2244 + $0x28] sm:$0xff]
        %v2251 = vld [vmem:[%s2244 + $0x30] sm:$0xff]
        %v2252 = vld [vmem:[%s2244 + $0x38] sm:$0xff]
        %v2253 = vld [vmem:[%s2244 + $0x40] sm:$0xff]
        %v2254 = vld [vmem:[%s2244 + $0x48] sm:$0xff]
        %v2255 = vld [vmem:[%s2244 + $0x50] sm:$0xff]
        %v2256 = vld [vmem:[%s2244 + $0x58] sm:$0xff]
        %v2257 = vld [vmem:[%s2244 + $0x60] sm:$0xff]
        %v2258 = vld [vmem:[%s2244 + $0x68] sm:$0xff]
        %v2259 = vld [vmem:[%s2244 + $0x70] sm:$0xff]
        %v2260 = vld [vmem:[%s2244 + $0x78] sm:$0xff]
        %2261 = vmatprep.subr.mxu0 0.0
        %2262 = vmatpush1.msra.mxu0 %v2228
        %2263 = vmatprep.subr.mxu0 0.0
        %2264 = vmatpush1.msra.mxu0 %v2229
        %2265 = vmatprep.subr.mxu0 0.0
        %2266 = vmatpush1.msra.mxu0 %v2230
        %2267 = vmatprep.subr.mxu0 0.0
        %2268 = vmatpush1.msra.mxu0 %v2231
        %2269 = vmatprep.subr.mxu0 0.0
        %2270 = vmatpush1.msra.mxu0 %v2232
        %2271 = vmatprep.subr.mxu0 0.0
        %2272 = vmatpush1.msra.mxu0 %v2233
        %2273 = vmatprep.subr.mxu0 0.0
        %2274 = vmatpush1.msra.mxu0 %v2234
        %2275 = vmatprep.subr.mxu0 0.0
        %2276 = vmatpush1.msra.mxu0 %v2235
        %2277 = vmatprep.subr.mxu0 0.0
        %2278 = vmatpush1.msra.mxu0 %v2236
        %2279 = vmatprep.subr.mxu0 0.0
        %2280 = vmatpush1.msra.mxu0 %v2237
        %2281 = vmatprep.subr.mxu0 0.0
        %2282 = vmatpush1.msra.mxu0 %v2238
        %2283 = vmatprep.subr.mxu0 0.0
        %2284 = vmatpush1.msra.mxu0 %v2239
        %2285 = vmatprep.subr.mxu0 0.0
        %2286 = vmatpush1.msra.mxu0 %v2240
        %2287 = vmatprep.subr.mxu0 0.0
        %2288 = vmatpush1.msra.mxu0 %v2241
        %2289 = vmatprep.subr.mxu0 0.0
        %2290 = vmatpush1.msra.mxu0 %v2242
        %2291 = vmatprep.subr.mxu0 0.0
        %2292 = vmatpush1.msra.mxu0 %v2243
        %2293 = vmatprep.subr.mxu0 0.0
        %2294 = vmatpush1.msra.mxu0 0.0
        %2295 = vmatprep.subr.mxu0 0.0
        %2296 = vmatpush1.msra.mxu0 0.0
        %2297 = vmatprep.subr.mxu0 0.0
        %2298 = vmatpush1.msra.mxu0 0.0
        %2299 = vmatprep.subr.mxu0 0.0
        %2300 = vmatpush1.msra.mxu0 0.0
        %2301 = vmatprep.subr.mxu0 0.0
        %2302 = vmatpush1.msra.mxu0 0.0
        %2303 = vmatprep.subr.mxu0 0.0
        %2304 = vmatpush1.msra.mxu0 0.0
        %2305 = vmatprep.subr.mxu0 0.0
        %2306 = vmatpush1.msra.mxu0 0.0
        %2307 = vmatprep.subr.mxu0 0.0
        %2308 = vmatpush1.msra.mxu0 0.0
        %2309 = vmatprep.subr.mxu0 0.0
        %2310 = vmatpush1.msra.mxu0 0.0
        %2311 = vmatprep.subr.mxu0 0.0
        %2312 = vmatpush1.msra.mxu0 0.0
        %2313 = vmatprep.subr.mxu0 0.0
        %2314 = vmatpush1.msra.mxu0 0.0
        %2315 = vmatprep.subr.mxu0 0.0
        %2316 = vmatpush1.msra.mxu0 0.0
        %2317 = vmatprep.subr.mxu0 0.0
        %2318 = vmatpush1.msra.mxu0 0.0
        %2319 = vmatprep.subr.mxu0 0.0
        %2320 = vmatpush1.msra.mxu0 0.0
        %2321 = vmatprep.subr.mxu0 0.0
        %2322 = vmatpush1.msra.mxu0 0.0
        %2323 = vmatprep.subr.mxu0 0.0
        %2324 = vmatpush1.msra.mxu0 0.0
        %2325 = vmatprep.mubr.f32.mxu0 0.0
        %2326 = vmatmul.mubr.f32.gmra.mrb[0].mxu0 %v2245
        %v2327 = vpop.f32.mrb[0].mxu0
        %v2328 = vadd.f32 0.0, %v2327
        %v2329 = vpop.f32.mrb[0].mxu0
        %2330 = vmatprep.mubr.f32.mxu0 0.0
        %2331 = vmatmul.mubr.f32.gmra.mrb[0].mxu0 %v2246
        %v2332 = vpop.f32.mrb[0].mxu0
        %v2333 = vadd.f32 0.0, %v2332
        %v2334 = vpop.f32.mrb[0].mxu0
        %2335 = vmatprep.mubr.f32.mxu0 0.0
        %2336 = vmatmul.mubr.f32.gmra.mrb[0].mxu0 %v2247
        %v2337 = vpop.f32.mrb[0].mxu0
        %v2338 = vadd.f32 0.0, %v2337
        %v2339 = vpop.f32.mrb[0].mxu0
        %2340 = vmatprep.mubr.f32.mxu0 0.0
        %2341 = vmatmul.mubr.f32.gmra.mrb[0].mxu0 %v2248
        %v2342 = vpop.f32.mrb[0].mxu0
        %v2343 = vadd.f32 0.0, %v2342
        %v2344 = vpop.f32.mrb[0].mxu0
        %2345 = vmatprep.mubr.f32.mxu0 0.0
        %2346 = vmatmul.mubr.f32.gmra.mrb[0].mxu0 %v2249
        %v2347 = vpop.f32.mrb[0].mxu0
        %v2348 = vadd.f32 0.0, %v2347
        %v2349 = vpop.f32.mrb[0].mxu0
        %2350 = vmatprep.mubr.f32.mxu0 0.0
        %2351 = vmatmul.mubr.f32.gmra.mrb[0].mxu0 %v2250
        %v2352 = vpop.f32.mrb[0].mxu0
        %v2353 = vadd.f32 0.0, %v2352
        %v2354 = vpop.f32.mrb[0].mxu0
        %2355 = vmatprep.mubr.f32.mxu0 0.0
        %2356 = vmatmul.mubr.f32.gmra.mrb[0].mxu0 %v2251
        %v2357 = vpop.f32.mrb[0].mxu0
        %v2358 = vadd.f32 0.0, %v2357
        %v2359 = vpop.f32.mrb[0].mxu0
        %2360 = vmatprep.mubr.f32.mxu0 0.0
        %2361 = vmatmul.mubr.f32.gmra.mrb[0].mxu0 %v2252
        %v2362 = vpop.f32.mrb[0].mxu0
        %v2363 = vadd.f32 0.0, %v2362
        %v2364 = vpop.f32.mrb[0].mxu0
        %2365 = vmatprep.mubr.f32.mxu0 0.0
        %2366 = vmatmul.mubr.f32.gmra.mrb[0].mxu0 %v2253
        %v2367 = vpop.f32.mrb[0].mxu0
        %v2368 = vadd.f32 0.0, %v2367
        %v2369 = vpop.f32.mrb[0].mxu0
        %2370 = vmatprep.mubr.f32.mxu0 0.0
        %2371 = vmatmul.mubr.f32.gmra.mrb[0].mxu0 %v2254
        %v2372 = vpop.f32.mrb[0].mxu0
        %v2373 = vadd.f32 0.0, %v2372
        %v2374 = vpop.f32.mrb[0].mxu0
        %2375 = vmatprep.mubr.f32.mxu0 0.0
        %2376 = vmatmul.mubr.f32.gmra.mrb[0].mxu0 %v2255
        %v2377 = vpop.f32.mrb[0].mxu0
        %v2378 = vadd.f32 0.0, %v2377
        %v2379 = vpop.f32.mrb[0].mxu0
        %2380 = vmatprep.mubr.f32.mxu0 0.0
        %2381 = vmatmul.mubr.f32.gmra.mrb[0].mxu0 %v2256
        %v2382 = vpop.f32.mrb[0].mxu0
        %v2383 = vadd.f32 0.0, %v2382
        %v2384 = vpop.f32.mrb[0].mxu0
        %2385 = vmatprep.mubr.f32.mxu0 0.0
        %2386 = vmatmul.mubr.f32.gmra.mrb[0].mxu0 %v2257
        %v2387 = vpop.f32.mrb[0].mxu0
        %v2388 = vadd.f32 0.0, %v2387
        %v2389 = vpop.f32.mrb[0].mxu0
        %2390 = vmatprep.mubr.f32.mxu0 0.0
        %2391 = vmatmul.mubr.f32.gmra.mrb[0].mxu0 %v2258
        %v2392 = vpop.f32.mrb[0].mxu0
        %v2393 = vadd.f32 0.0, %v2392
        %v2394 = vpop.f32.mrb[0].mxu0
        %2395 = vmatprep.mubr.f32.mxu0 0.0
        %2396 = vmatmul.mubr.f32.gmra.mrb[0].mxu0 %v2259
        %v2397 = vpop.f32.mrb[0].mxu0
        %v2398 = vadd.f32 0.0, %v2397
        %v2399 = vpop.f32.mrb[0].mxu0
        %2400 = vmatprep.mubr.f32.mxu0 0.0
        %2401 = vmatmul.mubr.f32.gmra.mrb[0].mxu0 %v2260
        %v2402 = vpop.f32.mrb[0].mxu0
        %v2403 = vadd.f32 0.0, %v2402
        %v2404 = vpop.f32.mrb[0].mxu0
        %2405 = vdwg.mxu0
        %v2407 = vsel %vm624, %v2328, 0
        %v2410 = vsel %vm624, %v2333, 0
        %v2413 = vsel %vm624, %v2338, 0
        %v2416 = vsel %vm624, %v2343, 0
        %v2419 = vsel %vm624, %v2348, 0
        %v2422 = vsel %vm624, %v2353, 0
        %v2425 = vsel %vm624, %v2358, 0
        %v2428 = vsel %vm624, %v2363, 0
        %v2431 = vsel %vm624, %v2368, 0
        %v2434 = vsel %vm624, %v2373, 0
        %v2437 = vsel %vm624, %v2378, 0
        %v2440 = vsel %vm624, %v2383, 0
        %v2443 = vsel %vm624, %v2388, 0
        %v2446 = vsel %vm624, %v2393, 0
        %v2449 = vsel %vm624, %v2398, 0
        %v2452 = vsel %vm624, %v2403, 0
        %2454 = vmatprep.subr.mxu0 0.0
        %2455 = vmatpush1.msra.mxu0 %v424
        %2456 = vmatprep.subr.mxu0 0.0
        %2457 = vmatpush1.msra.mxu0 %v425
        %2458 = vmatprep.subr.mxu0 0.0
        %2459 = vmatpush1.msra.mxu0 0.0
        %2460 = vmatprep.subr.mxu0 0.0
        %2461 = vmatpush1.msra.mxu0 0.0
        %2462 = vmatprep.subr.mxu0 0.0
        %2463 = vmatpush1.msra.mxu0 0.0
        %2464 = vmatprep.subr.mxu0 0.0
        %2465 = vmatpush1.msra.mxu0 0.0
        %2466 = vmatprep.subr.mxu0 0.0
        %2467 = vmatpush1.msra.mxu0 0.0
        %2468 = vmatprep.subr.mxu0 0.0
        %2469 = vmatpush1.msra.mxu0 0.0
        %2470 = vmatprep.subr.mxu0 0.0
        %2471 = vmatpush1.msra.mxu0 0.0
        %2472 = vmatprep.subr.mxu0 0.0
        %2473 = vmatpush1.msra.mxu0 0.0
        %2474 = vmatprep.subr.mxu0 0.0
        %2475 = vmatpush1.msra.mxu0 0.0
        %2476 = vmatprep.subr.mxu0 0.0
        %2477 = vmatpush1.msra.mxu0 0.0
        %2478 = vmatprep.subr.mxu0 0.0
        %2479 = vmatpush1.msra.mxu0 0.0
        %2480 = vmatprep.subr.mxu0 0.0
        %2481 = vmatpush1.msra.mxu0 0.0
        %2482 = vmatprep.subr.mxu0 0.0
        %2483 = vmatpush1.msra.mxu0 0.0
        %2484 = vmatprep.subr.mxu0 0.0
        %2485 = vmatpush1.msra.mxu0 0.0
        %2486 = vmatprep.subr.mxu0 0.0
        %2487 = vmatpush1.msra.mxu0 0.0
        %2488 = vmatprep.subr.mxu0 0.0
        %2489 = vmatpush1.msra.mxu0 0.0
        %2490 = vmatprep.subr.mxu0 0.0
        %2491 = vmatpush1.msra.mxu0 0.0
        %2492 = vmatprep.subr.mxu0 0.0
        %2493 = vmatpush1.msra.mxu0 0.0
        %2494 = vmatprep.subr.mxu0 0.0
        %2495 = vmatpush1.msra.mxu0 0.0
        %2496 = vmatprep.subr.mxu0 0.0
        %2497 = vmatpush1.msra.mxu0 0.0
        %2498 = vmatprep.subr.mxu0 0.0
        %2499 = vmatpush1.msra.mxu0 0.0
        %2500 = vmatprep.subr.mxu0 0.0
        %2501 = vmatpush1.msra.mxu0 0.0
        %2502 = vmatprep.subr.mxu0 0.0
        %2503 = vmatpush1.msra.mxu0 0.0
        %2504 = vmatprep.subr.mxu0 0.0
        %2505 = vmatpush1.msra.mxu0 0.0
        %2506 = vmatprep.subr.mxu0 0.0
        %2507 = vmatpush1.msra.mxu0 0.0
        %2508 = vmatprep.subr.mxu0 0.0
        %2509 = vmatpush1.msra.mxu0 0.0
        %2510 = vmatprep.subr.mxu0 0.0
        %2511 = vmatpush1.msra.mxu0 0.0
        %2512 = vmatprep.subr.mxu0 0.0
        %2513 = vmatpush1.msra.mxu0 0.0
        %2514 = vmatprep.subr.mxu0 0.0
        %2515 = vmatpush1.msra.mxu0 0.0
        %2516 = vmatprep.subr.mxu0 0.0
        %2517 = vmatpush1.msra.mxu0 0.0
        %2518 = vmatprep.mubr.f32.mxu0 0.0
        %2519 = vmatmul.mubr.f32.gmra.mrb[0].mxu0 %v2407
        %v2520 = vpop.f32.mrb[0].mxu0
        %v2521 = vadd.f32 %v622, %v2520
        %v2522 = vpop.f32.mrb[0].mxu0
        %2523 = vmatprep.mubr.f32.mxu0 0.0
        %2524 = vmatmul.mubr.f32.gmra.mrb[0].mxu0 %v2410
        %v2525 = vpop.f32.mrb[0].mxu0
        %v2526 = vadd.f32 %v622, %v2525
        %v2527 = vpop.f32.mrb[0].mxu0
        %2528 = vmatprep.mubr.f32.mxu0 0.0
        %2529 = vmatmul.mubr.f32.gmra.mrb[0].mxu0 %v2413
        %v2530 = vpop.f32.mrb[0].mxu0
        %v2531 = vadd.f32 %v622, %v2530
        %v2532 = vpop.f32.mrb[0].mxu0
        %2533 = vmatprep.mubr.f32.mxu0 0.0
        %2534 = vmatmul.mubr.f32.gmra.mrb[0].mxu0 %v2416
        %v2535 = vpop.f32.mrb[0].mxu0
        %v2536 = vadd.f32 %v622, %v2535
        %v2537 = vpop.f32.mrb[0].mxu0
        %2538 = vmatprep.mubr.f32.mxu0 0.0
        %2539 = vmatmul.mubr.f32.gmra.mrb[0].mxu0 %v2419
        %v2540 = vpop.f32.mrb[0].mxu0
        %v2541 = vadd.f32 %v622, %v2540
        %v2542 = vpop.f32.mrb[0].mxu0
        %2543 = vmatprep.mubr.f32.mxu0 0.0
        %2544 = vmatmul.mubr.f32.gmra.mrb[0].mxu0 %v2422
        %v2545 = vpop.f32.mrb[0].mxu0
        %v2546 = vadd.f32 %v622, %v2545
        %v2547 = vpop.f32.mrb[0].mxu0
        %2548 = vmatprep.mubr.f32.mxu0 0.0
        %2549 = vmatmul.mubr.f32.gmra.mrb[0].mxu0 %v2425
        %v2550 = vpop.f32.mrb[0].mxu0
        %v2551 = vadd.f32 %v622, %v2550
        %v2552 = vpop.f32.mrb[0].mxu0
        %2553 = vmatprep.mubr.f32.mxu0 0.0
        %2554 = vmatmul.mubr.f32.gmra.mrb[0].mxu0 %v2428
        %v2555 = vpop.f32.mrb[0].mxu0
        %v2556 = vadd.f32 %v622, %v2555
        %v2557 = vpop.f32.mrb[0].mxu0
        %2558 = vmatprep.mubr.f32.mxu0 0.0
        %2559 = vmatmul.mubr.f32.gmra.mrb[0].mxu0 %v2431
        %v2560 = vpop.f32.mrb[0].mxu0
        %v2561 = vadd.f32 %v622, %v2560
        %v2562 = vpop.f32.mrb[0].mxu0
        %2563 = vmatprep.mubr.f32.mxu0 0.0
        %2564 = vmatmul.mubr.f32.gmra.mrb[0].mxu0 %v2434
        %v2565 = vpop.f32.mrb[0].mxu0
        %v2566 = vadd.f32 %v622, %v2565
        %v2567 = vpop.f32.mrb[0].mxu0
        %2568 = vmatprep.mubr.f32.mxu0 0.0
        %2569 = vmatmul.mubr.f32.gmra.mrb[0].mxu0 %v2437
        %v2570 = vpop.f32.mrb[0].mxu0
        %v2571 = vadd.f32 %v622, %v2570
        %v2572 = vpop.f32.mrb[0].mxu0
        %2573 = vmatprep.mubr.f32.mxu0 0.0
        %2574 = vmatmul.mubr.f32.gmra.mrb[0].mxu0 %v2440
        %v2575 = vpop.f32.mrb[0].mxu0
        %v2576 = vadd.f32 %v622, %v2575
        %v2577 = vpop.f32.mrb[0].mxu0
        %2578 = vmatprep.mubr.f32.mxu0 0.0
        %2579 = vmatmul.mubr.f32.gmra.mrb[0].mxu0 %v2443
        %v2580 = vpop.f32.mrb[0].mxu0
        %v2581 = vadd.f32 %v622, %v2580
        %v2582 = vpop.f32.mrb[0].mxu0
        %2583 = vmatprep.mubr.f32.mxu0 0.0
        %2584 = vmatmul.mubr.f32.gmra.mrb[0].mxu0 %v2446
        %v2585 = vpop.f32.mrb[0].mxu0
        %v2586 = vadd.f32 %v622, %v2585
        %v2587 = vpop.f32.mrb[0].mxu0
        %2588 = vmatprep.mubr.f32.mxu0 0.0
        %2589 = vmatmul.mubr.f32.gmra.mrb[0].mxu0 %v2449
        %v2590 = vpop.f32.mrb[0].mxu0
        %v2591 = vadd.f32 %v622, %v2590
        %v2592 = vpop.f32.mrb[0].mxu0
        %2593 = vmatprep.mubr.f32.mxu0 0.0
        %2594 = vmatmul.mubr.f32.gmra.mrb[0].mxu0 %v2452
        %v2595 = vpop.f32.mrb[0].mxu0
        %v2596 = vadd.f32 %v622, %v2595
        %v2597 = vpop.f32.mrb[0].mxu0
        %2598 = vdwg.mxu0
        %v2600 = vsel %vm624, %v2228, 0
        %v2603 = vsel %vm624, %v2229, 0
        %v2606 = vsel %vm624, %v2230, 0
        %v2609 = vsel %vm624, %v2231, 0
        %v2612 = vsel %vm624, %v2232, 0
        %v2615 = vsel %vm624, %v2233, 0
        %v2618 = vsel %vm624, %v2234, 0
        %v2621 = vsel %vm624, %v2235, 0
        %v2624 = vsel %vm624, %v2236, 0
        %v2627 = vsel %vm624, %v2237, 0
        %v2630 = vsel %vm624, %v2238, 0
        %v2633 = vsel %vm624, %v2239, 0
        %v2636 = vsel %vm624, %v2240, 0
        %v2639 = vsel %vm624, %v2241, 0
        %v2642 = vsel %vm624, %v2242, 0
        %v2645 = vsel %vm624, %v2243, 0
        %2647 = vmatprep.subr.mxu0 0.0
        %2648 = vmatpush1.msra.mxu0 %v427
        %2649 = vmatprep.subr.mxu0 0.0
        %2650 = vmatpush1.msra.mxu0 %v428
        %2651 = vmatprep.subr.mxu0 0.0
        %2652 = vmatpush1.msra.mxu0 0.0
        %2653 = vmatprep.subr.mxu0 0.0
        %2654 = vmatpush1.msra.mxu0 0.0
        %2655 = vmatprep.subr.mxu0 0.0
        %2656 = vmatpush1.msra.mxu0 0.0
        %2657 = vmatprep.subr.mxu0 0.0
        %2658 = vmatpush1.msra.mxu0 0.0
        %2659 = vmatprep.subr.mxu0 0.0
        %2660 = vmatpush1.msra.mxu0 0.0
        %2661 = vmatprep.subr.mxu0 0.0
        %2662 = vmatpush1.msra.mxu0 0.0
        %2663 = vmatprep.subr.mxu0 0.0
        %2664 = vmatpush1.msra.mxu0 0.0
        %2665 = vmatprep.subr.mxu0 0.0
        %2666 = vmatpush1.msra.mxu0 0.0
        %2667 = vmatprep.subr.mxu0 0.0
        %2668 = vmatpush1.msra.mxu0 0.0
        %2669 = vmatprep.subr.mxu0 0.0
        %2670 = vmatpush1.msra.mxu0 0.0
        %2671 = vmatprep.subr.mxu0 0.0
        %2672 = vmatpush1.msra.mxu0 0.0
        %2673 = vmatprep.subr.mxu0 0.0
        %2674 = vmatpush1.msra.mxu0 0.0
        %2675 = vmatprep.subr.mxu0 0.0
        %2676 = vmatpush1.msra.mxu0 0.0
        %2677 = vmatprep.subr.mxu0 0.0
        %2678 = vmatpush1.msra.mxu0 0.0
        %2679 = vmatprep.subr.mxu0 0.0
        %2680 = vmatpush1.msra.mxu0 0.0
        %2681 = vmatprep.subr.mxu0 0.0
        %2682 = vmatpush1.msra.mxu0 0.0
        %2683 = vmatprep.subr.mxu0 0.0
        %2684 = vmatpush1.msra.mxu0 0.0
        %2685 = vmatprep.subr.mxu0 0.0
        %2686 = vmatpush1.msra.mxu0 0.0
        %2687 = vmatprep.subr.mxu0 0.0
        %2688 = vmatpush1.msra.mxu0 0.0
        %2689 = vmatprep.subr.mxu0 0.0
        %2690 = vmatpush1.msra.mxu0 0.0
        %2691 = vmatprep.subr.mxu0 0.0
        %2692 = vmatpush1.msra.mxu0 0.0
        %2693 = vmatprep.subr.mxu0 0.0
        %2694 = vmatpush1.msra.mxu0 0.0
        %2695 = vmatprep.subr.mxu0 0.0
        %2696 = vmatpush1.msra.mxu0 0.0
        %2697 = vmatprep.subr.mxu0 0.0
        %2698 = vmatpush1.msra.mxu0 0.0
        %2699 = vmatprep.subr.mxu0 0.0
        %2700 = vmatpush1.msra.mxu0 0.0
        %2701 = vmatprep.subr.mxu0 0.0
        %2702 = vmatpush1.msra.mxu0 0.0
        %2703 = vmatprep.subr.mxu0 0.0
        %2704 = vmatpush1.msra.mxu0 0.0
        %2705 = vmatprep.subr.mxu0 0.0
        %2706 = vmatpush1.msra.mxu0 0.0
        %2707 = vmatprep.subr.mxu0 0.0
        %2708 = vmatpush1.msra.mxu0 0.0
        %2709 = vmatprep.subr.mxu0 0.0
        %2710 = vmatpush1.msra.mxu0 0.0
        %2711 = vmatprep.mubr.f32.mxu0 0.0
        %2712 = vmatmul.mubr.f32.gmra.mrb[0].mxu0 %v2600
        %v2713 = vpop.f32.mrb[0].mxu0
        %v2714 = vadd.f32 0.0, %v2713
        %v2715 = vpop.f32.mrb[0].mxu0
        %2716 = vmatprep.mubr.f32.mxu0 0.0
        %2717 = vmatmul.mubr.f32.gmra.mrb[0].mxu0 %v2603
        %v2718 = vpop.f32.mrb[0].mxu0
        %v2719 = vadd.f32 0.0, %v2718
        %v2720 = vpop.f32.mrb[0].mxu0
        %2721 = vmatprep.mubr.f32.mxu0 0.0
        %2722 = vmatmul.mubr.f32.gmra.mrb[0].mxu0 %v2606
        %v2723 = vpop.f32.mrb[0].mxu0
        %v2724 = vadd.f32 0.0, %v2723
        %v2725 = vpop.f32.mrb[0].mxu0
        %2726 = vmatprep.mubr.f32.mxu0 0.0
        %2727 = vmatmul.mubr.f32.gmra.mrb[0].mxu0 %v2609
        %v2728 = vpop.f32.mrb[0].mxu0
        %v2729 = vadd.f32 0.0, %v2728
        %v2730 = vpop.f32.mrb[0].mxu0
        %2731 = vmatprep.mubr.f32.mxu0 0.0
        %2732 = vmatmul.mubr.f32.gmra.mrb[0].mxu0 %v2612
        %v2733 = vpop.f32.mrb[0].mxu0
        %v2734 = vadd.f32 0.0, %v2733
        %v2735 = vpop.f32.mrb[0].mxu0
        %2736 = vmatprep.mubr.f32.mxu0 0.0
        %2737 = vmatmul.mubr.f32.gmra.mrb[0].mxu0 %v2615
        %v2738 = vpop.f32.mrb[0].mxu0
        %v2739 = vadd.f32 0.0, %v2738
        %v2740 = vpop.f32.mrb[0].mxu0
        %2741 = vmatprep.mubr.f32.mxu0 0.0
        %2742 = vmatmul.mubr.f32.gmra.mrb[0].mxu0 %v2618
        %v2743 = vpop.f32.mrb[0].mxu0
        %v2744 = vadd.f32 0.0, %v2743
        %v2745 = vpop.f32.mrb[0].mxu0
        %2746 = vmatprep.mubr.f32.mxu0 0.0
        %2747 = vmatmul.mubr.f32.gmra.mrb[0].mxu0 %v2621
        %v2748 = vpop.f32.mrb[0].mxu0
        %v2749 = vadd.f32 0.0, %v2748
        %v2750 = vpop.f32.mrb[0].mxu0
        %2751 = vmatprep.mubr.f32.mxu0 0.0
        %2752 = vmatmul.mubr.f32.gmra.mrb[0].mxu0 %v2624
        %v2753 = vpop.f32.mrb[0].mxu0
        %v2754 = vadd.f32 0.0, %v2753
        %v2755 = vpop.f32.mrb[0].mxu0
        %2756 = vmatprep.mubr.f32.mxu0 0.0
        %2757 = vmatmul.mubr.f32.gmra.mrb[0].mxu0 %v2627
        %v2758 = vpop.f32.mrb[0].mxu0
        %v2759 = vadd.f32 0.0, %v2758
        %v2760 = vpop.f32.mrb[0].mxu0
        %2761 = vmatprep.mubr.f32.mxu0 0.0
        %2762 = vmatmul.mubr.f32.gmra.mrb[0].mxu0 %v2630
        %v2763 = vpop.f32.mrb[0].mxu0
        %v2764 = vadd.f32 0.0, %v2763
        %v2765 = vpop.f32.mrb[0].mxu0
        %2766 = vmatprep.mubr.f32.mxu0 0.0
        %2767 = vmatmul.mubr.f32.gmra.mrb[0].mxu0 %v2633
        %v2768 = vpop.f32.mrb[0].mxu0
        %v2769 = vadd.f32 0.0, %v2768
        %v2770 = vpop.f32.mrb[0].mxu0
        %2771 = vmatprep.mubr.f32.mxu0 0.0
        %2772 = vmatmul.mubr.f32.gmra.mrb[0].mxu0 %v2636
        %v2773 = vpop.f32.mrb[0].mxu0
        %v2774 = vadd.f32 0.0, %v2773
        %v2775 = vpop.f32.mrb[0].mxu0
        %2776 = vmatprep.mubr.f32.mxu0 0.0
        %2777 = vmatmul.mubr.f32.gmra.mrb[0].mxu0 %v2639
        %v2778 = vpop.f32.mrb[0].mxu0
        %v2779 = vadd.f32 0.0, %v2778
        %v2780 = vpop.f32.mrb[0].mxu0
        %2781 = vmatprep.mubr.f32.mxu0 0.0
        %2782 = vmatmul.mubr.f32.gmra.mrb[0].mxu0 %v2642
        %v2783 = vpop.f32.mrb[0].mxu0
        %v2784 = vadd.f32 0.0, %v2783
        %v2785 = vpop.f32.mrb[0].mxu0
        %2786 = vmatprep.mubr.f32.mxu0 0.0
        %2787 = vmatmul.mubr.f32.gmra.mrb[0].mxu0 %v2645
        %v2788 = vpop.f32.mrb[0].mxu0
        %v2789 = vadd.f32 0.0, %v2788
        %v2790 = vpop.f32.mrb[0].mxu0
        %2791 = vdwg.mxu0
        %v2792 = vadd.f32 %v2521, %v2714
        %v2793 = vadd.f32 %v2526, %v2719
        %v2794 = vadd.f32 %v2531, %v2724
        %v2795 = vadd.f32 %v2536, %v2729
        %v2796 = vadd.f32 %v2541, %v2734
        %v2797 = vadd.f32 %v2546, %v2739
        %v2798 = vadd.f32 %v2551, %v2744
        %v2799 = vadd.f32 %v2556, %v2749
        %v2800 = vadd.f32 %v2561, %v2754
        %v2801 = vadd.f32 %v2566, %v2759
        %v2802 = vadd.f32 %v2571, %v2764
        %v2803 = vadd.f32 %v2576, %v2769
        %v2804 = vadd.f32 %v2581, %v2774
        %v2805 = vadd.f32 %v2586, %v2779
        %v2806 = vadd.f32 %v2591, %v2784
        %v2807 = vadd.f32 %v2596, %v2789
        %v2808 = vmax.f32 %v2792, 0.0
        %v2809 = vmax.f32 %v2793, 0.0
        %v2810 = vmax.f32 %v2794, 0.0
        %v2811 = vmax.f32 %v2795, 0.0
        %v2812 = vmax.f32 %v2796, 0.0
        %v2813 = vmax.f32 %v2797, 0.0
        %v2814 = vmax.f32 %v2798, 0.0
        %v2815 = vmax.f32 %v2799, 0.0
        %v2816 = vmax.f32 %v2800, 0.0
        %v2817 = vmax.f32 %v2801, 0.0
        %v2818 = vmax.f32 %v2802, 0.0
        %v2819 = vmax.f32 %v2803, 0.0
        %v2820 = vmax.f32 %v2804, 0.0
        %v2821 = vmax.f32 %v2805, 0.0
        %v2822 = vmax.f32 %v2806, 0.0
        %v2823 = vmax.f32 %v2807, 0.0
        %v2825 = vsel %vm1049, %v2808, 0
        %v2828 = vsel %vm1049, %v2809, 0
        %v2831 = vsel %vm1049, %v2810, 0
        %v2834 = vsel %vm1049, %v2811, 0
        %v2837 = vsel %vm1049, %v2812, 0
        %v2840 = vsel %vm1049, %v2813, 0
        %v2843 = vsel %vm1049, %v2814, 0
        %v2846 = vsel %vm1049, %v2815, 0
        %v2849 = vsel %vm1049, %v2816, 0
        %v2852 = vsel %vm1049, %v2817, 0
        %v2855 = vsel %vm1049, %v2818, 0
        %v2858 = vsel %vm1049, %v2819, 0
        %v2861 = vsel %vm1049, %v2820, 0
        %v2864 = vsel %vm1049, %v2821, 0
        %v2867 = vsel %vm1049, %v2822, 0
        %v2870 = vsel %vm1049, %v2823, 0
        %2872 = vmatprep.subr.mxu0 0.0
        %2873 = vmatpush1.msra.mxu0 %v429
        %2874 = vmatprep.subr.mxu0 0.0
        %2875 = vmatpush1.msra.mxu0 %v430
        %2876 = vmatprep.subr.mxu0 0.0
        %2877 = vmatpush1.msra.mxu0 %v431
        %2878 = vmatprep.subr.mxu0 0.0
        %2879 = vmatpush1.msra.mxu0 %v432
        %2880 = vmatprep.subr.mxu0 0.0
        %2881 = vmatpush1.msra.mxu0 0.0
        %2882 = vmatprep.subr.mxu0 0.0
        %2883 = vmatpush1.msra.mxu0 0.0
        %2884 = vmatprep.subr.mxu0 0.0
        %2885 = vmatpush1.msra.mxu0 0.0
        %2886 = vmatprep.subr.mxu0 0.0
        %2887 = vmatpush1.msra.mxu0 0.0
        %2888 = vmatprep.subr.mxu0 0.0
        %2889 = vmatpush1.msra.mxu0 0.0
        %2890 = vmatprep.subr.mxu0 0.0
        %2891 = vmatpush1.msra.mxu0 0.0
        %2892 = vmatprep.subr.mxu0 0.0
        %2893 = vmatpush1.msra.mxu0 0.0
        %2894 = vmatprep.subr.mxu0 0.0
        %2895 = vmatpush1.msra.mxu0 0.0
        %2896 = vmatprep.subr.mxu0 0.0
        %2897 = vmatpush1.msra.mxu0 0.0
        %2898 = vmatprep.subr.mxu0 0.0
        %2899 = vmatpush1.msra.mxu0 0.0
        %2900 = vmatprep.subr.mxu0 0.0
        %2901 = vmatpush1.msra.mxu0 0.0
        %2902 = vmatprep.subr.mxu0 0.0
        %2903 = vmatpush1.msra.mxu0 0.0
        %2904 = vmatprep.subr.mxu0 0.0
        %2905 = vmatpush1.msra.mxu0 0.0
        %2906 = vmatprep.subr.mxu0 0.0
        %2907 = vmatpush1.msra.mxu0 0.0
        %2908 = vmatprep.subr.mxu0 0.0
        %2909 = vmatpush1.msra.mxu0 0.0
        %2910 = vmatprep.subr.mxu0 0.0
        %2911 = vmatpush1.msra.mxu0 0.0
        %2912 = vmatprep.subr.mxu0 0.0
        %2913 = vmatpush1.msra.mxu0 0.0
        %2914 = vmatprep.subr.mxu0 0.0
        %2915 = vmatpush1.msra.mxu0 0.0
        %2916 = vmatprep.subr.mxu0 0.0
        %2917 = vmatpush1.msra.mxu0 0.0
        %2918 = vmatprep.subr.mxu0 0.0
        %2919 = vmatpush1.msra.mxu0 0.0
        %2920 = vmatprep.subr.mxu0 0.0
        %2921 = vmatpush1.msra.mxu0 0.0
        %2922 = vmatprep.subr.mxu0 0.0
        %2923 = vmatpush1.msra.mxu0 0.0
        %2924 = vmatprep.subr.mxu0 0.0
        %2925 = vmatpush1.msra.mxu0 0.0
        %2926 = vmatprep.subr.mxu0 0.0
        %2927 = vmatpush1.msra.mxu0 0.0
        %2928 = vmatprep.subr.mxu0 0.0
        %2929 = vmatpush1.msra.mxu0 0.0
        %2930 = vmatprep.subr.mxu0 0.0
        %2931 = vmatpush1.msra.mxu0 0.0
        %2932 = vmatprep.subr.mxu0 0.0
        %2933 = vmatpush1.msra.mxu0 0.0
        %2934 = vmatprep.subr.mxu0 0.0
        %2935 = vmatpush1.msra.mxu0 0.0
        %2936 = vmatprep.mubr.f32.mxu0 0.0
        %2937 = vmatmul.mubr.f32.gmra.mrb[0].mxu0 %v2825
        %v2938 = vpop.f32.mrb[0].mxu0
        %v2939 = vadd.f32 %v1047, %v2938
        %v2940 = vpop.f32.mrb[0].mxu0
        %2941 = vmatprep.mubr.f32.mxu0 0.0
        %2942 = vmatmul.mubr.f32.gmra.mrb[0].mxu0 %v2828
        %v2943 = vpop.f32.mrb[0].mxu0
        %v2944 = vadd.f32 %v1047, %v2943
        %v2945 = vpop.f32.mrb[0].mxu0
        %2946 = vmatprep.mubr.f32.mxu0 0.0
        %2947 = vmatmul.mubr.f32.gmra.mrb[0].mxu0 %v2831
        %v2948 = vpop.f32.mrb[0].mxu0
        %v2949 = vadd.f32 %v1047, %v2948
        %v2950 = vpop.f32.mrb[0].mxu0
        %2951 = vmatprep.mubr.f32.mxu0 0.0
        %2952 = vmatmul.mubr.f32.gmra.mrb[0].mxu0 %v2834
        %v2953 = vpop.f32.mrb[0].mxu0
        %v2954 = vadd.f32 %v1047, %v2953
        %v2955 = vpop.f32.mrb[0].mxu0
        %2956 = vmatprep.mubr.f32.mxu0 0.0
        %2957 = vmatmul.mubr.f32.gmra.mrb[0].mxu0 %v2837
        %v2958 = vpop.f32.mrb[0].mxu0
        %v2959 = vadd.f32 %v1047, %v2958
        %v2960 = vpop.f32.mrb[0].mxu0
        %2961 = vmatprep.mubr.f32.mxu0 0.0
        %2962 = vmatmul.mubr.f32.gmra.mrb[0].mxu0 %v2840
        %v2963 = vpop.f32.mrb[0].mxu0
        %v2964 = vadd.f32 %v1047, %v2963
        %v2965 = vpop.f32.mrb[0].mxu0
        %2966 = vmatprep.mubr.f32.mxu0 0.0
        %2967 = vmatmul.mubr.f32.gmra.mrb[0].mxu0 %v2843
        %v2968 = vpop.f32.mrb[0].mxu0
        %v2969 = vadd.f32 %v1047, %v2968
        %v2970 = vpop.f32.mrb[0].mxu0
        %2971 = vmatprep.mubr.f32.mxu0 0.0
        %2972 = vmatmul.mubr.f32.gmra.mrb[0].mxu0 %v2846
        %v2973 = vpop.f32.mrb[0].mxu0
        %v2974 = vadd.f32 %v1047, %v2973
        %v2975 = vpop.f32.mrb[0].mxu0
        %2976 = vmatprep.mubr.f32.mxu0 0.0
        %2977 = vmatmul.mubr.f32.gmra.mrb[0].mxu0 %v2849
        %v2978 = vpop.f32.mrb[0].mxu0
        %v2979 = vadd.f32 %v1047, %v2978
        %v2980 = vpop.f32.mrb[0].mxu0
        %2981 = vmatprep.mubr.f32.mxu0 0.0
        %2982 = vmatmul.mubr.f32.gmra.mrb[0].mxu0 %v2852
        %v2983 = vpop.f32.mrb[0].mxu0
        %v2984 = vadd.f32 %v1047, %v2983
        %v2985 = vpop.f32.mrb[0].mxu0
        %2986 = vmatprep.mubr.f32.mxu0 0.0
        %2987 = vmatmul.mubr.f32.gmra.mrb[0].mxu0 %v2855
        %v2988 = vpop.f32.mrb[0].mxu0
        %v2989 = vadd.f32 %v1047, %v2988
        %v2990 = vpop.f32.mrb[0].mxu0
        %2991 = vmatprep.mubr.f32.mxu0 0.0
        %2992 = vmatmul.mubr.f32.gmra.mrb[0].mxu0 %v2858
        %v2993 = vpop.f32.mrb[0].mxu0
        %v2994 = vadd.f32 %v1047, %v2993
        %v2995 = vpop.f32.mrb[0].mxu0
        %2996 = vmatprep.mubr.f32.mxu0 0.0
        %2997 = vmatmul.mubr.f32.gmra.mrb[0].mxu0 %v2861
        %v2998 = vpop.f32.mrb[0].mxu0
        %v2999 = vadd.f32 %v1047, %v2998
        %v3000 = vpop.f32.mrb[0].mxu0
        %3001 = vmatprep.mubr.f32.mxu0 0.0
        %3002 = vmatmul.mubr.f32.gmra.mrb[0].mxu0 %v2864
        %v3003 = vpop.f32.mrb[0].mxu0
        %v3004 = vadd.f32 %v1047, %v3003
        %v3005 = vpop.f32.mrb[0].mxu0
        %3006 = vmatprep.mubr.f32.mxu0 0.0
        %3007 = vmatmul.mubr.f32.gmra.mrb[0].mxu0 %v2867
        %v3008 = vpop.f32.mrb[0].mxu0
        %v3009 = vadd.f32 %v1047, %v3008
        %v3010 = vpop.f32.mrb[0].mxu0
        %3011 = vmatprep.mubr.f32.mxu0 0.0
        %3012 = vmatmul.mubr.f32.gmra.mrb[0].mxu0 %v2870
        %v3013 = vpop.f32.mrb[0].mxu0
        %v3014 = vadd.f32 %v1047, %v3013
        %v3015 = vpop.f32.mrb[0].mxu0
        %3016 = vdwg.mxu0
        %s3017 = scalar_lea.vmem %s422, 128
        %3018 = vst.msk [vmem:[%s3017] sm:$0xff] %vm1243, %v2939
        %3019 = vst.msk [vmem:[%s3017 + $0x8] sm:$0xff] %vm1243, %v2944
        %3020 = vst.msk [vmem:[%s3017 + $0x10] sm:$0xff] %vm1243, %v2949
        %3021 = vst.msk [vmem:[%s3017 + $0x18] sm:$0xff] %vm1243, %v2954
        %3022 = vst.msk [vmem:[%s3017 + $0x20] sm:$0xff] %vm1243, %v2959
        %3023 = vst.msk [vmem:[%s3017 + $0x28] sm:$0xff] %vm1243, %v2964
        %3024 = vst.msk [vmem:[%s3017 + $0x30] sm:$0xff] %vm1243, %v2969
        %3025 = vst.msk [vmem:[%s3017 + $0x38] sm:$0xff] %vm1243, %v2974
        %3026 = vst.msk [vmem:[%s3017 + $0x40] sm:$0xff] %vm1243, %v2979
        %3027 = vst.msk [vmem:[%s3017 + $0x48] sm:$0xff] %vm1243, %v2984
        %3028 = vst.msk [vmem:[%s3017 + $0x50] sm:$0xff] %vm1243, %v2989
        %3029 = vst.msk [vmem:[%s3017 + $0x58] sm:$0xff] %vm1243, %v2994
        %3030 = vst.msk [vmem:[%s3017 + $0x60] sm:$0xff] %vm1243, %v2999
        %3031 = vst.msk [vmem:[%s3017 + $0x68] sm:$0xff] %vm1243, %v3004
        %3032 = vst.msk [vmem:[%s3017 + $0x70] sm:$0xff] %vm1243, %v3009
        %3033 = vst.msk [vmem:[%s3017 + $0x78] sm:$0xff] %vm1243, %v3014
        %v3034 = vsel %vm1243, %v2939, -inf
        %3035 = vmax.xlane.f32.xlu0 %v3034
        %v3036 = vpop.xlane.xlu0 %3035
        %v3037 = vsel %vm1243, %v2944, -inf
        %3038 = vmax.xlane.f32.xlu0 %v3037
        %v3039 = vpop.xlane.xlu0 %3038
        %v3040 = vsel %vm1243, %v2949, -inf
        %3041 = vmax.xlane.f32.xlu0 %v3040
        %v3042 = vpop.xlane.xlu0 %3041
        %v3043 = vsel %vm1243, %v2954, -inf
        %3044 = vmax.xlane.f32.xlu0 %v3043
        %v3045 = vpop.xlane.xlu0 %3044
        %v3046 = vsel %vm1243, %v2959, -inf
        %3047 = vmax.xlane.f32.xlu0 %v3046
        %v3048 = vpop.xlane.xlu0 %3047
        %v3049 = vsel %vm1243, %v2964, -inf
        %3050 = vmax.xlane.f32.xlu0 %v3049
        %v3051 = vpop.xlane.xlu0 %3050
        %v3052 = vsel %vm1243, %v2969, -inf
        %3053 = vmax.xlane.f32.xlu0 %v3052
        %v3054 = vpop.xlane.xlu0 %3053
        %v3055 = vsel %vm1243, %v2974, -inf
        %3056 = vmax.xlane.f32.xlu0 %v3055
        %v3057 = vpop.xlane.xlu0 %3056
        %v3058 = vsel %vm1243, %v2979, -inf
        %3059 = vmax.xlane.f32.xlu0 %v3058
        %v3060 = vpop.xlane.xlu0 %3059
        %v3061 = vsel %vm1243, %v2984, -inf
        %3062 = vmax.xlane.f32.xlu0 %v3061
        %v3063 = vpop.xlane.xlu0 %3062
        %v3064 = vsel %vm1243, %v2989, -inf
        %3065 = vmax.xlane.f32.xlu0 %v3064
        %v3066 = vpop.xlane.xlu0 %3065
        %v3067 = vsel %vm1243, %v2994, -inf
        %3068 = vmax.xlane.f32.xlu0 %v3067
        %v3069 = vpop.xlane.xlu0 %3068
        %v3070 = vsel %vm1243, %v2999, -inf
        %3071 = vmax.xlane.f32.xlu0 %v3070
        %v3072 = vpop.xlane.xlu0 %3071
        %v3073 = vsel %vm1243, %v3004, -inf
        %3074 = vmax.xlane.f32.xlu0 %v3073
        %v3075 = vpop.xlane.xlu0 %3074
        %v3076 = vsel %vm1243, %v3009, -inf
        %3077 = vmax.xlane.f32.xlu0 %v3076
        %v3078 = vpop.xlane.xlu0 %3077
        %v3079 = vsel %vm1243, %v3014, -inf
        %3080 = vmax.xlane.f32.xlu0 %v3079
        %v3081 = vpop.xlane.xlu0 %3080
        %v3082 = vsub.f32 %v2939, %v3036
        %v3083 = vsub.f32 %v2944, %v3039
        %v3084 = vsub.f32 %v2949, %v3042
        %v3085 = vsub.f32 %v2954, %v3045
        %v3086 = vsub.f32 %v2959, %v3048
        %v3087 = vsub.f32 %v2964, %v3051
        %v3088 = vsub.f32 %v2969, %v3054
        %v3089 = vsub.f32 %v2974, %v3057
        %v3090 = vsub.f32 %v2979, %v3060
        %v3091 = vsub.f32 %v2984, %v3063
        %v3092 = vsub.f32 %v2989, %v3066
        %v3093 = vsub.f32 %v2994, %v3069
        %v3094 = vsub.f32 %v2999, %v3072
        %v3095 = vsub.f32 %v3004, %v3075
        %v3096 = vsub.f32 %v3009, %v3078
        %v3097 = vsub.f32 %v3014, %v3081
        %v3098 = vmul.f32 %v3082, 1.442695
        %v3099 = vpow.pop %v3098
        %v3100 = vmul.f32 %v3083, 1.442695
        %v3101 = vpow.pop %v3100
        %v3102 = vmul.f32 %v3084, 1.442695
        %v3103 = vpow.pop %v3102
        %v3104 = vmul.f32 %v3085, 1.442695
        %v3105 = vpow.pop %v3104
        %v3106 = vmul.f32 %v3086, 1.442695
        %v3107 = vpow.pop %v3106
        %v3108 = vmul.f32 %v3087, 1.442695
        %v3109 = vpow.pop %v3108
        %v3110 = vmul.f32 %v3088, 1.442695
        %v3111 = vpow.pop %v3110
        %v3112 = vmul.f32 %v3089, 1.442695
        %v3113 = vpow.pop %v3112
        %v3114 = vmul.f32 %v3090, 1.442695
        %v3115 = vpow.pop %v3114
        %v3116 = vmul.f32 %v3091, 1.442695
        %v3117 = vpow.pop %v3116
        %v3118 = vmul.f32 %v3092, 1.442695
        %v3119 = vpow.pop %v3118
        %v3120 = vmul.f32 %v3093, 1.442695
        %v3121 = vpow.pop %v3120
        %v3122 = vmul.f32 %v3094, 1.442695
        %v3123 = vpow.pop %v3122
        %v3124 = vmul.f32 %v3095, 1.442695
        %v3125 = vpow.pop %v3124
        %v3126 = vmul.f32 %v3096, 1.442695
        %v3127 = vpow.pop %v3126
        %v3128 = vmul.f32 %v3097, 1.442695
        %v3129 = vpow.pop %v3128
        %v3130 = vsel %vm1243, %v3099, 0.0
        %3131 = vadd.xlane.f32.xlu0 %v3130
        %v3132 = vpop.xlane.xlu0 %3131
        %v3133 = vsel %vm1243, %v3101, 0.0
        %3134 = vadd.xlane.f32.xlu0 %v3133
        %v3135 = vpop.xlane.xlu0 %3134
        %v3136 = vsel %vm1243, %v3103, 0.0
        %3137 = vadd.xlane.f32.xlu0 %v3136
        %v3138 = vpop.xlane.xlu0 %3137
        %v3139 = vsel %vm1243, %v3105, 0.0
        %3140 = vadd.xlane.f32.xlu0 %v3139
        %v3141 = vpop.xlane.xlu0 %3140
        %v3142 = vsel %vm1243, %v3107, 0.0
        %3143 = vadd.xlane.f32.xlu0 %v3142
        %v3144 = vpop.xlane.xlu0 %3143
        %v3145 = vsel %vm1243, %v3109, 0.0
        %3146 = vadd.xlane.f32.xlu0 %v3145
        %v3147 = vpop.xlane.xlu0 %3146
        %v3148 = vsel %vm1243, %v3111, 0.0
        %3149 = vadd.xlane.f32.xlu0 %v3148
        %v3150 = vpop.xlane.xlu0 %3149
        %v3151 = vsel %vm1243, %v3113, 0.0
        %3152 = vadd.xlane.f32.xlu0 %v3151
        %v3153 = vpop.xlane.xlu0 %3152
        %v3154 = vsel %vm1243, %v3115, 0.0
        %3155 = vadd.xlane.f32.xlu0 %v3154
        %v3156 = vpop.xlane.xlu0 %3155
        %v3157 = vsel %vm1243, %v3117, 0.0
        %3158 = vadd.xlane.f32.xlu0 %v3157
        %v3159 = vpop.xlane.xlu0 %3158
        %v3160 = vsel %vm1243, %v3119, 0.0
        %3161 = vadd.xlane.f32.xlu0 %v3160
        %v3162 = vpop.xlane.xlu0 %3161
        %v3163 = vsel %vm1243, %v3121, 0.0
        %3164 = vadd.xlane.f32.xlu0 %v3163
        %v3165 = vpop.xlane.xlu0 %3164
        %v3166 = vsel %vm1243, %v3123, 0.0
        %3167 = vadd.xlane.f32.xlu0 %v3166
        %v3168 = vpop.xlane.xlu0 %3167
        %v3169 = vsel %vm1243, %v3125, 0.0
        %3170 = vadd.xlane.f32.xlu0 %v3169
        %v3171 = vpop.xlane.xlu0 %3170
        %v3172 = vsel %vm1243, %v3127, 0.0
        %3173 = vadd.xlane.f32.xlu0 %v3172
        %v3174 = vpop.xlane.xlu0 %3173
        %v3175 = vsel %vm1243, %v3129, 0.0
        %3176 = vadd.xlane.f32.xlu0 %v3175
        %v3177 = vpop.xlane.xlu0 %3176
        %v3178 = vrcp.pop %v3132
        %v3179 = vrcp.pop %v3135
        %v3180 = vrcp.pop %v3138
        %v3181 = vrcp.pop %v3141
        %v3182 = vrcp.pop %v3144
        %v3183 = vrcp.pop %v3147
        %v3184 = vrcp.pop %v3150
        %v3185 = vrcp.pop %v3153
        %v3186 = vrcp.pop %v3156
        %v3187 = vrcp.pop %v3159
        %v3188 = vrcp.pop %v3162
        %v3189 = vrcp.pop %v3165
        %v3190 = vrcp.pop %v3168
        %v3191 = vrcp.pop %v3171
        %v3192 = vrcp.pop %v3174
        %v3193 = vrcp.pop %v3177
        %v3194 = vmul.f32 %v3099, %v3178
        %v3195 = vmul.f32 %v3101, %v3179
        %v3196 = vmul.f32 %v3103, %v3180
        %v3197 = vmul.f32 %v3105, %v3181
        %v3198 = vmul.f32 %v3107, %v3182
        %v3199 = vmul.f32 %v3109, %v3183
        %v3200 = vmul.f32 %v3111, %v3184
        %v3201 = vmul.f32 %v3113, %v3185
        %v3202 = vmul.f32 %v3115, %v3186
        %v3203 = vmul.f32 %v3117, %v3187
        %v3204 = vmul.f32 %v3119, %v3188
        %v3205 = vmul.f32 %v3121, %v3189
        %v3206 = vmul.f32 %v3123, %v3190
        %v3207 = vmul.f32 %v3125, %v3191
        %v3208 = vmul.f32 %v3127, %v3192
        %v3209 = vmul.f32 %v3129, %v3193
        %3210 = vxpose.xlu0.b32.start [1/16] %v3194, 128
        %3211 = vxpose.xlu0.b32.cont [2/16] %v3195, 128
        %3212 = vxpose.xlu0.b32.cont [3/16] %v3196, 128
        %3213 = vxpose.xlu0.b32.cont [4/16] %v3197, 128
        %3214 = vxpose.xlu0.b32.cont [5/16] %v3198, 128
        %3215 = vxpose.xlu0.b32.cont [6/16] %v3199, 128
        %3216 = vxpose.xlu0.b32.cont [7/16] %v3200, 128
        %3217 = vxpose.xlu0.b32.cont [8/16] %v3201, 128
        %3218 = vxpose.xlu0.b32.cont [9/16] %v3202, 128
        %3219 = vxpose.xlu0.b32.cont [10/16] %v3203, 128
        %3220 = vxpose.xlu0.b32.cont [11/16] %v3204, 128
        %3221 = vxpose.xlu0.b32.cont [12/16] %v3205, 128
        %3222 = vxpose.xlu0.b32.cont [13/16] %v3206, 128
        %3223 = vxpose.xlu0.b32.cont [14/16] %v3207, 128
        %3224 = vxpose.xlu0.b32.cont [15/16] %v3208, 128
        %3225 = vxpose.xlu0.b32.end [16/16] %v3209, 128
        %v3226 = vpop.trf.xlu0
        %v3227 = vpop.trf.xlu0
        %v3228 = vpop.trf.xlu0
        %v3229 = vpop.trf.xlu0
        %v3230 = vpop.trf.xlu0
        %v3231 = vpop.trf.xlu0
        %v3232 = vpop.trf.xlu0
        %v3233 = vpop.trf.xlu0
        %v3234 = vpop.trf.xlu0
        %v3235 = vpop.trf.xlu0
        %v3236 = vpop.trf.xlu0
        %v3237 = vpop.trf.xlu0
        %v3238 = vpop.trf.xlu0
        %v3239 = vpop.trf.xlu0
        %v3240 = vpop.trf.xlu0
        %v3241 = vpop.trf.xlu0
        %3242 = vmatprep.subr.mxu0 0.0
        %3243 = vmatpush1.msra.mxu0 %v2808
        %3244 = vmatprep.subr.mxu0 0.0
        %3245 = vmatpush1.msra.mxu0 %v2809
        %3246 = vmatprep.subr.mxu0 0.0
        %3247 = vmatpush1.msra.mxu0 %v2810
        %3248 = vmatprep.subr.mxu0 0.0
        %3249 = vmatpush1.msra.mxu0 %v2811
        %3250 = vmatprep.subr.mxu0 0.0
        %3251 = vmatpush1.msra.mxu0 %v2812
        %3252 = vmatprep.subr.mxu0 0.0
        %3253 = vmatpush1.msra.mxu0 %v2813
        %3254 = vmatprep.subr.mxu0 0.0
        %3255 = vmatpush1.msra.mxu0 %v2814
        %3256 = vmatprep.subr.mxu0 0.0
        %3257 = vmatpush1.msra.mxu0 %v2815
        %3258 = vmatprep.subr.mxu0 0.0
        %3259 = vmatpush1.msra.mxu0 %v2816
        %3260 = vmatprep.subr.mxu0 0.0
        %3261 = vmatpush1.msra.mxu0 %v2817
        %3262 = vmatprep.subr.mxu0 0.0
        %3263 = vmatpush1.msra.mxu0 %v2818
        %3264 = vmatprep.subr.mxu0 0.0
        %3265 = vmatpush1.msra.mxu0 %v2819
        %3266 = vmatprep.subr.mxu0 0.0
        %3267 = vmatpush1.msra.mxu0 %v2820
        %3268 = vmatprep.subr.mxu0 0.0
        %3269 = vmatpush1.msra.mxu0 %v2821
        %3270 = vmatprep.subr.mxu0 0.0
        %3271 = vmatpush1.msra.mxu0 %v2822
        %3272 = vmatprep.subr.mxu0 0.0
        %3273 = vmatpush1.msra.mxu0 %v2823
        %3274 = vmatprep.subr.mxu0 0.0
        %3275 = vmatpush1.msra.mxu0 0.0
        %3276 = vmatprep.subr.mxu0 0.0
        %3277 = vmatpush1.msra.mxu0 0.0
        %3278 = vmatprep.subr.mxu0 0.0
        %3279 = vmatpush1.msra.mxu0 0.0
        %3280 = vmatprep.subr.mxu0 0.0
        %3281 = vmatpush1.msra.mxu0 0.0
        %3282 = vmatprep.subr.mxu0 0.0
        %3283 = vmatpush1.msra.mxu0 0.0
        %3284 = vmatprep.subr.mxu0 0.0
        %3285 = vmatpush1.msra.mxu0 0.0
        %3286 = vmatprep.subr.mxu0 0.0
        %3287 = vmatpush1.msra.mxu0 0.0
        %3288 = vmatprep.subr.mxu0 0.0
        %3289 = vmatpush1.msra.mxu0 0.0
        %3290 = vmatprep.subr.mxu0 0.0
        %3291 = vmatpush1.msra.mxu0 0.0
        %3292 = vmatprep.subr.mxu0 0.0
        %3293 = vmatpush1.msra.mxu0 0.0
        %3294 = vmatprep.subr.mxu0 0.0
        %3295 = vmatpush1.msra.mxu0 0.0
        %3296 = vmatprep.subr.mxu0 0.0
        %3297 = vmatpush1.msra.mxu0 0.0
        %3298 = vmatprep.subr.mxu0 0.0
        %3299 = vmatpush1.msra.mxu0 0.0
        %3300 = vmatprep.subr.mxu0 0.0
        %3301 = vmatpush1.msra.mxu0 0.0
        %3302 = vmatprep.subr.mxu0 0.0
        %3303 = vmatpush1.msra.mxu0 0.0
        %3304 = vmatprep.subr.mxu0 0.0
        %3305 = vmatpush1.msra.mxu0 0.0
        %3306 = vmatprep.mubr.f32.mxu0 0.0
        %3307 = vmatmul.mubr.f32.gmra.mrb[0].mxu0 %v3226
        %v3308 = vpop.f32.mrb[0].mxu0
        %v3309 = vadd.f32 0.0, %v3308
        %v3310 = vpop.f32.mrb[0].mxu0
        %3311 = vdwg.mxu0
        %3312 = vmatprep.subr.mxu0 0.0
        %3313 = vmatpush1.msra.mxu0 %v2245
        %3314 = vmatprep.subr.mxu0 0.0
        %3315 = vmatpush1.msra.mxu0 %v2246
        %3316 = vmatprep.subr.mxu0 0.0
        %3317 = vmatpush1.msra.mxu0 %v2247
        %3318 = vmatprep.subr.mxu0 0.0
        %3319 = vmatpush1.msra.mxu0 %v2248
        %3320 = vmatprep.subr.mxu0 0.0
        %3321 = vmatpush1.msra.mxu0 %v2249
        %3322 = vmatprep.subr.mxu0 0.0
        %3323 = vmatpush1.msra.mxu0 %v2250
        %3324 = vmatprep.subr.mxu0 0.0
        %3325 = vmatpush1.msra.mxu0 %v2251
        %3326 = vmatprep.subr.mxu0 0.0
        %3327 = vmatpush1.msra.mxu0 %v2252
        %3328 = vmatprep.subr.mxu0 0.0
        %3329 = vmatpush1.msra.mxu0 %v2253
        %3330 = vmatprep.subr.mxu0 0.0
        %3331 = vmatpush1.msra.mxu0 %v2254
        %3332 = vmatprep.subr.mxu0 0.0
        %3333 = vmatpush1.msra.mxu0 %v2255
        %3334 = vmatprep.subr.mxu0 0.0
        %3335 = vmatpush1.msra.mxu0 %v2256
        %3336 = vmatprep.subr.mxu0 0.0
        %3337 = vmatpush1.msra.mxu0 %v2257
        %3338 = vmatprep.subr.mxu0 0.0
        %3339 = vmatpush1.msra.mxu0 %v2258
        %3340 = vmatprep.subr.mxu0 0.0
        %3341 = vmatpush1.msra.mxu0 %v2259
        %3342 = vmatprep.subr.mxu0 0.0
        %3343 = vmatpush1.msra.mxu0 %v2260
        %3344 = vmatprep.subr.mxu0 0.0
        %3345 = vmatpush1.msra.mxu0 0.0
        %3346 = vmatprep.subr.mxu0 0.0
        %3347 = vmatpush1.msra.mxu0 0.0
        %3348 = vmatprep.subr.mxu0 0.0
        %3349 = vmatpush1.msra.mxu0 0.0
        %3350 = vmatprep.subr.mxu0 0.0
        %3351 = vmatpush1.msra.mxu0 0.0
        %3352 = vmatprep.subr.mxu0 0.0
        %3353 = vmatpush1.msra.mxu0 0.0
        %3354 = vmatprep.subr.mxu0 0.0
        %3355 = vmatpush1.msra.mxu0 0.0
        %3356 = vmatprep.subr.mxu0 0.0
        %3357 = vmatpush1.msra.mxu0 0.0
        %3358 = vmatprep.subr.mxu0 0.0
        %3359 = vmatpush1.msra.mxu0 0.0
        %3360 = vmatprep.subr.mxu0 0.0
        %3361 = vmatpush1.msra.mxu0 0.0
        %3362 = vmatprep.subr.mxu0 0.0
        %3363 = vmatpush1.msra.mxu0 0.0
        %3364 = vmatprep.subr.mxu0 0.0
        %3365 = vmatpush1.msra.mxu0 0.0
        %3366 = vmatprep.subr.mxu0 0.0
        %3367 = vmatpush1.msra.mxu0 0.0
        %3368 = vmatprep.subr.mxu0 0.0
        %3369 = vmatpush1.msra.mxu0 0.0
        %3370 = vmatprep.subr.mxu0 0.0
        %3371 = vmatpush1.msra.mxu0 0.0
        %3372 = vmatprep.subr.mxu0 0.0
        %3373 = vmatpush1.msra.mxu0 0.0
        %3374 = vmatprep.subr.mxu0 0.0
        %3375 = vmatpush1.msra.mxu0 0.0
        %3376 = vmatprep.mubr.f32.mxu0 0.0
        %3377 = vmatmul.mubr.f32.gmra.mrb[0].mxu0 %v3226
        %v3378 = vpop.f32.mrb[0].mxu0
        %v3379 = vadd.f32 0.0, %v3378
        %v3380 = vpop.f32.mrb[0].mxu0
        %3381 = vdwg.mxu0
        %3382 = vmatprep.subr.mxu0 0.0
        %3383 = vmatpush1.msra.mxu0 %v3194
        %3384 = vmatprep.subr.mxu0 0.0
        %3385 = vmatpush1.msra.mxu0 %v3195
        %3386 = vmatprep.subr.mxu0 0.0
        %3387 = vmatpush1.msra.mxu0 %v3196
        %3388 = vmatprep.subr.mxu0 0.0
        %3389 = vmatpush1.msra.mxu0 %v3197
        %3390 = vmatprep.subr.mxu0 0.0
        %3391 = vmatpush1.msra.mxu0 %v3198
        %3392 = vmatprep.subr.mxu0 0.0
        %3393 = vmatpush1.msra.mxu0 %v3199
        %3394 = vmatprep.subr.mxu0 0.0
        %3395 = vmatpush1.msra.mxu0 %v3200
        %3396 = vmatprep.subr.mxu0 0.0
        %3397 = vmatpush1.msra.mxu0 %v3201
        %3398 = vmatprep.subr.mxu0 0.0
        %3399 = vmatpush1.msra.mxu0 %v3202
        %3400 = vmatprep.subr.mxu0 0.0
        %3401 = vmatpush1.msra.mxu0 %v3203
        %3402 = vmatprep.subr.mxu0 0.0
        %3403 = vmatpush1.msra.mxu0 %v3204
        %3404 = vmatprep.subr.mxu0 0.0
        %3405 = vmatpush1.msra.mxu0 %v3205
        %3406 = vmatprep.subr.mxu0 0.0
        %3407 = vmatpush1.msra.mxu0 %v3206
        %3408 = vmatprep.subr.mxu0 0.0
        %3409 = vmatpush1.msra.mxu0 %v3207
        %3410 = vmatprep.subr.mxu0 0.0
        %3411 = vmatpush1.msra.mxu0 %v3208
        %3412 = vmatprep.subr.mxu0 0.0
        %3413 = vmatpush1.msra.mxu0 %v3209
        %3414 = vmatprep.subr.mxu0 0.0
        %3415 = vmatpush1.msra.mxu0 0.0
        %3416 = vmatprep.subr.mxu0 0.0
        %3417 = vmatpush1.msra.mxu0 0.0
        %3418 = vmatprep.subr.mxu0 0.0
        %3419 = vmatpush1.msra.mxu0 0.0
        %3420 = vmatprep.subr.mxu0 0.0
        %3421 = vmatpush1.msra.mxu0 0.0
        %3422 = vmatprep.subr.mxu0 0.0
        %3423 = vmatpush1.msra.mxu0 0.0
        %3424 = vmatprep.subr.mxu0 0.0
        %3425 = vmatpush1.msra.mxu0 0.0
        %3426 = vmatprep.subr.mxu0 0.0
        %3427 = vmatpush1.msra.mxu0 0.0
        %3428 = vmatprep.subr.mxu0 0.0
        %3429 = vmatpush1.msra.mxu0 0.0
        %3430 = vmatprep.subr.mxu0 0.0
        %3431 = vmatpush1.msra.mxu0 0.0
        %3432 = vmatprep.subr.mxu0 0.0
        %3433 = vmatpush1.msra.mxu0 0.0
        %3434 = vmatprep.subr.mxu0 0.0
        %3435 = vmatpush1.msra.mxu0 0.0
        %3436 = vmatprep.subr.mxu0 0.0
        %3437 = vmatpush1.msra.mxu0 0.0
        %3438 = vmatprep.subr.mxu0 0.0
        %3439 = vmatpush1.msra.mxu0 0.0
        %3440 = vmatprep.subr.mxu0 0.0
        %3441 = vmatpush1.msra.mxu0 0.0
        %3442 = vmatprep.subr.mxu0 0.0
        %3443 = vmatpush1.msra.mxu0 0.0
        %3444 = vmatprep.subr.mxu0 0.0
        %3445 = vmatpush1.msra.mxu0 0.0
        %3446 = vmatprep.mubr.f32.mxu0 0.0
        %3447 = vmatmul.mubr.f32.gmra.mrb[0].mxu0 %v3379
        %v3448 = vpop.f32.mrb[0].mxu0
        %v3449 = vadd.f32 0.0, %v3448
        %v3450 = vpop.f32.mrb[0].mxu0
        %3451 = vdwg.mxu0
        %3452 = vmatprep.subr.mxu0 0.0
        %3453 = vmatpush1.msra.mxu0 1.0
        %3454 = vmatprep.subr.mxu0 0.0
        %3455 = vmatpush1.msra.mxu0 1.0
        %3456 = vmatprep.subr.mxu0 0.0
        %3457 = vmatpush1.msra.mxu0 1.0
        %3458 = vmatprep.subr.mxu0 0.0
        %3459 = vmatpush1.msra.mxu0 1.0
        %3460 = vmatprep.subr.mxu0 0.0
        %3461 = vmatpush1.msra.mxu0 1.0
        %3462 = vmatprep.subr.mxu0 0.0
        %3463 = vmatpush1.msra.mxu0 1.0
        %3464 = vmatprep.subr.mxu0 0.0
        %3465 = vmatpush1.msra.mxu0 1.0
        %3466 = vmatprep.subr.mxu0 0.0
        %3467 = vmatpush1.msra.mxu0 1.0
        %3468 = vmatprep.subr.mxu0 0.0
        %3469 = vmatpush1.msra.mxu0 1.0
        %3470 = vmatprep.subr.mxu0 0.0
        %3471 = vmatpush1.msra.mxu0 1.0
        %3472 = vmatprep.subr.mxu0 0.0
        %3473 = vmatpush1.msra.mxu0 1.0
        %3474 = vmatprep.subr.mxu0 0.0
        %3475 = vmatpush1.msra.mxu0 1.0
        %3476 = vmatprep.subr.mxu0 0.0
        %3477 = vmatpush1.msra.mxu0 1.0
        %3478 = vmatprep.subr.mxu0 0.0
        %3479 = vmatpush1.msra.mxu0 1.0
        %3480 = vmatprep.subr.mxu0 0.0
        %3481 = vmatpush1.msra.mxu0 1.0
        %3482 = vmatprep.subr.mxu0 0.0
        %3483 = vmatpush1.msra.mxu0 1.0
        %3484 = vmatprep.subr.mxu0 0.0
        %3485 = vmatpush1.msra.mxu0 0.0
        %3486 = vmatprep.subr.mxu0 0.0
        %3487 = vmatpush1.msra.mxu0 0.0
        %3488 = vmatprep.subr.mxu0 0.0
        %3489 = vmatpush1.msra.mxu0 0.0
        %3490 = vmatprep.subr.mxu0 0.0
        %3491 = vmatpush1.msra.mxu0 0.0
        %3492 = vmatprep.subr.mxu0 0.0
        %3493 = vmatpush1.msra.mxu0 0.0
        %3494 = vmatprep.subr.mxu0 0.0
        %3495 = vmatpush1.msra.mxu0 0.0
        %3496 = vmatprep.subr.mxu0 0.0
        %3497 = vmatpush1.msra.mxu0 0.0
        %3498 = vmatprep.subr.mxu0 0.0
        %3499 = vmatpush1.msra.mxu0 0.0
        %3500 = vmatprep.subr.mxu0 0.0
        %3501 = vmatpush1.msra.mxu0 0.0
        %3502 = vmatprep.subr.mxu0 0.0
        %3503 = vmatpush1.msra.mxu0 0.0
        %3504 = vmatprep.subr.mxu0 0.0
        %3505 = vmatpush1.msra.mxu0 0.0
        %3506 = vmatprep.subr.mxu0 0.0
        %3507 = vmatpush1.msra.mxu0 0.0
        %3508 = vmatprep.subr.mxu0 0.0
        %3509 = vmatpush1.msra.mxu0 0.0
        %3510 = vmatprep.subr.mxu0 0.0
        %3511 = vmatpush1.msra.mxu0 0.0
        %3512 = vmatprep.subr.mxu0 0.0
        %3513 = vmatpush1.msra.mxu0 0.0
        %3514 = vmatprep.subr.mxu0 0.0
        %3515 = vmatpush1.msra.mxu0 0.0
        %3516 = vmatprep.mubr.f32.mxu0 0.0
        %3517 = vmatmul.mubr.f32.gmra.mrb[0].mxu0 %v2245
        %v3518 = vpop.f32.mrb[0].mxu0
        %v3519 = vadd.f32 0.0, %v3518
        %v3520 = vpop.f32.mrb[0].mxu0
        %3521 = vmatprep.mubr.f32.mxu0 0.0
        %3522 = vmatmul.mubr.f32.gmra.mrb[0].mxu0 %v2246
        %v3523 = vpop.f32.mrb[0].mxu0
        %v3524 = vadd.f32 0.0, %v3523
        %v3525 = vpop.f32.mrb[0].mxu0
        %3526 = vmatprep.mubr.f32.mxu0 0.0
        %3527 = vmatmul.mubr.f32.gmra.mrb[0].mxu0 %v2247
        %v3528 = vpop.f32.mrb[0].mxu0
        %v3529 = vadd.f32 0.0, %v3528
        %v3530 = vpop.f32.mrb[0].mxu0
        %3531 = vmatprep.mubr.f32.mxu0 0.0
        %3532 = vmatmul.mubr.f32.gmra.mrb[0].mxu0 %v2248
        %v3533 = vpop.f32.mrb[0].mxu0
        %v3534 = vadd.f32 0.0, %v3533
        %v3535 = vpop.f32.mrb[0].mxu0
        %3536 = vmatprep.mubr.f32.mxu0 0.0
        %3537 = vmatmul.mubr.f32.gmra.mrb[0].mxu0 %v2249
        %v3538 = vpop.f32.mrb[0].mxu0
        %v3539 = vadd.f32 0.0, %v3538
        %v3540 = vpop.f32.mrb[0].mxu0
        %3541 = vmatprep.mubr.f32.mxu0 0.0
        %3542 = vmatmul.mubr.f32.gmra.mrb[0].mxu0 %v2250
        %v3543 = vpop.f32.mrb[0].mxu0
        %v3544 = vadd.f32 0.0, %v3543
        %v3545 = vpop.f32.mrb[0].mxu0
        %3546 = vmatprep.mubr.f32.mxu0 0.0
        %3547 = vmatmul.mubr.f32.gmra.mrb[0].mxu0 %v2251
        %v3548 = vpop.f32.mrb[0].mxu0
        %v3549 = vadd.f32 0.0, %v3548
        %v3550 = vpop.f32.mrb[0].mxu0
        %3551 = vmatprep.mubr.f32.mxu0 0.0
        %3552 = vmatmul.mubr.f32.gmra.mrb[0].mxu0 %v2252
        %v3553 = vpop.f32.mrb[0].mxu0
        %v3554 = vadd.f32 0.0, %v3553
        %v3555 = vpop.f32.mrb[0].mxu0
        %3556 = vmatprep.mubr.f32.mxu0 0.0
        %3557 = vmatmul.mubr.f32.gmra.mrb[0].mxu0 %v2253
        %v3558 = vpop.f32.mrb[0].mxu0
        %v3559 = vadd.f32 0.0, %v3558
        %v3560 = vpop.f32.mrb[0].mxu0
        %3561 = vmatprep.mubr.f32.mxu0 0.0
        %3562 = vmatmul.mubr.f32.gmra.mrb[0].mxu0 %v2254
        %v3563 = vpop.f32.mrb[0].mxu0
        %v3564 = vadd.f32 0.0, %v3563
        %v3565 = vpop.f32.mrb[0].mxu0
        %3566 = vmatprep.mubr.f32.mxu0 0.0
        %3567 = vmatmul.mubr.f32.gmra.mrb[0].mxu0 %v2255
        %v3568 = vpop.f32.mrb[0].mxu0
        %v3569 = vadd.f32 0.0, %v3568
        %v3570 = vpop.f32.mrb[0].mxu0
        %3571 = vmatprep.mubr.f32.mxu0 0.0
        %3572 = vmatmul.mubr.f32.gmra.mrb[0].mxu0 %v2256
        %v3573 = vpop.f32.mrb[0].mxu0
        %v3574 = vadd.f32 0.0, %v3573
        %v3575 = vpop.f32.mrb[0].mxu0
        %3576 = vmatprep.mubr.f32.mxu0 0.0
        %3577 = vmatmul.mubr.f32.gmra.mrb[0].mxu0 %v2257
        %v3578 = vpop.f32.mrb[0].mxu0
        %v3579 = vadd.f32 0.0, %v3578
        %v3580 = vpop.f32.mrb[0].mxu0
        %3581 = vmatprep.mubr.f32.mxu0 0.0
        %3582 = vmatmul.mubr.f32.gmra.mrb[0].mxu0 %v2258
        %v3583 = vpop.f32.mrb[0].mxu0
        %v3584 = vadd.f32 0.0, %v3583
        %v3585 = vpop.f32.mrb[0].mxu0
        %3586 = vmatprep.mubr.f32.mxu0 0.0
        %3587 = vmatmul.mubr.f32.gmra.mrb[0].mxu0 %v2259
        %v3588 = vpop.f32.mrb[0].mxu0
        %v3589 = vadd.f32 0.0, %v3588
        %v3590 = vpop.f32.mrb[0].mxu0
        %3591 = vmatprep.mubr.f32.mxu0 0.0
        %3592 = vmatmul.mubr.f32.gmra.mrb[0].mxu0 %v2260
        %v3593 = vpop.f32.mrb[0].mxu0
        %v3594 = vadd.f32 0.0, %v3593
        %v3595 = vpop.f32.mrb[0].mxu0
        %3596 = vdwg.mxu0
        %v3597 = vmul.f32 %v3449, %v440
        %v3598 = vsel %vm1243, %v3597, 0.0
        %3599 = vadd.xlane.f32.xlu0 %v3598
        %v3600 = vpop.xlane.xlu0 %3599
        %v3601 = vrot.slane %v3600, 4
        %v3602 = vadd.f32 %v3600, %v3601
        %v3603 = vrot.slane %v3602, 2
        %v3604 = vadd.f32 %v3602, %v3603
        %v3605 = vrot.slane %v3604, 1
        %v3606 = vadd.f32 %v3604, %v3605
        %s3607 = vtos %v3606
        %v3608 = vstv %s3607
        %v3609 = vmul.f32 %v3194, %v3194
        %v3610 = vmul.f32 %v3195, %v3195
        %v3611 = vmul.f32 %v3196, %v3196
        %v3612 = vmul.f32 %v3197, %v3197
        %v3613 = vmul.f32 %v3198, %v3198
        %v3614 = vmul.f32 %v3199, %v3199
        %v3615 = vmul.f32 %v3200, %v3200
        %v3616 = vmul.f32 %v3201, %v3201
        %v3617 = vmul.f32 %v3202, %v3202
        %v3618 = vmul.f32 %v3203, %v3203
        %v3619 = vmul.f32 %v3204, %v3204
        %v3620 = vmul.f32 %v3205, %v3205
        %v3621 = vmul.f32 %v3206, %v3206
        %v3622 = vmul.f32 %v3207, %v3207
        %v3623 = vmul.f32 %v3208, %v3208
        %v3624 = vmul.f32 %v3209, %v3209
        %3626 = vset.pattern.permute.xlu0 0
        %3627 = vperm.xlu0 %3626, %v3519
        %v3628 = vpop.permute.xlu0 %3627
        %3631 = vset.pattern.permute.xlu0 0
        %3632 = vperm.xlu0 %3631, %v3524
        %v3633 = vpop.permute.xlu0 %3632
        %3636 = vset.pattern.permute.xlu0 0
        %3637 = vperm.xlu0 %3636, %v3529
        %v3638 = vpop.permute.xlu0 %3637
        %3641 = vset.pattern.permute.xlu0 0
        %3642 = vperm.xlu0 %3641, %v3534
        %v3643 = vpop.permute.xlu0 %3642
        %3646 = vset.pattern.permute.xlu0 0
        %3647 = vperm.xlu0 %3646, %v3539
        %v3648 = vpop.permute.xlu0 %3647
        %3651 = vset.pattern.permute.xlu0 0
        %3652 = vperm.xlu0 %3651, %v3544
        %v3653 = vpop.permute.xlu0 %3652
        %3656 = vset.pattern.permute.xlu0 0
        %3657 = vperm.xlu0 %3656, %v3549
        %v3658 = vpop.permute.xlu0 %3657
        %3661 = vset.pattern.permute.xlu0 0
        %3662 = vperm.xlu0 %3661, %v3554
        %v3663 = vpop.permute.xlu0 %3662
        %3666 = vset.pattern.permute.xlu0 0
        %3667 = vperm.xlu0 %3666, %v3559
        %v3668 = vpop.permute.xlu0 %3667
        %3671 = vset.pattern.permute.xlu0 0
        %3672 = vperm.xlu0 %3671, %v3564
        %v3673 = vpop.permute.xlu0 %3672
        %3676 = vset.pattern.permute.xlu0 0
        %3677 = vperm.xlu0 %3676, %v3569
        %v3678 = vpop.permute.xlu0 %3677
        %3681 = vset.pattern.permute.xlu0 0
        %3682 = vperm.xlu0 %3681, %v3574
        %v3683 = vpop.permute.xlu0 %3682
        %3686 = vset.pattern.permute.xlu0 0
        %3687 = vperm.xlu0 %3686, %v3579
        %v3688 = vpop.permute.xlu0 %3687
        %3691 = vset.pattern.permute.xlu0 0
        %3692 = vperm.xlu0 %3691, %v3584
        %v3693 = vpop.permute.xlu0 %3692
        %3696 = vset.pattern.permute.xlu0 0
        %3697 = vperm.xlu0 %3696, %v3589
        %v3698 = vpop.permute.xlu0 %3697
        %3701 = vset.pattern.permute.xlu0 0
        %3702 = vperm.xlu0 %3701, %v3594
        %v3703 = vpop.permute.xlu0 %3702
        %v3705 = vmul.f32 %v3628, %v3609
        %v3706 = vmul.f32 %v3633, %v3610
        %v3707 = vmul.f32 %v3638, %v3611
        %v3708 = vmul.f32 %v3643, %v3612
        %v3709 = vmul.f32 %v3648, %v3613
        %v3710 = vmul.f32 %v3653, %v3614
        %v3711 = vmul.f32 %v3658, %v3615
        %v3712 = vmul.f32 %v3663, %v3616
        %v3713 = vmul.f32 %v3668, %v3617
        %v3714 = vmul.f32 %v3673, %v3618
        %v3715 = vmul.f32 %v3678, %v3619
        %v3716 = vmul.f32 %v3683, %v3620
        %v3717 = vmul.f32 %v3688, %v3621
        %v3718 = vmul.f32 %v3693, %v3622
        %v3719 = vmul.f32 %v3698, %v3623
        %v3720 = vmul.f32 %v3703, %v3624
        %v3721 = vsel %vm1243, %v3705, 0.0
        %v3722 = vsel %vm1243, %v3706, 0.0
        %v3723 = vadd.f32 %v3721, %v3722
        %v3724 = vsel %vm1243, %v3707, 0.0
        %v3725 = vadd.f32 %v3723, %v3724
        %v3726 = vsel %vm1243, %v3708, 0.0
        %v3727 = vadd.f32 %v3725, %v3726
        %v3728 = vsel %vm1243, %v3709, 0.0
        %v3729 = vadd.f32 %v3727, %v3728
        %v3730 = vsel %vm1243, %v3710, 0.0
        %v3731 = vadd.f32 %v3729, %v3730
        %v3732 = vsel %vm1243, %v3711, 0.0
        %v3733 = vadd.f32 %v3731, %v3732
        %v3734 = vsel %vm1243, %v3712, 0.0
        %v3735 = vadd.f32 %v3733, %v3734
        %v3736 = vsel %vm1243, %v3713, 0.0
        %v3737 = vadd.f32 %v3735, %v3736
        %v3738 = vsel %vm1243, %v3714, 0.0
        %v3739 = vadd.f32 %v3737, %v3738
        %v3740 = vsel %vm1243, %v3715, 0.0
        %v3741 = vadd.f32 %v3739, %v3740
        %v3742 = vsel %vm1243, %v3716, 0.0
        %v3743 = vadd.f32 %v3741, %v3742
        %v3744 = vsel %vm1243, %v3717, 0.0
        %v3745 = vadd.f32 %v3743, %v3744
        %v3746 = vsel %vm1243, %v3718, 0.0
        %v3747 = vadd.f32 %v3745, %v3746
        %v3748 = vsel %vm1243, %v3719, 0.0
        %v3749 = vadd.f32 %v3747, %v3748
        %v3750 = vsel %vm1243, %v3720, 0.0
        %v3751 = vadd.f32 %v3749, %v3750
        %3752 = vadd.xlane.f32.xlu0 %v3751
        %v3753 = vpop.xlane.xlu0 %3752
        %v3754 = vrot.slane %v3753, 4
        %v3755 = vadd.f32 %v3753, %v3754
        %v3756 = vrot.slane %v3755, 2
        %v3757 = vadd.f32 %v3755, %v3756
        %v3758 = vrot.slane %v3757, 1
        %v3759 = vadd.f32 %v3757, %v3758
        %s3760 = vtos %v3759
        %v3761 = vstv %s3760
        %v3762 = vrcp.pop %v3761
        %v3763 = vmul.f32 %v3608, %v3762
        %v3764 = vsub.f32 0.0, %v3763
        %3765 = vmatprep.subr.mxu0 0.0
        %3766 = vmatpush1.msra.mxu0 %v3194
        %3767 = vmatprep.subr.mxu0 0.0
        %3768 = vmatpush1.msra.mxu0 %v3195
        %3769 = vmatprep.subr.mxu0 0.0
        %3770 = vmatpush1.msra.mxu0 %v3196
        %3771 = vmatprep.subr.mxu0 0.0
        %3772 = vmatpush1.msra.mxu0 %v3197
        %3773 = vmatprep.subr.mxu0 0.0
        %3774 = vmatpush1.msra.mxu0 %v3198
        %3775 = vmatprep.subr.mxu0 0.0
        %3776 = vmatpush1.msra.mxu0 %v3199
        %3777 = vmatprep.subr.mxu0 0.0
        %3778 = vmatpush1.msra.mxu0 %v3200
        %3779 = vmatprep.subr.mxu0 0.0
        %3780 = vmatpush1.msra.mxu0 %v3201
        %3781 = vmatprep.subr.mxu0 0.0
        %3782 = vmatpush1.msra.mxu0 %v3202
        %3783 = vmatprep.subr.mxu0 0.0
        %3784 = vmatpush1.msra.mxu0 %v3203
        %3785 = vmatprep.subr.mxu0 0.0
        %3786 = vmatpush1.msra.mxu0 %v3204
        %3787 = vmatprep.subr.mxu0 0.0
        %3788 = vmatpush1.msra.mxu0 %v3205
        %3789 = vmatprep.subr.mxu0 0.0
        %3790 = vmatpush1.msra.mxu0 %v3206
        %3791 = vmatprep.subr.mxu0 0.0
        %3792 = vmatpush1.msra.mxu0 %v3207
        %3793 = vmatprep.subr.mxu0 0.0
        %3794 = vmatpush1.msra.mxu0 %v3208
        %3795 = vmatprep.subr.mxu0 0.0
        %3796 = vmatpush1.msra.mxu0 %v3209
        %3797 = vmatprep.subr.mxu0 0.0
        %3798 = vmatpush1.msra.mxu0 0.0
        %3799 = vmatprep.subr.mxu0 0.0
        %3800 = vmatpush1.msra.mxu0 0.0
        %3801 = vmatprep.subr.mxu0 0.0
        %3802 = vmatpush1.msra.mxu0 0.0
        %3803 = vmatprep.subr.mxu0 0.0
        %3804 = vmatpush1.msra.mxu0 0.0
        %3805 = vmatprep.subr.mxu0 0.0
        %3806 = vmatpush1.msra.mxu0 0.0
        %3807 = vmatprep.subr.mxu0 0.0
        %3808 = vmatpush1.msra.mxu0 0.0
        %3809 = vmatprep.subr.mxu0 0.0
        %3810 = vmatpush1.msra.mxu0 0.0
        %3811 = vmatprep.subr.mxu0 0.0
        %3812 = vmatpush1.msra.mxu0 0.0
        %3813 = vmatprep.subr.mxu0 0.0
        %3814 = vmatpush1.msra.mxu0 0.0
        %3815 = vmatprep.subr.mxu0 0.0
        %3816 = vmatpush1.msra.mxu0 0.0
        %3817 = vmatprep.subr.mxu0 0.0
        %3818 = vmatpush1.msra.mxu0 0.0
        %3819 = vmatprep.subr.mxu0 0.0
        %3820 = vmatpush1.msra.mxu0 0.0
        %3821 = vmatprep.subr.mxu0 0.0
        %3822 = vmatpush1.msra.mxu0 0.0
        %3823 = vmatprep.subr.mxu0 0.0
        %3824 = vmatpush1.msra.mxu0 0.0
        %3825 = vmatprep.subr.mxu0 0.0
        %3826 = vmatpush1.msra.mxu0 0.0
        %3827 = vmatprep.subr.mxu0 0.0
        %3828 = vmatpush1.msra.mxu0 0.0
        %3829 = vmatprep.mubr.f32.mxu0 0.0
        %3830 = vmatmul.mubr.f32.gmra.mrb[0].mxu0 %v3226
        %v3831 = vpop.f32.mrb[0].mxu0
        %v3832 = vadd.f32 0.0, %v3831
        %v3833 = vpop.f32.mrb[0].mxu0
        %3834 = vdwg.mxu0
        %v3835 = vmul.f32 %v3832, %v3832
        %v3836 = vsel %vm1243, %v3835, 0.0
        %3837 = vadd.xlane.f32.xlu0 %v3836
        %v3838 = vpop.xlane.xlu0 %3837
        %v3839 = vrot.slane %v3838, 4
        %v3840 = vadd.f32 %v3838, %v3839
        %v3841 = vrot.slane %v3840, 2
        %v3842 = vadd.f32 %v3840, %v3841
        %v3843 = vrot.slane %v3842, 1
        %v3844 = vadd.f32 %v3842, %v3843
        %s3845 = vtos %v3844
        %v3846 = vstv %s3845
        %v3847 = vrsqrt.pop %v3846
        %v3848 = vmul.f32 %v3846, %v3847
        %vm3849 = vcmp.eq.f32.partialorder %v3846, inf
        %v3850 = vsel %vm3849, %v3846, %v3848
        %vm3851 = vcmp.eq.f32.partialorder %v3846, 0.0
        %v3852 = vand.u32 %v3846, 2147483648
        %v3853 = vsel %vm3851, %v3852, %v3850
        %v3854 = vrcp.pop %v3853
        %v3855 = vmul.f32 %v3832, %v3854
        %v3856 = vsub.f32 %v3855, %v2082
        %v3857 = vmul.f32 %v3856, %v3856
        %v3858 = vsel %vm1243, %v3857, 0.0
        %3859 = vadd.xlane.f32.xlu0 %v3858
        %v3860 = vpop.xlane.xlu0 %3859
        %v3861 = vrot.slane %v3860, 4
        %v3862 = vadd.f32 %v3860, %v3861
        %v3863 = vrot.slane %v3862, 2
        %v3864 = vadd.f32 %v3862, %v3863
        %v3865 = vrot.slane %v3864, 1
        %v3866 = vadd.f32 %v3864, %v3865
        %s3867 = vtos %v3866
        %v3868 = vstv %s3867
        %v3869 = vrsqrt.pop %v3868
        %v3870 = vmul.f32 %v3868, %v3869
        %vm3871 = vcmp.eq.f32.partialorder %v3868, inf
        %v3872 = vsel %vm3871, %v3868, %v3870
        %vm3873 = vcmp.eq.f32.partialorder %v3868, 0.0
        %v3874 = vand.u32 %v3868, 2147483648
        %v3875 = vsel %vm3873, %v3874, %v3872
        %v3876 = vsel %vm2104, %v3875, 0.0
        %v3877 = vsel %vm2103, %v3764, %v3876
        %s3878 = scalar_lea.vmem %s391, 1 [#allocation6]
        %3879 = vst [vmem:[%s3878] sm:$0x1] %v3877
        %v3880 = vmul.f32 %v3449, %v2108
        %v3881 = vsel %vm1243, %v3880, 0.0
        %3882 = vadd.xlane.f32.xlu0 %v3881
        %v3883 = vpop.xlane.xlu0 %3882
        %v3885 = vsel %vm1243, %v3880, 0
        %3887 = vmatprep.subr.mxu0 0.0
        %3888 = vmatpush1.xpose.msra.mxu0 %v3885
        %3889 = vmatprep.subr.mxu0 0.0
        %3890 = vmatpush1.xpose.msra.mxu0 0.0
        %3891 = vmatprep.subr.mxu0 0.0
        %3892 = vmatpush1.xpose.msra.mxu0 0.0
        %3893 = vmatprep.subr.mxu0 0.0
        %3894 = vmatpush1.xpose.msra.mxu0 0.0
        %3895 = vmatprep.subr.mxu0 0.0
        %3896 = vmatpush1.xpose.msra.mxu0 0.0
        %3897 = vmatprep.subr.mxu0 0.0
        %3898 = vmatpush1.xpose.msra.mxu0 0.0
        %3899 = vmatprep.subr.mxu0 0.0
        %3900 = vmatpush1.xpose.msra.mxu0 0.0
        %3901 = vmatprep.subr.mxu0 0.0
        %3902 = vmatpush1.xpose.msra.mxu0 0.0
        %3903 = vmatprep.subr.mxu0 0.0
        %3904 = vmatpush1.xpose.msra.mxu0 0.0
        %3905 = vmatprep.subr.mxu0 0.0
        %3906 = vmatpush1.xpose.msra.mxu0 0.0
        %3907 = vmatprep.subr.mxu0 0.0
        %3908 = vmatpush1.xpose.msra.mxu0 0.0
        %3909 = vmatprep.subr.mxu0 0.0
        %3910 = vmatpush1.xpose.msra.mxu0 0.0
        %3911 = vmatprep.subr.mxu0 0.0
        %3912 = vmatpush1.xpose.msra.mxu0 0.0
        %3913 = vmatprep.subr.mxu0 0.0
        %3914 = vmatpush1.xpose.msra.mxu0 0.0
        %3915 = vmatprep.subr.mxu0 0.0
        %3916 = vmatpush1.xpose.msra.mxu0 0.0
        %3917 = vmatprep.subr.mxu0 0.0
        %3918 = vmatpush1.xpose.msra.mxu0 0.0
        %3919 = vmatprep.subr.mxu0 0.0
        %3920 = vmatpush1.xpose.msra.mxu0 0.0
        %3921 = vmatprep.subr.mxu0 0.0
        %3922 = vmatpush1.xpose.msra.mxu0 0.0
        %3923 = vmatprep.subr.mxu0 0.0
        %3924 = vmatpush1.xpose.msra.mxu0 0.0
        %3925 = vmatprep.subr.mxu0 0.0
        %3926 = vmatpush1.xpose.msra.mxu0 0.0
        %3927 = vmatprep.subr.mxu0 0.0
        %3928 = vmatpush1.xpose.msra.mxu0 0.0
        %3929 = vmatprep.subr.mxu0 0.0
        %3930 = vmatpush1.xpose.msra.mxu0 0.0
        %3931 = vmatprep.subr.mxu0 0.0
        %3932 = vmatpush1.xpose.msra.mxu0 0.0
        %3933 = vmatprep.subr.mxu0 0.0
        %3934 = vmatpush1.xpose.msra.mxu0 0.0
        %3935 = vmatprep.subr.mxu0 0.0
        %3936 = vmatpush1.xpose.msra.mxu0 0.0
        %3937 = vmatprep.subr.mxu0 0.0
        %3938 = vmatpush1.xpose.msra.mxu0 0.0
        %3939 = vmatprep.subr.mxu0 0.0
        %3940 = vmatpush1.xpose.msra.mxu0 0.0
        %3941 = vmatprep.subr.mxu0 0.0
        %3942 = vmatpush1.xpose.msra.mxu0 0.0
        %3943 = vmatprep.subr.mxu0 0.0
        %3944 = vmatpush1.xpose.msra.mxu0 0.0
        %3945 = vmatprep.subr.mxu0 0.0
        %3946 = vmatpush1.xpose.msra.mxu0 0.0
        %3947 = vmatprep.subr.mxu0 0.0
        %3948 = vmatpush1.xpose.msra.mxu0 0.0
        %3949 = vmatprep.subr.mxu0 0.0
        %3950 = vmatpush1.xpose.msra.mxu0 0.0
        %3951 = vmatprep.mubr.f32.mxu0 0.0
        %3952 = vmatmul.mubr.f32.gmra.mrb[0].mxu0 %v2114
        %v3953 = vpop.f32.mrb[0].mxu0
        %v3954 = vadd.f32 0.0, %v3953
        %v3955 = vpop.f32.mrb[0].mxu0
        %3956 = vdwg.mxu0
        %v3957 = vrsqrt.pop %v3883
        %v3958 = vmul.f32 %v3883, %v3957
        %vm3959 = vcmp.eq.f32.partialorder %v3883, inf
        %v3960 = vsel %vm3959, %v3883, %v3958
        %vm3961 = vcmp.eq.f32.partialorder %v3883, 0.0
        %v3962 = vand.u32 %v3883, 2147483648
        %v3963 = vsel %vm3961, %v3962, %v3960
        %v3964 = vadd.f32 %v3963, 1e-15
        %v3965 = vrcp.pop %v3964
        %v3966 = vrsqrt.pop %v3954
        %v3967 = vmul.f32 %v3954, %v3966
        %vm3968 = vcmp.eq.f32.partialorder %v3954, inf
        %v3969 = vsel %vm3968, %v3954, %v3967
        %vm3970 = vcmp.eq.f32.partialorder %v3954, 0.0
        %v3971 = vand.u32 %v3954, 2147483648
        %v3972 = vsel %vm3970, %v3971, %v3969
        %v3973 = vadd.f32 %v3972, 1e-15
        %v3974 = vrcp.pop %v3973
        %v3975 = vlaneseq
        %v3976 = vshrl.u32 %v3975, 7
        %v3977 = vsub.s32 0, %v3976
        %v3978 = vrot.slane %v3974, %v3977
        %v3979 = vmul.f32 %v3880, %v3978
        %v3980 = vmul.f32 %v3979, %v3965
        %s3981 = scalar_lea.vmem %s384, 8 [#allocation4]
        %3982 = vst.msk [vmem:[%s3981] sm:$0xff] %vm1243, %v3980
        %v3983 = vsel %vm1049, %v3309, -inf
        %3984 = vmax.xlane.f32.xlu0 %v3983
        %v3985 = vpop.xlane.xlu0 %3984
        %v3986 = vsub.f32 %v3309, %v3985
        %v3987 = vmul.f32 %v3986, 1.442695
        %v3988 = vpow.pop %v3987
        %v3989 = vsel %vm1049, %v3988, 0.0
        %3990 = vadd.xlane.f32.xlu0 %v3989
        %v3991 = vpop.xlane.xlu0 %3990
        %v3992 = vlog2.pop %v3991
        %v3993 = vmul.f32 %v3992, 0.6931472
        %v3994 = vsub.f32 %v3986, %v3993
        %s3995 = scalar_lea.vmem %s377, 8 [#allocation2]
        %3996 = vst.msk [vmem:[%s3995] sm:$0xff] %vm1049, %v3994
        %s3997 = sand.u32 %s193, 1
        %s3998 = scalar_lea.sflag [#allocation3], %s3997
        %s3999 = sand.u32 %s193, 1
        %s4000 = smul.addr %s3999, 16
        %s4001 = scalar_lea.vmem [#allocation2], %s4000
        %s4002 = sand.u32 %s28, 1
        %s4003 = scalar_lea.sflag [#allocation5], %s4002
        %s4004 = sand.u32 %s219, 1
        %s4005 = smul.addr %s4004, 16
        %s4006 = scalar_lea.vmem [#allocation4], %s4005
        %s4007 = sand.u32 %s28, 1
        %s4008 = scalar_lea.sflag [#allocation5], %s4007
        %s4009 = sand.u32 %s245, 1
        %s4010 = smul.addr %s4009, 2
        %s4011 = scalar_lea.vmem [#allocation6], %s4010
        %s4012 = smul.u32 2, %s28
        %p4013 = scmp.lt.s32.totalorder %s4012, 3
        %s4014 = scalar_select %p4013, %s4012, 3
        %s4015 = smul.addr %s4014, 16
        %s4016 = smul.addr %s4015, 8
        %s4017 = scalar_lea.vmem %s10, %s4016
        // Predicated region
        $region49: #{tpu_custom_call.1} parent=47 // pred_check
          %p4018 = pneg %p203
        $region50: #{tpu_custom_call.1} parent=47 // pred_check_branch
          %4020 = sbr.rel (%p4018) target = $region52
        $region51: #{tpu_custom_call.1} parent=47 // pred_region
          %s4021 = smul.u32 2, %s28
          %s4023 = ssub.s32 256, 256
          %4024 = vsyncadd %s3998, %s4023
          %s4025 = smul.addr %s4021, 128
          %s4026 = scalar_lea.hbm %s7, %s4025
          %s4027 = sshll.u32 %s4001, 4
          %s4028 = int_to_ptr.vmem [resolvable:$true] %s4027
          %4033 = dma.vmem_to_hbm [thread:$0]  %s4028, 256, %s4026, %s3998, 128, 128, 8
        $region52: #{tpu_custom_call.1} parent=47 // pred_fallthru
          _
        // Predicated region
        $region53: #{tpu_custom_call.1} parent=47 // pred_check
          %p4034 = pneg %p229
        $region54: #{tpu_custom_call.1} parent=47 // pred_check_branch
          %4036 = sbr.rel (%p4034) target = $region56
        $region55: #{tpu_custom_call.1} parent=47 // pred_region
          %s4037 = smul.u32 2, %s28
          %s4039 = ssub.s32 256, 256
          %4040 = vsyncadd %s4003, %s4039
          %s4041 = smul.addr %s4037, 128
          %s4042 = scalar_lea.hbm %s8, %s4041
          %s4043 = sshll.u32 %s4006, 4
          %s4044 = int_to_ptr.vmem [resolvable:$true] %s4043
          %4049 = dma.vmem_to_hbm [thread:$0]  %s4044, 256, %s4042, %s4003, 128, 128, 8
        $region56: #{tpu_custom_call.1} parent=47 // pred_fallthru
          _
        // Predicated region
        $region57: #{tpu_custom_call.1} parent=47 // pred_check
          %p4050 = pneg %p255
        $region58: #{tpu_custom_call.1} parent=47 // pred_check_branch
          %4052 = sbr.rel (%p4050) target = $region60
        $region59: #{tpu_custom_call.1} parent=47 // pred_region
          %s4053 = smul.u32 2, %s28
          %s4055 = ssub.s32 32, 32
          %4056 = vsyncadd %s4008, %s4055
          %s4057 = smul.addr %s4053, 16
          %s4058 = scalar_lea.hbm %s9, %s4057
          %s4059 = sshll.u32 %s4011, 4
          %s4060 = int_to_ptr.vmem [resolvable:$true] %s4059
          %4065 = dma.vmem_to_hbm [thread:$0]  %s4060, 32, %s4058, %s4008, 16, 16, 1
        $region60: #{tpu_custom_call.1} parent=47 // pred_fallthru
          _
        // Predicated region
        $region61: #{tpu_custom_call.1} parent=47 // pred_check
          %p4066 = pneg %p281
        $region62: #{tpu_custom_call.1} parent=47 // pred_check_branch
          %4068 = sbr.rel (%p4066) target = $region64
        $region63: #{tpu_custom_call.1} parent=47 // pred_region
          %s4069 = smul.u32 2, %s28
        $region64: #{tpu_custom_call.1} parent=47 // pred_fallthru
          _
      $region48: #{tpu_custom_call.1} parent=5 // pred_fallthru
        _
      %p4070 = scmp.le.s32.totalorder 2, %s23
      // Predicated region
      $region65: #{tpu_custom_call.1} parent=5 // pred_check
        %p4071 = pneg %p4070
      $region66: #{tpu_custom_call.1} parent=5 // pred_check_branch
        %4073 = sbr.rel (%p4071) target = $region68
      $region67: #{tpu_custom_call.1} parent=5 // pred_region
        %s4074 = ssub.s32 %s23, 2
        // Predicated region
        $region69: #{tpu_custom_call.1} parent=67 // pred_check
          %p4075 = pneg %p209
        $region70: #{tpu_custom_call.1} parent=67 // pred_check_branch
          %4077 = sbr.rel (%p4075) target = $region72
        $region71: #{tpu_custom_call.1} parent=67 // pred_region
          %s4078 = sand.u32 %s194, 1
          %s4079 = scalar_lea.sflag [#allocation3], %s4078
          %s4080 = sand.u32 %s194, 1
          %s4081 = smul.addr %s4080, 16
          %s4082 = scalar_lea.vmem [#allocation2], %s4081
          %4083 = dma.done %s4079, 256
        $region72: #{tpu_custom_call.1} parent=67 // pred_fallthru
          _
        // Predicated region
        $region73: #{tpu_custom_call.1} parent=67 // pred_check
          %p4084 = pneg %p235
        $region74: #{tpu_custom_call.1} parent=67 // pred_check_branch
          %4086 = sbr.rel (%p4084) target = $region76
        $region75: #{tpu_custom_call.1} parent=67 // pred_region
          %s4087 = sand.u32 %s29, 1
          %s4088 = scalar_lea.sflag [#allocation5], %s4087
          %s4089 = sand.u32 %s220, 1
          %s4090 = smul.addr %s4089, 16
          %s4091 = scalar_lea.vmem [#allocation4], %s4090
          %4092 = dma.done %s4088, 256
        $region76: #{tpu_custom_call.1} parent=67 // pred_fallthru
          _
        // Predicated region
        $region77: #{tpu_custom_call.1} parent=67 // pred_check
          %p4093 = pneg %p261
        $region78: #{tpu_custom_call.1} parent=67 // pred_check_branch
          %4095 = sbr.rel (%p4093) target = $region80
        $region79: #{tpu_custom_call.1} parent=67 // pred_region
          %s4096 = sand.u32 %s29, 1
          %s4097 = scalar_lea.sflag [#allocation5], %s4096
          %s4098 = sand.u32 %s246, 1
          %s4099 = smul.addr %s4098, 2
          %s4100 = scalar_lea.vmem [#allocation6], %s4099
          %4101 = dma.done %s4097, 32
        $region80: #{tpu_custom_call.1} parent=67 // pred_fallthru
          _
        // Predicated region
        $region81: #{tpu_custom_call.1} parent=67 // pred_check
          %p4102 = pneg %p287
        $region82: #{tpu_custom_call.1} parent=67 // pred_check_branch
          %4104 = sbr.rel (%p4102) target = $region84
        $region83: #{tpu_custom_call.1} parent=67 // pred_region
          %s4105 = smul.u32 2, %s29
          %p4106 = scmp.lt.s32.totalorder %s4105, 3
          %s4107 = scalar_select %p4106, %s4105, 3
          %s4108 = smul.addr %s4107, 16
          %s4109 = smul.addr %s4108, 8
          %s4110 = scalar_lea.vmem %s10, %s4109
        $region84: #{tpu_custom_call.1} parent=67 // pred_fallthru
          _
      $region68: #{tpu_custom_call.1} parent=5 // pred_fallthru
        _
    $region6: #{tpu_custom_call.1} parent=1 // loop_footer
      %s27 = sadd.s32 1, %s23
    $region7: #{tpu_custom_call.1} parent=1 // loop_footer_branch
      %22 = sbr.rel target = $region3
    $region8: #{tpu_custom_call.1} parent=1 // loop_exit
      _
    %4111 = vsyncpa [#allocation3], 1
    %s4112 = scalar_lea.sflag [#allocation3], 1
    %4113 = vsyncpa %s4112, 1
    %4114 = vsyncpa [#allocation5], 1
    %s4115 = scalar_lea.sflag [#allocation5], 1
    %4116 = vsyncpa %s4115, 1

</llo_original>
